<compile_context>
chip_gen: v6e
topology: v6e:2x2x1
jax: 0.10.0
libtpu: 0.0.40
codegen_flags: <defaults>
</compile_context>

<pallas_src>
import functools

import jax
import jax.numpy as jnp
from jax import lax
from jax.experimental import pallas as pl
from jax.experimental.pallas import tpu as pltpu


def _round_up(n, m):
    return ((n + m - 1) // m) * m


def _pick_chunk(seq_len, cap=32):
    """Time-chunk size.

    Prefer an exact divisor of seq_len in [8, cap] (no masked tail work);
    otherwise use a fixed `cap`-sized chunk and mask the tail in-kernel.
    """
    upper = min(cap, seq_len)
    for d in range(upper, 7, -1):
        if seq_len % d == 0:
            return d
    return upper


def _sigmoid(x):
    # tanh-form logistic: one EUP push per element instead of exp + recip.
    return 0.5 * jnp.tanh(0.5 * x) + 0.5


def _lstm_kernel(x_ref, wih_t_ref, whh_t_ref, b_ref, wfc_t_ref, bfc_ref,
                 out_ref, h_scr, c_scr, xg_scr,
                 *, chunk, b_blk, h_pad, seq_len, mm_dtype):
    """One grid step == one batch block x one chunk of `chunk` time steps.

    h/c are carried across time chunks in VMEM scratch (re-initialized when
    the time-chunk index is 0, i.e. at the start of each batch block).
    """
    t_chunk = pl.program_id(1)

    @pl.when(t_chunk == 0)
    def _init():
        h_scr[...] = jnp.zeros_like(h_scr)
        c_scr[...] = jnp.zeros_like(c_scr)

    H = h_pad

    # Hoisted input projection for the whole chunk (bias fused here, once):
    #   (chunk*B_blk, I) @ (I, 4H) + b  ->  f32 VMEM scratch slab.
    xg_scr[...] = (jnp.dot(x_ref[...], wih_t_ref[...],
                           preferred_element_type=jnp.float32)
                   + b_ref[...])

    needs_mask = (seq_len % chunk) != 0

    def step(t, carry):
        h, c = carry
        off = pl.multiple_of(t * b_blk, b_blk)
        # W_hh is read from the ref inside the dot (NOT hoisted to a value):
        # a (H_pad, 4H_pad) f32 value would occupy the whole register file
        # across the unrolled chunk and force spills.
        gates = (xg_scr[pl.ds(off, b_blk), :]
                 + jnp.dot(h.astype(mm_dtype), whh_t_ref[...],
                           preferred_element_type=jnp.float32))
        # PyTorch gate order [i, f, g, o]; each slice is 128-lane aligned.
        i_g = _sigmoid(gates[:, 0 * H:1 * H])
        f_g = _sigmoid(gates[:, 1 * H:2 * H])
        g_g = jnp.tanh(gates[:, 2 * H:3 * H])
        o_g = _sigmoid(gates[:, 3 * H:4 * H])
        c_new = f_g * c + i_g * g_g
        h_new = o_g * jnp.tanh(c_new)
        if needs_mask:
            # Tail chunk: steps past the real sequence length must not move
            # the state (zero-padded inputs would still act through biases).
            valid = ((t_chunk * chunk + t) < seq_len).astype(jnp.float32)
            h_new = valid * h_new + (1.0 - valid) * h
            c_new = valid * c_new + (1.0 - valid) * c
        return (h_new, c_new)

    h, c = lax.fori_loop(0, chunk, step, (h_scr[...], c_scr[...]), unroll=True)
    h_scr[...] = h
    c_scr[...] = c

    @pl.when(t_chunk == pl.num_programs(1) - 1)
    def _final():
        # fc(hn) with a lane-dense (>=128) padded output width.
        out_ref[...] = (jnp.dot(h.astype(mm_dtype), wfc_t_ref[...],
                                preferred_element_type=jnp.float32)
                        + bfc_ref[...]).astype(out_ref.dtype)


def _pad_gate_dim(w, hidden, hidden_pad):
    """Pad the leading (4*H, ...) gate-stacked dim gate-block-wise to 4*H_pad."""
    w4 = w.reshape(4, hidden, *w.shape[1:])
    pad = [(0, 0)] * w4.ndim
    pad[1] = (0, hidden_pad - hidden)
    w4 = jnp.pad(w4, pad)
    return w4.reshape(4 * hidden_pad, *w.shape[1:])


def _build_call(*, n_bblk, n_chunks, chunk, b_blk, h_pad, f_pad, in_size,
                seq_len, mm_dtype, weight_mode):
    kernel = functools.partial(_lstm_kernel, chunk=chunk, b_blk=b_blk,
                               h_pad=h_pad, seq_len=seq_len, mm_dtype=mm_dtype)

    def wspec(shape):
        # Loop-invariant weights: constant index map; optionally single-buffer.
        if weight_mode is None:
            return pl.BlockSpec(shape, lambda b, s: (0,) * len(shape))
        return pl.BlockSpec(shape, lambda b, s: (0,) * len(shape),
                            pipeline_mode=weight_mode)

    return pl.pallas_call(
        kernel,
        out_shape=jax.ShapeDtypeStruct((n_bblk * b_blk, f_pad), jnp.float32),
        grid_spec=pltpu.PrefetchScalarGridSpec(
            num_scalar_prefetch=0,
            grid=(n_bblk, n_chunks),
            in_specs=[
                pl.BlockSpec((None, chunk * b_blk, in_size),
                             lambda b, s: (b, s, 0)),            # x chunk (2-D tile)
                wspec((in_size, 4 * h_pad)),                     # W_ih^T
                wspec((h_pad, 4 * h_pad)),                       # W_hh^T
                wspec((1, 4 * h_pad)),                           # fused bias
                wspec((h_pad, f_pad)),                           # W_fc^T
                wspec((1, f_pad)),                               # b_fc
            ],
            out_specs=pl.BlockSpec((b_blk, f_pad), lambda b, s: (b, 0)),
            scratch_shapes=[
                pltpu.VMEM((b_blk, h_pad), jnp.float32),              # h state
                pltpu.VMEM((b_blk, h_pad), jnp.float32),              # c state
                pltpu.VMEM((chunk * b_blk, 4 * h_pad), jnp.float32),  # x-proj slab
            ],
        ),
        compiler_params=pltpu.CompilerParams(
            dimension_semantics=("parallel", "arbitrary")),
    )


def lstm_forward(x, params, *, hidden_size, future_steps,
                 matmul_dtype=jnp.float32):
    """x: (batch, seq, input_size) -> (batch, future_steps) f32.

    matmul_dtype: dtype of the MXU operands (weights, x, and h only inside
    the dots). jnp.bfloat16 is recommended on v6e/v7x for larger H; gate math
    and c/h state always stay f32.
    """
    B, S, I = x.shape
    H = hidden_size
    F = future_steps

    if S == 0:
        # Empty sequence: hn == 0 -> fc(0) = b_fc.
        return jnp.broadcast_to(params["b_fc"].astype(jnp.float32), (B, F))

    mm_dtype = jnp.dtype(matmul_dtype)

    B_pad = _round_up(B, 8)
    H_pad = _round_up(H, 128)
    F_pad = _round_up(max(F, 128), 128)

    chunk = _pick_chunk(S, cap=32)
    n_chunks = pl.cdiv(S, chunk)
    S_pad = n_chunks * chunk

    # Split the padded batch into two blocks when it divides evenly, so the
    # second TensorCore (v7x) can run an independent recurrence. Single block
    # otherwise / for small batches; harmless on single-core chips.
    n_bblk = 2 if (B_pad >= 16 and B_pad % 16 == 0) else 1
    B_blk = B_pad // n_bblk

    # ---- parameter prep (plain JAX glue, done once) -------------------------
    w_ih = params["w_ih"].astype(jnp.float32)                    # (4H, I)
    w_hh = params["w_hh"].astype(jnp.float32)                    # (4H, H)
    b = (params["b_ih"] + params["b_hh"]).astype(jnp.float32)    # (4H,)

    wih_t = _pad_gate_dim(w_ih, H, H_pad).T.astype(mm_dtype)     # (I, 4H_pad)
    whh_p = _pad_gate_dim(w_hh, H, H_pad)                        # (4H_pad, H)
    whh_t = jnp.pad(whh_p, ((0, 0), (0, H_pad - H))).T.astype(mm_dtype)  # (H_pad, 4H_pad)
    b_p = _pad_gate_dim(b, H, H_pad).reshape(1, 4 * H_pad)       # (1, 4H_pad) f32

    wfc_t = jnp.pad(params["w_fc"].astype(jnp.float32).T,
                    ((0, H_pad - H), (0, F_pad - F))).astype(mm_dtype)  # (H_pad, F_pad)
    bfc = jnp.pad(params["b_fc"].astype(jnp.float32),
                  (0, F_pad - F)).reshape(1, F_pad)              # (1, F_pad) f32

    # ---- input prep: (B, S, I) -> (n_bblk, S_pad*B_blk, I) -------------------
    # Time-major inside each batch block; presented to the kernel as 2-D
    # sublane-dense tiles (no in-kernel reshape). Padded time steps are zeros
    # but are masked inside the kernel, never applied to the state.
    x_f = x.astype(mm_dtype)
    x_f = jnp.pad(x_f, ((0, B_pad - B), (0, S_pad - S), (0, 0)))
    x_f = jnp.transpose(x_f, (1, 0, 2))                          # (S_pad, B_pad, I)
    x_f = x_f.reshape(S_pad, n_bblk, B_blk, I)
    x_f = jnp.transpose(x_f, (1, 0, 2, 3)).reshape(n_bblk, S_pad * B_blk, I)

    builder = functools.partial(
        _build_call, n_bblk=n_bblk, n_chunks=n_chunks, chunk=chunk,
        b_blk=B_blk, h_pad=H_pad, f_pad=F_pad, in_size=I, seq_len=S,
        mm_dtype=mm_dtype)
    args = (x_f, wih_t, whh_t, b_p, wfc_t, bfc)

    try:
        # Single-buffer the loop-invariant weights (constant index maps, never
        # re-fetched): halves their resident VMEM vs. default double-buffering.
        out_pad = builder(weight_mode=pl.Buffered(1))(*args)
    except Exception:
        # pipeline_mode=pl.Buffered(1) unavailable on this jax version:
        # fall back to default buffering (identical results).
        out_pad = builder(weight_mode=None)(*args)

    return out_pad[:B, :F]


def init_params(key, input_size, hidden_size, future_steps):
    """Deterministic init matching PyTorch param shapes (uniform +/- 1/sqrt(H))."""
    H = hidden_size
    k = 1.0 / jnp.sqrt(jnp.float32(H))
    keys = jax.random.split(key, 6)
    uni = lambda kk, shape: jax.random.uniform(kk, shape, jnp.float32, -k, k)
    return {
        "w_ih": uni(keys[0], (4 * H, input_size)),
        "w_hh": uni(keys[1], (4 * H, H)),
        "b_ih": uni(keys[2], (4 * H,)),
        "b_hh": uni(keys[3], (4 * H,)),
        "w_fc": uni(keys[4], (future_steps, H)),
        "b_fc": uni(keys[5], (future_steps,)),
    }


def reference_forward(x, params, *, hidden_size, future_steps):
    """Pure-JAX reference of the PyTorch forward (for sanity check)."""
    B, S, I = x.shape
    H = hidden_size
    w_ih, w_hh = params["w_ih"], params["w_hh"]
    b = params["b_ih"] + params["b_hh"]

    def step(carry, x_t):
        h, c = carry
        gates = x_t @ w_ih.T + h @ w_hh.T + b
        i_g = jax.nn.sigmoid(gates[:, 0 * H:1 * H])
        f_g = jax.nn.sigmoid(gates[:, 1 * H:2 * H])
        g_g = jnp.tanh(gates[:, 2 * H:3 * H])
        o_g = jax.nn.sigmoid(gates[:, 3 * H:4 * H])
        c = f_g * c + i_g * g_g
        h = o_g * jnp.tanh(c)
        return (h, c), None

    h0 = jnp.zeros((B, H), jnp.float32)
    c0 = jnp.zeros((B, H), jnp.float32)
    (hn, _), _ = lax.scan(step, (h0, c0), jnp.transpose(x, (1, 0, 2)))
    return hn @ params["w_fc"].T + params["b_fc"]


if __name__ == "__main__":
    input_size, hidden_size, future_steps = 16, 64, 3

    key = jax.random.PRNGKey(0)
    k_x, k_p, k_x2 = jax.random.split(key, 3)
    params = init_params(k_p, input_size, hidden_size, future_steps)

    # Case 1: small batch / short seq, f32 matmuls (tight tolerance).
    x = jax.random.normal(k_x, (2, 8, input_size), jnp.float32)
    out = jax.block_until_ready(
        lstm_forward(x, params, hidden_size=hidden_size,
                     future_steps=future_steps))
    ref = reference_forward(x, params, hidden_size=hidden_size,
                            future_steps=future_steps)
    assert out.shape == (2, future_steps)
    assert jnp.allclose(out, ref, atol=1e-4, rtol=1e-4), (
        f"f32 max abs err {jnp.max(jnp.abs(out - ref))}")

    # Case 2: prime sequence length (fixed chunk + masked tail) and a batch
    # large enough to use two batch blocks (v7x second-TensorCore path).
    x2 = jax.random.normal(k_x2, (10, 37, input_size), jnp.float32)
    out2 = jax.block_until_ready(
        lstm_forward(x2, params, hidden_size=hidden_size,
                     future_steps=future_steps))
    ref2 = reference_forward(x2, params, hidden_size=hidden_size,
                             future_steps=future_steps)
    assert out2.shape == (10, future_steps)
    assert jnp.allclose(out2, ref2, atol=1e-4, rtol=1e-4), (
        f"f32 masked-tail max abs err {jnp.max(jnp.abs(out2 - ref2))}")

    # Case 3: bf16 MXU operands (v6e/v7x recommendation), looser tolerance.
    out3 = jax.block_until_ready(
        lstm_forward(x, params, hidden_size=hidden_size,
                     future_steps=future_steps, matmul_dtype=jnp.bfloat16))
    assert jnp.allclose(out3, ref, atol=5e-2, rtol=5e-2), (
        f"bf16 max abs err {jnp.max(jnp.abs(out3 - ref))}")

    print("KERNEL_OK")
</pallas_src>

<mosaic_0001>
module attributes {stable_mosaic.version = 11 : i64} {
  func.func @_lstm_kernel(%arg0: i32, %arg1: i32, %arg2: memref<1x64x16xf32, #tpu.memory_space<vmem>>, %arg3: memref<16x512xf32, #tpu.memory_space<vmem>>, %arg4: memref<128x512xf32, #tpu.memory_space<vmem>>, %arg5: memref<1x512xf32, #tpu.memory_space<vmem>>, %arg6: memref<128x128xf32, #tpu.memory_space<vmem>>, %arg7: memref<1x128xf32, #tpu.memory_space<vmem>>, %arg8: memref<8x128xf32, #tpu.memory_space<vmem>>, %arg9: memref<8x128xf32, #tpu.memory_space<vmem>>, %arg10: memref<8x128xf32, #tpu.memory_space<vmem>>, %arg11: memref<64x512xf32, #tpu.memory_space<vmem>>) attributes {dimension_semantics = [#tpu.dimension_semantics<parallel>, #tpu.dimension_semantics<arbitrary>], iteration_bounds = array<i64: 1, 1>, scalar_prefetch = 0 : i64, scratch_operands = 3 : i64, tpu.core_type = #tpu.core_type<tc>, window_params = [{transform_indices = @transform_0, window_bounds = array<i64: 1, 64, 16>}, {pipeline_mode = #tpu.pipeline_mode<synchronous>, transform_indices = @transform_1, window_bounds = array<i64: 16, 512>}, {pipeline_mode = #tpu.pipeline_mode<synchronous>, transform_indices = @transform_2, window_bounds = array<i64: 128, 512>}, {pipeline_mode = #tpu.pipeline_mode<synchronous>, transform_indices = @transform_3, window_bounds = array<i64: 1, 512>}, {pipeline_mode = #tpu.pipeline_mode<synchronous>, transform_indices = @transform_4, window_bounds = array<i64: 128, 128>}, {pipeline_mode = #tpu.pipeline_mode<synchronous>, transform_indices = @transform_5, window_bounds = array<i64: 1, 128>}, {transform_indices = @transform_6, window_bounds = array<i64: 8, 128>}]} {
    %c0_i32 = arith.constant 0 : i32
    %0 = arith.cmpi eq, %arg1, %c0_i32 : i32
    %1 = arith.extui %0 : i1 to i32
    %c0_i32_0 = arith.constant 0 : i32
    %2 = arith.cmpi ne, %1, %c0_i32_0 : i32
    scf.if %2 {
      %cst_132 = arith.constant 0.000000e+00 : f32
      %322 = vector.broadcast %cst_132 : f32 to vector<8x128xf32>
      %c0_133 = arith.constant 0 : index
      %c0_134 = arith.constant 0 : index
      %323 = vector.load %arg9[%c0_133, %c0_134] : memref<8x128xf32, #tpu.memory_space<vmem>>, vector<8x128xf32>
      tpu.vector_store %arg9[%c0_133, %c0_134], %322 {strides = array<i32>} : memref<8x128xf32, #tpu.memory_space<vmem>>, vector<8x128xf32>,
      %cst_135 = arith.constant 0.000000e+00 : f32
      %324 = vector.broadcast %cst_135 : f32 to vector<8x128xf32>
      %c0_136 = arith.constant 0 : index
      %c0_137 = arith.constant 0 : index
      %325 = vector.load %arg10[%c0_136, %c0_137] : memref<8x128xf32, #tpu.memory_space<vmem>>, vector<8x128xf32>
      tpu.vector_store %arg10[%c0_136, %c0_137], %324 {strides = array<i32>} : memref<8x128xf32, #tpu.memory_space<vmem>>, vector<8x128xf32>,
    } else {
    }
    %c0 = arith.constant 0 : index
    %c0_1 = arith.constant 0 : index
    %c0_2 = arith.constant 0 : index
    %3 = vector.load %arg2[%c0, %c0_1, %c0_2] : memref<1x64x16xf32, #tpu.memory_space<vmem>>, vector<1x64x16xf32>
    %4 = vector.shape_cast %3 : vector<1x64x16xf32> to vector<64x16xf32>
    %c0_3 = arith.constant 0 : index
    %c0_4 = arith.constant 0 : index
    %5 = vector.load %arg3[%c0_3, %c0_4] : memref<16x512xf32, #tpu.memory_space<vmem>>, vector<16x512xf32>
    %cst = arith.constant dense<0.000000e+00> : vector<64x512xf32>
    %6 = tpu.matmul %4, %5, %cst {dimension_numbers = #tpu.dot_dimension_numbers<[1], [0], [0], [1], [0, 0, 1, 1], [], []>} : vector<64x16xf32>, vector<16x512xf32>, vector<64x512xf32> -> vector<64x512xf32>
    %c0_5 = arith.constant 0 : index
    %c0_6 = arith.constant 0 : index
    %7 = vector.load %arg5[%c0_5, %c0_6] : memref<1x512xf32, #tpu.memory_space<vmem>>, vector<1x512xf32>
    %8 = vector.broadcast %7 : vector<1x512xf32> to vector<64x512xf32>
    %9 = arith.addf %6, %8 : vector<64x512xf32>
    %c0_7 = arith.constant 0 : index
    %c0_8 = arith.constant 0 : index
    %10 = vector.load %arg11[%c0_7, %c0_8] : memref<64x512xf32, #tpu.memory_space<vmem>>, vector<64x512xf32>
    tpu.vector_store %arg11[%c0_7, %c0_8], %9 {strides = array<i32>} : memref<64x512xf32, #tpu.memory_space<vmem>>, vector<64x512xf32>,
    %c0_9 = arith.constant 0 : index
    %c0_10 = arith.constant 0 : index
    %11 = vector.load %arg9[%c0_9, %c0_10] : memref<8x128xf32, #tpu.memory_space<vmem>>, vector<8x128xf32>
    %c0_11 = arith.constant 0 : index
    %c0_12 = arith.constant 0 : index
    %12 = vector.load %arg10[%c0_11, %c0_12] : memref<8x128xf32, #tpu.memory_space<vmem>>, vector<8x128xf32>
    %c0_i32_13 = arith.constant 0 : i32
    %c8_i32 = arith.constant 8 : i32
    %13 = arith.muli %c0_i32_13, %c8_i32 : i32
    %14 = tpu.assume_multiple %13, 8 : i32
    %15 = arith.index_cast %14 : i32 to index
    %c0_14 = arith.constant 0 : index
    %16 = vector.load %arg11[%15, %c0_14] : memref<64x512xf32, #tpu.memory_space<vmem>>, vector<8x512xf32>
    %c0_15 = arith.constant 0 : index
    %c0_16 = arith.constant 0 : index
    %17 = vector.load %arg4[%c0_15, %c0_16] : memref<128x512xf32, #tpu.memory_space<vmem>>, vector<128x512xf32>
    %cst_17 = arith.constant dense<0.000000e+00> : vector<8x512xf32>
    %18 = tpu.matmul %11, %17, %cst_17 {dimension_numbers = #tpu.dot_dimension_numbers<[1], [0], [0], [1], [0, 0, 1, 1], [], []>} : vector<8x128xf32>, vector<128x512xf32>, vector<8x512xf32> -> vector<8x512xf32>
    %19 = arith.addf %16, %18 : vector<8x512xf32>
    %20 = vector.extract_strided_slice %19 {offsets = [0, 0], sizes = [8, 128], strides = [1, 1]} : vector<8x512xf32> to vector<8x128xf32>
    %cst_18 = arith.constant 5.000000e-01 : f32
    %21 = vector.broadcast %cst_18 : f32 to vector<8x128xf32>
    %22 = arith.mulf %21, %20 : vector<8x128xf32>
    %23 = math.tanh %22 : vector<8x128xf32>
    %cst_19 = arith.constant 5.000000e-01 : f32
    %24 = vector.broadcast %cst_19 : f32 to vector<8x128xf32>
    %25 = arith.mulf %24, %23 : vector<8x128xf32>
    %cst_20 = arith.constant 5.000000e-01 : f32
    %26 = vector.broadcast %cst_20 : f32 to vector<8x128xf32>
    %27 = arith.addf %25, %26 : vector<8x128xf32>
    %28 = vector.extract_strided_slice %19 {offsets = [0, 128], sizes = [8, 128], strides = [1, 1]} : vector<8x512xf32> to vector<8x128xf32>
    %cst_21 = arith.constant 5.000000e-01 : f32
    %29 = vector.broadcast %cst_21 : f32 to vector<8x128xf32>
    %30 = arith.mulf %29, %28 : vector<8x128xf32>
    %31 = math.tanh %30 : vector<8x128xf32>
    %cst_22 = arith.constant 5.000000e-01 : f32
    %32 = vector.broadcast %cst_22 : f32 to vector<8x128xf32>
    %33 = arith.mulf %32, %31 : vector<8x128xf32>
    %cst_23 = arith.constant 5.000000e-01 : f32
    %34 = vector.broadcast %cst_23 : f32 to vector<8x128xf32>
    %35 = arith.addf %33, %34 : vector<8x128xf32>
    %36 = vector.extract_strided_slice %19 {offsets = [0, 256], sizes = [8, 128], strides = [1, 1]} : vector<8x512xf32> to vector<8x128xf32>
    %37 = math.tanh %36 : vector<8x128xf32>
    %38 = vector.extract_strided_slice %19 {offsets = [0, 384], sizes = [8, 128], strides = [1, 1]} : vector<8x512xf32> to vector<8x128xf32>
    %cst_24 = arith.constant 5.000000e-01 : f32
    %39 = vector.broadcast %cst_24 : f32 to vector<8x128xf32>
    %40 = arith.mulf %39, %38 : vector<8x128xf32>
    %41 = math.tanh %40 : vector<8x128xf32>
    %cst_25 = arith.constant 5.000000e-01 : f32
    %42 = vector.broadcast %cst_25 : f32 to vector<8x128xf32>
    %43 = arith.mulf %42, %41 : vector<8x128xf32>
    %cst_26 = arith.constant 5.000000e-01 : f32
    %44 = vector.broadcast %cst_26 : f32 to vector<8x128xf32>
    %45 = arith.addf %43, %44 : vector<8x128xf32>
    %46 = arith.mulf %35, %12 : vector<8x128xf32>
    %47 = arith.mulf %27, %37 : vector<8x128xf32>
    %48 = arith.addf %46, %47 : vector<8x128xf32>
    %49 = math.tanh %48 : vector<8x128xf32>
    %50 = arith.mulf %45, %49 : vector<8x128xf32>
    %c1_i32 = arith.constant 1 : i32
    %c8_i32_27 = arith.constant 8 : i32
    %51 = arith.muli %c1_i32, %c8_i32_27 : i32
    %52 = tpu.assume_multiple %51, 8 : i32
    %53 = arith.index_cast %52 : i32 to index
    %c0_28 = arith.constant 0 : index
    %54 = vector.load %arg11[%53, %c0_28] : memref<64x512xf32, #tpu.memory_space<vmem>>, vector<8x512xf32>
    %c0_29 = arith.constant 0 : index
    %c0_30 = arith.constant 0 : index
    %55 = vector.load %arg4[%c0_29, %c0_30] : memref<128x512xf32, #tpu.memory_space<vmem>>, vector<128x512xf32>
    %cst_31 = arith.constant dense<0.000000e+00> : vector<8x512xf32>
    %56 = tpu.matmul %50, %55, %cst_31 {dimension_numbers = #tpu.dot_dimension_numbers<[1], [0], [0], [1], [0, 0, 1, 1], [], []>} : vector<8x128xf32>, vector<128x512xf32>, vector<8x512xf32> -> vector<8x512xf32>
    %57 = arith.addf %54, %56 : vector<8x512xf32>
    %58 = vector.extract_strided_slice %57 {offsets = [0, 0], sizes = [8, 128], strides = [1, 1]} : vector<8x512xf32> to vector<8x128xf32>
    %cst_32 = arith.constant 5.000000e-01 : f32
    %59 = vector.broadcast %cst_32 : f32 to vector<8x128xf32>
    %60 = arith.mulf %59, %58 : vector<8x128xf32>
    %61 = math.tanh %60 : vector<8x128xf32>
    %cst_33 = arith.constant 5.000000e-01 : f32
    %62 = vector.broadcast %cst_33 : f32 to vector<8x128xf32>
    %63 = arith.mulf %62, %61 : vector<8x128xf32>
    %cst_34 = arith.constant 5.000000e-01 : f32
    %64 = vector.broadcast %cst_34 : f32 to vector<8x128xf32>
    %65 = arith.addf %63, %64 : vector<8x128xf32>
    %66 = vector.extract_strided_slice %57 {offsets = [0, 128], sizes = [8, 128], strides = [1, 1]} : vector<8x512xf32> to vector<8x128xf32>
    %cst_35 = arith.constant 5.000000e-01 : f32
    %67 = vector.broadcast %cst_35 : f32 to vector<8x128xf32>
    %68 = arith.mulf %67, %66 : vector<8x128xf32>
    %69 = math.tanh %68 : vector<8x128xf32>
    %cst_36 = arith.constant 5.000000e-01 : f32
    %70 = vector.broadcast %cst_36 : f32 to vector<8x128xf32>
    %71 = arith.mulf %70, %69 : vector<8x128xf32>
    %cst_37 = arith.constant 5.000000e-01 : f32
    %72 = vector.broadcast %cst_37 : f32 to vector<8x128xf32>
    %73 = arith.addf %71, %72 : vector<8x128xf32>
    %74 = vector.extract_strided_slice %57 {offsets = [0, 256], sizes = [8, 128], strides = [1, 1]} : vector<8x512xf32> to vector<8x128xf32>
    %75 = math.tanh %74 : vector<8x128xf32>
    %76 = vector.extract_strided_slice %57 {offsets = [0, 384], sizes = [8, 128], strides = [1, 1]} : vector<8x512xf32> to vector<8x128xf32>
    %cst_38 = arith.constant 5.000000e-01 : f32
    %77 = vector.broadcast %cst_38 : f32 to vector<8x128xf32>
    %78 = arith.mulf %77, %76 : vector<8x128xf32>
    %79 = math.tanh %78 : vector<8x128xf32>
    %cst_39 = arith.constant 5.000000e-01 : f32
    %80 = vector.broadcast %cst_39 : f32 to vector<8x128xf32>
    %81 = arith.mulf %80, %79 : vector<8x128xf32>
    %cst_40 = arith.constant 5.000000e-01 : f32
    %82 = vector.broadcast %cst_40 : f32 to vector<8x128xf32>
    %83 = arith.addf %81, %82 : vector<8x128xf32>
    %84 = arith.mulf %73, %48 : vector<8x128xf32>
    %85 = arith.mulf %65, %75 : vector<8x128xf32>
    %86 = arith.addf %84, %85 : vector<8x128xf32>
    %87 = math.tanh %86 : vector<8x128xf32>
    %88 = arith.mulf %83, %87 : vector<8x128xf32>
    %c2_i32 = arith.constant 2 : i32
    %c8_i32_41 = arith.constant 8 : i32
    %89 = arith.muli %c2_i32, %c8_i32_41 : i32
    %90 = tpu.assume_multiple %89, 8 : i32
    %91 = arith.index_cast %90 : i32 to index
    %c0_42 = arith.constant 0 : index
    %92 = vector.load %arg11[%91, %c0_42] : memref<64x512xf32, #tpu.memory_space<vmem>>, vector<8x512xf32>
    %c0_43 = arith.constant 0 : index
    %c0_44 = arith.constant 0 : index
    %93 = vector.load %arg4[%c0_43, %c0_44] : memref<128x512xf32, #tpu.memory_space<vmem>>, vector<128x512xf32>
    %cst_45 = arith.constant dense<0.000000e+00> : vector<8x512xf32>
    %94 = tpu.matmul %88, %93, %cst_45 {dimension_numbers = #tpu.dot_dimension_numbers<[1], [0], [0], [1], [0, 0, 1, 1], [], []>} : vector<8x128xf32>, vector<128x512xf32>, vector<8x512xf32> -> vector<8x512xf32>
    %95 = arith.addf %92, %94 : vector<8x512xf32>
    %96 = vector.extract_strided_slice %95 {offsets = [0, 0], sizes = [8, 128], strides = [1, 1]} : vector<8x512xf32> to vector<8x128xf32>
    %cst_46 = arith.constant 5.000000e-01 : f32
    %97 = vector.broadcast %cst_46 : f32 to vector<8x128xf32>
    %98 = arith.mulf %97, %96 : vector<8x128xf32>
    %99 = math.tanh %98 : vector<8x128xf32>
    %cst_47 = arith.constant 5.000000e-01 : f32
    %100 = vector.broadcast %cst_47 : f32 to vector<8x128xf32>
    %101 = arith.mulf %100, %99 : vector<8x128xf32>
    %cst_48 = arith.constant 5.000000e-01 : f32
    %102 = vector.broadcast %cst_48 : f32 to vector<8x128xf32>
    %103 = arith.addf %101, %102 : vector<8x128xf32>
    %104 = vector.extract_strided_slice %95 {offsets = [0, 128], sizes = [8, 128], strides = [1, 1]} : vector<8x512xf32> to vector<8x128xf32>
    %cst_49 = arith.constant 5.000000e-01 : f32
    %105 = vector.broadcast %cst_49 : f32 to vector<8x128xf32>
    %106 = arith.mulf %105, %104 : vector<8x128xf32>
    %107 = math.tanh %106 : vector<8x128xf32>
    %cst_50 = arith.constant 5.000000e-01 : f32
    %108 = vector.broadcast %cst_50 : f32 to vector<8x128xf32>
    %109 = arith.mulf %108, %107 : vector<8x128xf32>
    %cst_51 = arith.constant 5.000000e-01 : f32
    %110 = vector.broadcast %cst_51 : f32 to vector<8x128xf32>
    %111 = arith.addf %109, %110 : vector<8x128xf32>
    %112 = vector.extract_strided_slice %95 {offsets = [0, 256], sizes = [8, 128], strides = [1, 1]} : vector<8x512xf32> to vector<8x128xf32>
    %113 = math.tanh %112 : vector<8x128xf32>
    %114 = vector.extract_strided_slice %95 {offsets = [0, 384], sizes = [8, 128], strides = [1, 1]} : vector<8x512xf32> to vector<8x128xf32>
    %cst_52 = arith.constant 5.000000e-01 : f32
    %115 = vector.broadcast %cst_52 : f32 to vector<8x128xf32>
    %116 = arith.mulf %115, %114 : vector<8x128xf32>
    %117 = math.tanh %116 : vector<8x128xf32>
    %cst_53 = arith.constant 5.000000e-01 : f32
    %118 = vector.broadcast %cst_53 : f32 to vector<8x128xf32>
    %119 = arith.mulf %118, %117 : vector<8x128xf32>
    %cst_54 = arith.constant 5.000000e-01 : f32
    %120 = vector.broadcast %cst_54 : f32 to vector<8x128xf32>
    %121 = arith.addf %119, %120 : vector<8x128xf32>
    %122 = arith.mulf %111, %86 : vector<8x128xf32>
    %123 = arith.mulf %103, %113 : vector<8x128xf32>
    %124 = arith.addf %122, %123 : vector<8x128xf32>
    %125 = math.tanh %124 : vector<8x128xf32>
    %126 = arith.mulf %121, %125 : vector<8x128xf32>
    %c3_i32 = arith.constant 3 : i32
    %c8_i32_55 = arith.constant 8 : i32
    %127 = arith.muli %c3_i32, %c8_i32_55 : i32
    %128 = tpu.assume_multiple %127, 8 : i32
    %129 = arith.index_cast %128 : i32 to index
    %c0_56 = arith.constant 0 : index
    %130 = vector.load %arg11[%129, %c0_56] : memref<64x512xf32, #tpu.memory_space<vmem>>, vector<8x512xf32>
    %c0_57 = arith.constant 0 : index
    %c0_58 = arith.constant 0 : index
    %131 = vector.load %arg4[%c0_57, %c0_58] : memref<128x512xf32, #tpu.memory_space<vmem>>, vector<128x512xf32>
    %cst_59 = arith.constant dense<0.000000e+00> : vector<8x512xf32>
    %132 = tpu.matmul %126, %131, %cst_59 {dimension_numbers = #tpu.dot_dimension_numbers<[1], [0], [0], [1], [0, 0, 1, 1], [], []>} : vector<8x128xf32>, vector<128x512xf32>, vector<8x512xf32> -> vector<8x512xf32>
    %133 = arith.addf %130, %132 : vector<8x512xf32>
    %134 = vector.extract_strided_slice %133 {offsets = [0, 0], sizes = [8, 128], strides = [1, 1]} : vector<8x512xf32> to vector<8x128xf32>
    %cst_60 = arith.constant 5.000000e-01 : f32
    %135 = vector.broadcast %cst_60 : f32 to vector<8x128xf32>
    %136 = arith.mulf %135, %134 : vector<8x128xf32>
    %137 = math.tanh %136 : vector<8x128xf32>
    %cst_61 = arith.constant 5.000000e-01 : f32
    %138 = vector.broadcast %cst_61 : f32 to vector<8x128xf32>
    %139 = arith.mulf %138, %137 : vector<8x128xf32>
    %cst_62 = arith.constant 5.000000e-01 : f32
    %140 = vector.broadcast %cst_62 : f32 to vector<8x128xf32>
    %141 = arith.addf %139, %140 : vector<8x128xf32>
    %142 = vector.extract_strided_slice %133 {offsets = [0, 128], sizes = [8, 128], strides = [1, 1]} : vector<8x512xf32> to vector<8x128xf32>
    %cst_63 = arith.constant 5.000000e-01 : f32
    %143 = vector.broadcast %cst_63 : f32 to vector<8x128xf32>
    %144 = arith.mulf %143, %142 : vector<8x128xf32>
    %145 = math.tanh %144 : vector<8x128xf32>
    %cst_64 = arith.constant 5.000000e-01 : f32
    %146 = vector.broadcast %cst_64 : f32 to vector<8x128xf32>
    %147 = arith.mulf %146, %145 : vector<8x128xf32>
    %cst_65 = arith.constant 5.000000e-01 : f32
    %148 = vector.broadcast %cst_65 : f32 to vector<8x128xf32>
    %149 = arith.addf %147, %148 : vector<8x128xf32>
    %150 = vector.extract_strided_slice %133 {offsets = [0, 256], sizes = [8, 128], strides = [1, 1]} : vector<8x512xf32> to vector<8x128xf32>
    %151 = math.tanh %150 : vector<8x128xf32>
    %152 = vector.extract_strided_slice %133 {offsets = [0, 384], sizes = [8, 128], strides = [1, 1]} : vector<8x512xf32> to vector<8x128xf32>
    %cst_66 = arith.constant 5.000000e-01 : f32
    %153 = vector.broadcast %cst_66 : f32 to vector<8x128xf32>
    %154 = arith.mulf %153, %152 : vector<8x128xf32>
    %155 = math.tanh %154 : vector<8x128xf32>
    %cst_67 = arith.constant 5.000000e-01 : f32
    %156 = vector.broadcast %cst_67 : f32 to vector<8x128xf32>
    %157 = arith.mulf %156, %155 : vector<8x128xf32>
    %cst_68 = arith.constant 5.000000e-01 : f32
    %158 = vector.broadcast %cst_68 : f32 to vector<8x128xf32>
    %159 = arith.addf %157, %158 : vector<8x128xf32>
    %160 = arith.mulf %149, %124 : vector<8x128xf32>
    %161 = arith.mulf %141, %151 : vector<8x128xf32>
    %162 = arith.addf %160, %161 : vector<8x128xf32>
    %163 = math.tanh %162 : vector<8x128xf32>
    %164 = arith.mulf %159, %163 : vector<8x128xf32>
    %c4_i32 = arith.constant 4 : i32
    %c8_i32_69 = arith.constant 8 : i32
    %165 = arith.muli %c4_i32, %c8_i32_69 : i32
    %166 = tpu.assume_multiple %165, 8 : i32
    %167 = arith.index_cast %166 : i32 to index
    %c0_70 = arith.constant 0 : index
    %168 = vector.load %arg11[%167, %c0_70] : memref<64x512xf32, #tpu.memory_space<vmem>>, vector<8x512xf32>
    %c0_71 = arith.constant 0 : index
    %c0_72 = arith.constant 0 : index
    %169 = vector.load %arg4[%c0_71, %c0_72] : memref<128x512xf32, #tpu.memory_space<vmem>>, vector<128x512xf32>
    %cst_73 = arith.constant dense<0.000000e+00> : vector<8x512xf32>
    %170 = tpu.matmul %164, %169, %cst_73 {dimension_numbers = #tpu.dot_dimension_numbers<[1], [0], [0], [1], [0, 0, 1, 1], [], []>} : vector<8x128xf32>, vector<128x512xf32>, vector<8x512xf32> -> vector<8x512xf32>
    %171 = arith.addf %168, %170 : vector<8x512xf32>
    %172 = vector.extract_strided_slice %171 {offsets = [0, 0], sizes = [8, 128], strides = [1, 1]} : vector<8x512xf32> to vector<8x128xf32>
    %cst_74 = arith.constant 5.000000e-01 : f32
    %173 = vector.broadcast %cst_74 : f32 to vector<8x128xf32>
    %174 = arith.mulf %173, %172 : vector<8x128xf32>
    %175 = math.tanh %174 : vector<8x128xf32>
    %cst_75 = arith.constant 5.000000e-01 : f32
    %176 = vector.broadcast %cst_75 : f32 to vector<8x128xf32>
    %177 = arith.mulf %176, %175 : vector<8x128xf32>
    %cst_76 = arith.constant 5.000000e-01 : f32
    %178 = vector.broadcast %cst_76 : f32 to vector<8x128xf32>
    %179 = arith.addf %177, %178 : vector<8x128xf32>
    %180 = vector.extract_strided_slice %171 {offsets = [0, 128], sizes = [8, 128], strides = [1, 1]} : vector<8x512xf32> to vector<8x128xf32>
    %cst_77 = arith.constant 5.000000e-01 : f32
    %181 = vector.broadcast %cst_77 : f32 to vector<8x128xf32>
    %182 = arith.mulf %181, %180 : vector<8x128xf32>
    %183 = math.tanh %182 : vector<8x128xf32>
    %cst_78 = arith.constant 5.000000e-01 : f32
    %184 = vector.broadcast %cst_78 : f32 to vector<8x128xf32>
    %185 = arith.mulf %184, %183 : vector<8x128xf32>
    %cst_79 = arith.constant 5.000000e-01 : f32
    %186 = vector.broadcast %cst_79 : f32 to vector<8x128xf32>
    %187 = arith.addf %185, %186 : vector<8x128xf32>
    %188 = vector.extract_strided_slice %171 {offsets = [0, 256], sizes = [8, 128], strides = [1, 1]} : vector<8x512xf32> to vector<8x128xf32>
    %189 = math.tanh %188 : vector<8x128xf32>
    %190 = vector.extract_strided_slice %171 {offsets = [0, 384], sizes = [8, 128], strides = [1, 1]} : vector<8x512xf32> to vector<8x128xf32>
    %cst_80 = arith.constant 5.000000e-01 : f32
    %191 = vector.broadcast %cst_80 : f32 to vector<8x128xf32>
    %192 = arith.mulf %191, %190 : vector<8x128xf32>
    %193 = math.tanh %192 : vector<8x128xf32>
    %cst_81 = arith.constant 5.000000e-01 : f32
    %194 = vector.broadcast %cst_81 : f32 to vector<8x128xf32>
    %195 = arith.mulf %194, %193 : vector<8x128xf32>
    %cst_82 = arith.constant 5.000000e-01 : f32
    %196 = vector.broadcast %cst_82 : f32 to vector<8x128xf32>
    %197 = arith.addf %195, %196 : vector<8x128xf32>
    %198 = arith.mulf %187, %162 : vector<8x128xf32>
    %199 = arith.mulf %179, %189 : vector<8x128xf32>
    %200 = arith.addf %198, %199 : vector<8x128xf32>
    %201 = math.tanh %200 : vector<8x128xf32>
    %202 = arith.mulf %197, %201 : vector<8x128xf32>
    %c5_i32 = arith.constant 5 : i32
    %c8_i32_83 = arith.constant 8 : i32
    %203 = arith.muli %c5_i32, %c8_i32_83 : i32
    %204 = tpu.assume_multiple %203, 8 : i32
    %205 = arith.index_cast %204 : i32 to index
    %c0_84 = arith.constant 0 : index
    %206 = vector.load %arg11[%205, %c0_84] : memref<64x512xf32, #tpu.memory_space<vmem>>, vector<8x512xf32>
    %c0_85 = arith.constant 0 : index
    %c0_86 = arith.constant 0 : index
    %207 = vector.load %arg4[%c0_85, %c0_86] : memref<128x512xf32, #tpu.memory_space<vmem>>, vector<128x512xf32>
    %cst_87 = arith.constant dense<0.000000e+00> : vector<8x512xf32>
    %208 = tpu.matmul %202, %207, %cst_87 {dimension_numbers = #tpu.dot_dimension_numbers<[1], [0], [0], [1], [0, 0, 1, 1], [], []>} : vector<8x128xf32>, vector<128x512xf32>, vector<8x512xf32> -> vector<8x512xf32>
    %209 = arith.addf %206, %208 : vector<8x512xf32>
    %210 = vector.extract_strided_slice %209 {offsets = [0, 0], sizes = [8, 128], strides = [1, 1]} : vector<8x512xf32> to vector<8x128xf32>
    %cst_88 = arith.constant 5.000000e-01 : f32
    %211 = vector.broadcast %cst_88 : f32 to vector<8x128xf32>
    %212 = arith.mulf %211, %210 : vector<8x128xf32>
    %213 = math.tanh %212 : vector<8x128xf32>
    %cst_89 = arith.constant 5.000000e-01 : f32
    %214 = vector.broadcast %cst_89 : f32 to vector<8x128xf32>
    %215 = arith.mulf %214, %213 : vector<8x128xf32>
    %cst_90 = arith.constant 5.000000e-01 : f32
    %216 = vector.broadcast %cst_90 : f32 to vector<8x128xf32>
    %217 = arith.addf %215, %216 : vector<8x128xf32>
    %218 = vector.extract_strided_slice %209 {offsets = [0, 128], sizes = [8, 128], strides = [1, 1]} : vector<8x512xf32> to vector<8x128xf32>
    %cst_91 = arith.constant 5.000000e-01 : f32
    %219 = vector.broadcast %cst_91 : f32 to vector<8x128xf32>
    %220 = arith.mulf %219, %218 : vector<8x128xf32>
    %221 = math.tanh %220 : vector<8x128xf32>
    %cst_92 = arith.constant 5.000000e-01 : f32
    %222 = vector.broadcast %cst_92 : f32 to vector<8x128xf32>
    %223 = arith.mulf %222, %221 : vector<8x128xf32>
    %cst_93 = arith.constant 5.000000e-01 : f32
    %224 = vector.broadcast %cst_93 : f32 to vector<8x128xf32>
    %225 = arith.addf %223, %224 : vector<8x128xf32>
    %226 = vector.extract_strided_slice %209 {offsets = [0, 256], sizes = [8, 128], strides = [1, 1]} : vector<8x512xf32> to vector<8x128xf32>
    %227 = math.tanh %226 : vector<8x128xf32>
    %228 = vector.extract_strided_slice %209 {offsets = [0, 384], sizes = [8, 128], strides = [1, 1]} : vector<8x512xf32> to vector<8x128xf32>
    %cst_94 = arith.constant 5.000000e-01 : f32
    %229 = vector.broadcast %cst_94 : f32 to vector<8x128xf32>
    %230 = arith.mulf %229, %228 : vector<8x128xf32>
    %231 = math.tanh %230 : vector<8x128xf32>
    %cst_95 = arith.constant 5.000000e-01 : f32
    %232 = vector.broadcast %cst_95 : f32 to vector<8x128xf32>
    %233 = arith.mulf %232, %231 : vector<8x128xf32>
    %cst_96 = arith.constant 5.000000e-01 : f32
    %234 = vector.broadcast %cst_96 : f32 to vector<8x128xf32>
    %235 = arith.addf %233, %234 : vector<8x128xf32>
    %236 = arith.mulf %225, %200 : vector<8x128xf32>
    %237 = arith.mulf %217, %227 : vector<8x128xf32>
    %238 = arith.addf %236, %237 : vector<8x128xf32>
    %239 = math.tanh %238 : vector<8x128xf32>
    %240 = arith.mulf %235, %239 : vector<8x128xf32>
    %c6_i32 = arith.constant 6 : i32
    %c8_i32_97 = arith.constant 8 : i32
    %241 = arith.muli %c6_i32, %c8_i32_97 : i32
    %242 = tpu.assume_multiple %241, 8 : i32
    %243 = arith.index_cast %242 : i32 to index
    %c0_98 = arith.constant 0 : index
    %244 = vector.load %arg11[%243, %c0_98] : memref<64x512xf32, #tpu.memory_space<vmem>>, vector<8x512xf32>
    %c0_99 = arith.constant 0 : index
    %c0_100 = arith.constant 0 : index
    %245 = vector.load %arg4[%c0_99, %c0_100] : memref<128x512xf32, #tpu.memory_space<vmem>>, vector<128x512xf32>
    %cst_101 = arith.constant dense<0.000000e+00> : vector<8x512xf32>
    %246 = tpu.matmul %240, %245, %cst_101 {dimension_numbers = #tpu.dot_dimension_numbers<[1], [0], [0], [1], [0, 0, 1, 1], [], []>} : vector<8x128xf32>, vector<128x512xf32>, vector<8x512xf32> -> vector<8x512xf32>
    %247 = arith.addf %244, %246 : vector<8x512xf32>
    %248 = vector.extract_strided_slice %247 {offsets = [0, 0], sizes = [8, 128], strides = [1, 1]} : vector<8x512xf32> to vector<8x128xf32>
    %cst_102 = arith.constant 5.000000e-01 : f32
    %249 = vector.broadcast %cst_102 : f32 to vector<8x128xf32>
    %250 = arith.mulf %249, %248 : vector<8x128xf32>
    %251 = math.tanh %250 : vector<8x128xf32>
    %cst_103 = arith.constant 5.000000e-01 : f32
    %252 = vector.broadcast %cst_103 : f32 to vector<8x128xf32>
    %253 = arith.mulf %252, %251 : vector<8x128xf32>
    %cst_104 = arith.constant 5.000000e-01 : f32
    %254 = vector.broadcast %cst_104 : f32 to vector<8x128xf32>
    %255 = arith.addf %253, %254 : vector<8x128xf32>
    %256 = vector.extract_strided_slice %247 {offsets = [0, 128], sizes = [8, 128], strides = [1, 1]} : vector<8x512xf32> to vector<8x128xf32>
    %cst_105 = arith.constant 5.000000e-01 : f32
    %257 = vector.broadcast %cst_105 : f32 to vector<8x128xf32>
    %258 = arith.mulf %257, %256 : vector<8x128xf32>
    %259 = math.tanh %258 : vector<8x128xf32>
    %cst_106 = arith.constant 5.000000e-01 : f32
    %260 = vector.broadcast %cst_106 : f32 to vector<8x128xf32>
    %261 = arith.mulf %260, %259 : vector<8x128xf32>
    %cst_107 = arith.constant 5.000000e-01 : f32
    %262 = vector.broadcast %cst_107 : f32 to vector<8x128xf32>
    %263 = arith.addf %261, %262 : vector<8x128xf32>
    %264 = vector.extract_strided_slice %247 {offsets = [0, 256], sizes = [8, 128], strides = [1, 1]} : vector<8x512xf32> to vector<8x128xf32>
    %265 = math.tanh %264 : vector<8x128xf32>
    %266 = vector.extract_strided_slice %247 {offsets = [0, 384], sizes = [8, 128], strides = [1, 1]} : vector<8x512xf32> to vector<8x128xf32>
    %cst_108 = arith.constant 5.000000e-01 : f32
    %267 = vector.broadcast %cst_108 : f32 to vector<8x128xf32>
    %268 = arith.mulf %267, %266 : vector<8x128xf32>
    %269 = math.tanh %268 : vector<8x128xf32>
    %cst_109 = arith.constant 5.000000e-01 : f32
    %270 = vector.broadcast %cst_109 : f32 to vector<8x128xf32>
    %271 = arith.mulf %270, %269 : vector<8x128xf32>
    %cst_110 = arith.constant 5.000000e-01 : f32
    %272 = vector.broadcast %cst_110 : f32 to vector<8x128xf32>
    %273 = arith.addf %271, %272 : vector<8x128xf32>
    %274 = arith.mulf %263, %238 : vector<8x128xf32>
    %275 = arith.mulf %255, %265 : vector<8x128xf32>
    %276 = arith.addf %274, %275 : vector<8x128xf32>
    %277 = math.tanh %276 : vector<8x128xf32>
    %278 = arith.mulf %273, %277 : vector<8x128xf32>
    %c7_i32 = arith.constant 7 : i32
    %c8_i32_111 = arith.constant 8 : i32
    %279 = arith.muli %c7_i32, %c8_i32_111 : i32
    %280 = tpu.assume_multiple %279, 8 : i32
    %281 = arith.index_cast %280 : i32 to index
    %c0_112 = arith.constant 0 : index
    %282 = vector.load %arg11[%281, %c0_112] : memref<64x512xf32, #tpu.memory_space<vmem>>, vector<8x512xf32>
    %c0_113 = arith.constant 0 : index
    %c0_114 = arith.constant 0 : index
    %283 = vector.load %arg4[%c0_113, %c0_114] : memref<128x512xf32, #tpu.memory_space<vmem>>, vector<128x512xf32>
    %cst_115 = arith.constant dense<0.000000e+00> : vector<8x512xf32>
    %284 = tpu.matmul %278, %283, %cst_115 {dimension_numbers = #tpu.dot_dimension_numbers<[1], [0], [0], [1], [0, 0, 1, 1], [], []>} : vector<8x128xf32>, vector<128x512xf32>, vector<8x512xf32> -> vector<8x512xf32>
    %285 = arith.addf %282, %284 : vector<8x512xf32>
    %286 = vector.extract_strided_slice %285 {offsets = [0, 0], sizes = [8, 128], strides = [1, 1]} : vector<8x512xf32> to vector<8x128xf32>
    %cst_116 = arith.constant 5.000000e-01 : f32
    %287 = vector.broadcast %cst_116 : f32 to vector<8x128xf32>
    %288 = arith.mulf %287, %286 : vector<8x128xf32>
    %289 = math.tanh %288 : vector<8x128xf32>
    %cst_117 = arith.constant 5.000000e-01 : f32
    %290 = vector.broadcast %cst_117 : f32 to vector<8x128xf32>
    %291 = arith.mulf %290, %289 : vector<8x128xf32>
    %cst_118 = arith.constant 5.000000e-01 : f32
    %292 = vector.broadcast %cst_118 : f32 to vector<8x128xf32>
    %293 = arith.addf %291, %292 : vector<8x128xf32>
    %294 = vector.extract_strided_slice %285 {offsets = [0, 128], sizes = [8, 128], strides = [1, 1]} : vector<8x512xf32> to vector<8x128xf32>
    %cst_119 = arith.constant 5.000000e-01 : f32
    %295 = vector.broadcast %cst_119 : f32 to vector<8x128xf32>
    %296 = arith.mulf %295, %294 : vector<8x128xf32>
    %297 = math.tanh %296 : vector<8x128xf32>
    %cst_120 = arith.constant 5.000000e-01 : f32
    %298 = vector.broadcast %cst_120 : f32 to vector<8x128xf32>
    %299 = arith.mulf %298, %297 : vector<8x128xf32>
    %cst_121 = arith.constant 5.000000e-01 : f32
    %300 = vector.broadcast %cst_121 : f32 to vector<8x128xf32>
    %301 = arith.addf %299, %300 : vector<8x128xf32>
    %302 = vector.extract_strided_slice %285 {offsets = [0, 256], sizes = [8, 128], strides = [1, 1]} : vector<8x512xf32> to vector<8x128xf32>
    %303 = math.tanh %302 : vector<8x128xf32>
    %304 = vector.extract_strided_slice %285 {offsets = [0, 384], sizes = [8, 128], strides = [1, 1]} : vector<8x512xf32> to vector<8x128xf32>
    %cst_122 = arith.constant 5.000000e-01 : f32
    %305 = vector.broadcast %cst_122 : f32 to vector<8x128xf32>
    %306 = arith.mulf %305, %304 : vector<8x128xf32>
    %307 = math.tanh %306 : vector<8x128xf32>
    %cst_123 = arith.constant 5.000000e-01 : f32
    %308 = vector.broadcast %cst_123 : f32 to vector<8x128xf32>
    %309 = arith.mulf %308, %307 : vector<8x128xf32>
    %cst_124 = arith.constant 5.000000e-01 : f32
    %310 = vector.broadcast %cst_124 : f32 to vector<8x128xf32>
    %311 = arith.addf %309, %310 : vector<8x128xf32>
    %312 = arith.mulf %301, %276 : vector<8x128xf32>
    %313 = arith.mulf %293, %303 : vector<8x128xf32>
    %314 = arith.addf %312, %313 : vector<8x128xf32>
    %315 = math.tanh %314 : vector<8x128xf32>
    %316 = arith.mulf %311, %315 : vector<8x128xf32>
    %c8_i32_125 = arith.constant 8 : i32
    %c0_126 = arith.constant 0 : index
    %c0_127 = arith.constant 0 : index
    %317 = vector.load %arg9[%c0_126, %c0_127] : memref<8x128xf32, #tpu.memory_space<vmem>>, vector<8x128xf32>
    tpu.vector_store %arg9[%c0_126, %c0_127], %316 {strides = array<i32>} : memref<8x128xf32, #tpu.memory_space<vmem>>, vector<8x128xf32>,
    %c0_128 = arith.constant 0 : index
    %c0_129 = arith.constant 0 : index
    %318 = vector.load %arg10[%c0_128, %c0_129] : memref<8x128xf32, #tpu.memory_space<vmem>>, vector<8x128xf32>
    tpu.vector_store %arg10[%c0_128, %c0_129], %314 {strides = array<i32>} : memref<8x128xf32, #tpu.memory_space<vmem>>, vector<8x128xf32>,
    %c0_i32_130 = arith.constant 0 : i32
    %319 = arith.cmpi eq, %arg1, %c0_i32_130 : i32
    %320 = arith.extui %319 : i1 to i32
    %c0_i32_131 = arith.constant 0 : i32
    %321 = arith.cmpi ne, %320, %c0_i32_131 : i32
    scf.if %321 {
      %c0_132 = arith.constant 0 : index
      %c0_133 = arith.constant 0 : index
      %322 = vector.load %arg6[%c0_132, %c0_133] : memref<128x128xf32, #tpu.memory_space<vmem>>, vector<128x128xf32>
      %cst_134 = arith.constant dense<0.000000e+00> : vector<8x128xf32>
      %323 = tpu.matmul %316, %322, %cst_134 {dimension_numbers = #tpu.dot_dimension_numbers<[1], [0], [0], [1], [0, 0, 1, 1], [], []>} : vector<8x128xf32>, vector<128x128xf32>, vector<8x128xf32> -> vector<8x128xf32>
      %c0_135 = arith.constant 0 : index
      %c0_136 = arith.constant 0 : index
      %324 = vector.load %arg7[%c0_135, %c0_136] : memref<1x128xf32, #tpu.memory_space<vmem>>, vector<1x128xf32>
      %325 = vector.broadcast %324 : vector<1x128xf32> to vector<8x128xf32>
      %326 = arith.addf %323, %325 : vector<8x128xf32>
      %c0_137 = arith.constant 0 : index
      %c0_138 = arith.constant 0 : index
      %327 = vector.load %arg8[%c0_137, %c0_138] : memref<8x128xf32, #tpu.memory_space<vmem>>, vector<8x128xf32>
      tpu.vector_store %arg8[%c0_137, %c0_138], %326 {strides = array<i32>} : memref<8x128xf32, #tpu.memory_space<vmem>>, vector<8x128xf32>,
    } else {
    }
    return
  }
  func.func @transform_0(%arg0: i32, %arg1: i32) -> (i32, i32, i32) {
    %c0_i32 = arith.constant 0 : i32
    %c0_i32_0 = arith.constant 0 : i32
    return %arg0, %arg1, %c0_i32 : i32, i32, i32
  }
  func.func @transform_1(%arg0: i32, %arg1: i32) -> (i32, i32) {
    %c0_i32 = arith.constant 0 : i32
    %c0_i32_0 = arith.constant 0 : i32
    %c0_i32_1 = arith.constant 0 : i32
    return %c0_i32, %c0_i32_0 : i32, i32
  }
  func.func @transform_2(%arg0: i32, %arg1: i32) -> (i32, i32) {
    %c0_i32 = arith.constant 0 : i32
    %c0_i32_0 = arith.constant 0 : i32
    %c0_i32_1 = arith.constant 0 : i32
    return %c0_i32, %c0_i32_0 : i32, i32
  }
  func.func @transform_3(%arg0: i32, %arg1: i32) -> (i32, i32) {
    %c0_i32 = arith.constant 0 : i32
    %c0_i32_0 = arith.constant 0 : i32
    %c0_i32_1 = arith.constant 0 : i32
    return %c0_i32, %c0_i32_0 : i32, i32
  }
  func.func @transform_4(%arg0: i32, %arg1: i32) -> (i32, i32) {
    %c0_i32 = arith.constant 0 : i32
    %c0_i32_0 = arith.constant 0 : i32
    %c0_i32_1 = arith.constant 0 : i32
    return %c0_i32, %c0_i32_0 : i32, i32
  }
  func.func @transform_5(%arg0: i32, %arg1: i32) -> (i32, i32) {
    %c0_i32 = arith.constant 0 : i32
    %c0_i32_0 = arith.constant 0 : i32
    %c0_i32_1 = arith.constant 0 : i32
    return %c0_i32, %c0_i32_0 : i32, i32
  }
  func.func @transform_6(%arg0: i32, %arg1: i32) -> (i32, i32) {
    %c0_i32 = arith.constant 0 : i32
    %c0_i32_0 = arith.constant 0 : i32
    return %arg0, %c0_i32 : i32, i32
  }
}

module attributes {stable_mosaic.version = 11 : i64} {
  func.func @_lstm_kernel(%arg0: i32, %arg1: i32, %arg2: memref<1x64x16xf32, #tpu.memory_space<vmem>>, %arg3: memref<16x512xf32, #tpu.memory_space<vmem>>, %arg4: memref<128x512xf32, #tpu.memory_space<vmem>>, %arg5: memref<1x512xf32, #tpu.memory_space<vmem>>, %arg6: memref<128x128xf32, #tpu.memory_space<vmem>>, %arg7: memref<1x128xf32, #tpu.memory_space<vmem>>, %arg8: memref<8x128xf32, #tpu.memory_space<vmem>>, %arg9: memref<8x128xf32, #tpu.memory_space<vmem>>, %arg10: memref<8x128xf32, #tpu.memory_space<vmem>>, %arg11: memref<64x512xf32, #tpu.memory_space<vmem>>) attributes {dimension_semantics = [#tpu.dimension_semantics<parallel>, #tpu.dimension_semantics<arbitrary>], iteration_bounds = array<i64: 1, 1>, scalar_prefetch = 0 : i64, scratch_operands = 3 : i64, tpu.core_type = #tpu.core_type<tc>, window_params = [{transform_indices = @transform_0, window_bounds = array<i64: 1, 64, 16>}, {pipeline_mode = #tpu.pipeline_mode<synchronous>, transform_indices = @transform_1, window_bounds = array<i64: 16, 512>}, {pipeline_mode = #tpu.pipeline_mode<synchronous>, transform_indices = @transform_2, window_bounds = array<i64: 128, 512>}, {pipeline_mode = #tpu.pipeline_mode<synchronous>, transform_indices = @transform_3, window_bounds = array<i64: 1, 512>}, {pipeline_mode = #tpu.pipeline_mode<synchronous>, transform_indices = @transform_4, window_bounds = array<i64: 128, 128>}, {pipeline_mode = #tpu.pipeline_mode<synchronous>, transform_indices = @transform_5, window_bounds = array<i64: 1, 128>}, {transform_indices = @transform_6, window_bounds = array<i64: 8, 128>}]} {
    %c0_i32 = arith.constant 0 : i32
    %0 = arith.cmpi eq, %arg1, %c0_i32 : i32
    %1 = arith.extui %0 : i1 to i32
    %c0_i32_0 = arith.constant 0 : i32
    %2 = arith.cmpi ne, %1, %c0_i32_0 : i32
    scf.if %2 {
      %cst_132 = arith.constant 0.000000e+00 : f32
      %322 = vector.broadcast %cst_132 : f32 to vector<8x128xf32>
      %c0_133 = arith.constant 0 : index
      %c0_134 = arith.constant 0 : index
      %323 = vector.load %arg9[%c0_133, %c0_134] : memref<8x128xf32, #tpu.memory_space<vmem>>, vector<8x128xf32>
      tpu.vector_store %arg9[%c0_133, %c0_134], %322 {strides = array<i32>} : memref<8x128xf32, #tpu.memory_space<vmem>>, vector<8x128xf32>,
      %cst_135 = arith.constant 0.000000e+00 : f32
      %324 = vector.broadcast %cst_135 : f32 to vector<8x128xf32>
      %c0_136 = arith.constant 0 : index
      %c0_137 = arith.constant 0 : index
      %325 = vector.load %arg10[%c0_136, %c0_137] : memref<8x128xf32, #tpu.memory_space<vmem>>, vector<8x128xf32>
      tpu.vector_store %arg10[%c0_136, %c0_137], %324 {strides = array<i32>} : memref<8x128xf32, #tpu.memory_space<vmem>>, vector<8x128xf32>,
    } else {
    }
    %c0 = arith.constant 0 : index
    %c0_1 = arith.constant 0 : index
    %c0_2 = arith.constant 0 : index
    %3 = vector.load %arg2[%c0, %c0_1, %c0_2] : memref<1x64x16xf32, #tpu.memory_space<vmem>>, vector<1x64x16xf32>
    %4 = vector.shape_cast %3 : vector<1x64x16xf32> to vector<64x16xf32>
    %c0_3 = arith.constant 0 : index
    %c0_4 = arith.constant 0 : index
    %5 = vector.load %arg3[%c0_3, %c0_4] : memref<16x512xf32, #tpu.memory_space<vmem>>, vector<16x512xf32>
    %cst = arith.constant dense<0.000000e+00> : vector<64x512xf32>
    %6 = tpu.matmul %4, %5, %cst {dimension_numbers = #tpu.dot_dimension_numbers<[1], [0], [0], [1], [0, 0, 1, 1], [], []>} : vector<64x16xf32>, vector<16x512xf32>, vector<64x512xf32> -> vector<64x512xf32>
    %c0_5 = arith.constant 0 : index
    %c0_6 = arith.constant 0 : index
    %7 = vector.load %arg5[%c0_5, %c0_6] : memref<1x512xf32, #tpu.memory_space<vmem>>, vector<1x512xf32>
    %8 = vector.broadcast %7 : vector<1x512xf32> to vector<64x512xf32>
    %9 = arith.addf %6, %8 : vector<64x512xf32>
    %c0_7 = arith.constant 0 : index
    %c0_8 = arith.constant 0 : index
    %10 = vector.load %arg11[%c0_7, %c0_8] : memref<64x512xf32, #tpu.memory_space<vmem>>, vector<64x512xf32>
    tpu.vector_store %arg11[%c0_7, %c0_8], %9 {strides = array<i32>} : memref<64x512xf32, #tpu.memory_space<vmem>>, vector<64x512xf32>,
    %c0_9 = arith.constant 0 : index
    %c0_10 = arith.constant 0 : index
    %11 = vector.load %arg9[%c0_9, %c0_10] : memref<8x128xf32, #tpu.memory_space<vmem>>, vector<8x128xf32>
    %c0_11 = arith.constant 0 : index
    %c0_12 = arith.constant 0 : index
    %12 = vector.load %arg10[%c0_11, %c0_12] : memref<8x128xf32, #tpu.memory_space<vmem>>, vector<8x128xf32>
    %c0_i32_13 = arith.constant 0 : i32
    %c8_i32 = arith.constant 8 : i32
    %13 = arith.muli %c0_i32_13, %c8_i32 : i32
    %14 = tpu.assume_multiple %13, 8 : i32
    %15 = arith.index_cast %14 : i32 to index
    %c0_14 = arith.constant 0 : index
    %16 = vector.load %arg11[%15, %c0_14] : memref<64x512xf32, #tpu.memory_space<vmem>>, vector<8x512xf32>
    %c0_15 = arith.constant 0 : index
    %c0_16 = arith.constant 0 : index
    %17 = vector.load %arg4[%c0_15, %c0_16] : memref<128x512xf32, #tpu.memory_space<vmem>>, vector<128x512xf32>
    %cst_17 = arith.constant dense<0.000000e+00> : vector<8x512xf32>
    %18 = tpu.matmul %11, %17, %cst_17 {dimension_numbers = #tpu.dot_dimension_numbers<[1], [0], [0], [1], [0, 0, 1, 1], [], []>} : vector<8x128xf32>, vector<128x512xf32>, vector<8x512xf32> -> vector<8x512xf32>
    %19 = arith.addf %16, %18 : vector<8x512xf32>
    %20 = vector.extract_strided_slice %19 {offsets = [0, 0], sizes = [8, 128], strides = [1, 1]} : vector<8x512xf32> to vector<8x128xf32>
    %cst_18 = arith.constant 5.000000e-01 : f32
    %21 = vector.broadcast %cst_18 : f32 to vector<8x128xf32>
    %22 = arith.mulf %21, %20 : vector<8x128xf32>
    %23 = math.tanh %22 : vector<8x128xf32>
    %cst_19 = arith.constant 5.000000e-01 : f32
    %24 = vector.broadcast %cst_19 : f32 to vector<8x128xf32>
    %25 = arith.mulf %24, %23 : vector<8x128xf32>
    %cst_20 = arith.constant 5.000000e-01 : f32
    %26 = vector.broadcast %cst_20 : f32 to vector<8x128xf32>
    %27 = arith.addf %25, %26 : vector<8x128xf32>
    %28 = vector.extract_strided_slice %19 {offsets = [0, 128], sizes = [8, 128], strides = [1, 1]} : vector<8x512xf32> to vector<8x128xf32>
    %cst_21 = arith.constant 5.000000e-01 : f32
    %29 = vector.broadcast %cst_21 : f32 to vector<8x128xf32>
    %30 = arith.mulf %29, %28 : vector<8x128xf32>
    %31 = math.tanh %30 : vector<8x128xf32>
    %cst_22 = arith.constant 5.000000e-01 : f32
    %32 = vector.broadcast %cst_22 : f32 to vector<8x128xf32>
    %33 = arith.mulf %32, %31 : vector<8x128xf32>
    %cst_23 = arith.constant 5.000000e-01 : f32
    %34 = vector.broadcast %cst_23 : f32 to vector<8x128xf32>
    %35 = arith.addf %33, %34 : vector<8x128xf32>
    %36 = vector.extract_strided_slice %19 {offsets = [0, 256], sizes = [8, 128], strides = [1, 1]} : vector<8x512xf32> to vector<8x128xf32>
    %37 = math.tanh %36 : vector<8x128xf32>
    %38 = vector.extract_strided_slice %19 {offsets = [0, 384], sizes = [8, 128], strides = [1, 1]} : vector<8x512xf32> to vector<8x128xf32>
    %cst_24 = arith.constant 5.000000e-01 : f32
    %39 = vector.broadcast %cst_24 : f32 to vector<8x128xf32>
    %40 = arith.mulf %39, %38 : vector<8x128xf32>
    %41 = math.tanh %40 : vector<8x128xf32>
    %cst_25 = arith.constant 5.000000e-01 : f32
    %42 = vector.broadcast %cst_25 : f32 to vector<8x128xf32>
    %43 = arith.mulf %42, %41 : vector<8x128xf32>
    %cst_26 = arith.constant 5.000000e-01 : f32
    %44 = vector.broadcast %cst_26 : f32 to vector<8x128xf32>
    %45 = arith.addf %43, %44 : vector<8x128xf32>
    %46 = arith.mulf %35, %12 : vector<8x128xf32>
    %47 = arith.mulf %27, %37 : vector<8x128xf32>
    %48 = arith.addf %46, %47 : vector<8x128xf32>
    %49 = math.tanh %48 : vector<8x128xf32>
    %50 = arith.mulf %45, %49 : vector<8x128xf32>
    %c1_i32 = arith.constant 1 : i32
    %c8_i32_27 = arith.constant 8 : i32
    %51 = arith.muli %c1_i32, %c8_i32_27 : i32
    %52 = tpu.assume_multiple %51, 8 : i32
    %53 = arith.index_cast %52 : i32 to index
    %c0_28 = arith.constant 0 : index
    %54 = vector.load %arg11[%53, %c0_28] : memref<64x512xf32, #tpu.memory_space<vmem>>, vector<8x512xf32>
    %c0_29 = arith.constant 0 : index
    %c0_30 = arith.constant 0 : index
    %55 = vector.load %arg4[%c0_29, %c0_30] : memref<128x512xf32, #tpu.memory_space<vmem>>, vector<128x512xf32>
    %cst_31 = arith.constant dense<0.000000e+00> : vector<8x512xf32>
    %56 = tpu.matmul %50, %55, %cst_31 {dimension_numbers = #tpu.dot_dimension_numbers<[1], [0], [0], [1], [0, 0, 1, 1], [], []>} : vector<8x128xf32>, vector<128x512xf32>, vector<8x512xf32> -> vector<8x512xf32>
    %57 = arith.addf %54, %56 : vector<8x512xf32>
    %58 = vector.extract_strided_slice %57 {offsets = [0, 0], sizes = [8, 128], strides = [1, 1]} : vector<8x512xf32> to vector<8x128xf32>
    %cst_32 = arith.constant 5.000000e-01 : f32
    %59 = vector.broadcast %cst_32 : f32 to vector<8x128xf32>
    %60 = arith.mulf %59, %58 : vector<8x128xf32>
    %61 = math.tanh %60 : vector<8x128xf32>
    %cst_33 = arith.constant 5.000000e-01 : f32
    %62 = vector.broadcast %cst_33 : f32 to vector<8x128xf32>
    %63 = arith.mulf %62, %61 : vector<8x128xf32>
    %cst_34 = arith.constant 5.000000e-01 : f32
    %64 = vector.broadcast %cst_34 : f32 to vector<8x128xf32>
    %65 = arith.addf %63, %64 : vector<8x128xf32>
    %66 = vector.extract_strided_slice %57 {offsets = [0, 128], sizes = [8, 128], strides = [1, 1]} : vector<8x512xf32> to vector<8x128xf32>
    %cst_35 = arith.constant 5.000000e-01 : f32
    %67 = vector.broadcast %cst_35 : f32 to vector<8x128xf32>
    %68 = arith.mulf %67, %66 : vector<8x128xf32>
    %69 = math.tanh %68 : vector<8x128xf32>
    %cst_36 = arith.constant 5.000000e-01 : f32
    %70 = vector.broadcast %cst_36 : f32 to vector<8x128xf32>
    %71 = arith.mulf %70, %69 : vector<8x128xf32>
    %cst_37 = arith.constant 5.000000e-01 : f32
    %72 = vector.broadcast %cst_37 : f32 to vector<8x128xf32>
    %73 = arith.addf %71, %72 : vector<8x128xf32>
    %74 = vector.extract_strided_slice %57 {offsets = [0, 256], sizes = [8, 128], strides = [1, 1]} : vector<8x512xf32> to vector<8x128xf32>
    %75 = math.tanh %74 : vector<8x128xf32>
    %76 = vector.extract_strided_slice %57 {offsets = [0, 384], sizes = [8, 128], strides = [1, 1]} : vector<8x512xf32> to vector<8x128xf32>
    %cst_38 = arith.constant 5.000000e-01 : f32
    %77 = vector.broadcast %cst_38 : f32 to vector<8x128xf32>
    %78 = arith.mulf %77, %76 : vector<8x128xf32>
    %79 = math.tanh %78 : vector<8x128xf32>
    %cst_39 = arith.constant 5.000000e-01 : f32
    %80 = vector.broadcast %cst_39 : f32 to vector<8x128xf32>
    %81 = arith.mulf %80, %79 : vector<8x128xf32>
    %cst_40 = arith.constant 5.000000e-01 : f32
    %82 = vector.broadcast %cst_40 : f32 to vector<8x128xf32>
    %83 = arith.addf %81, %82 : vector<8x128xf32>
    %84 = arith.mulf %73, %48 : vector<8x128xf32>
    %85 = arith.mulf %65, %75 : vector<8x128xf32>
    %86 = arith.addf %84, %85 : vector<8x128xf32>
    %87 = math.tanh %86 : vector<8x128xf32>
    %88 = arith.mulf %83, %87 : vector<8x128xf32>
    %c2_i32 = arith.constant 2 : i32
    %c8_i32_41 = arith.constant 8 : i32
    %89 = arith.muli %c2_i32, %c8_i32_41 : i32
    %90 = tpu.assume_multiple %89, 8 : i32
    %91 = arith.index_cast %90 : i32 to index
    %c0_42 = arith.constant 0 : index
    %92 = vector.load %arg11[%91, %c0_42] : memref<64x512xf32, #tpu.memory_space<vmem>>, vector<8x512xf32>
    %c0_43 = arith.constant 0 : index
    %c0_44 = arith.constant 0 : index
    %93 = vector.load %arg4[%c0_43, %c0_44] : memref<128x512xf32, #tpu.memory_space<vmem>>, vector<128x512xf32>
    %cst_45 = arith.constant dense<0.000000e+00> : vector<8x512xf32>
    %94 = tpu.matmul %88, %93, %cst_45 {dimension_numbers = #tpu.dot_dimension_numbers<[1], [0], [0], [1], [0, 0, 1, 1], [], []>} : vector<8x128xf32>, vector<128x512xf32>, vector<8x512xf32> -> vector<8x512xf32>
    %95 = arith.addf %92, %94 : vector<8x512xf32>
    %96 = vector.extract_strided_slice %95 {offsets = [0, 0], sizes = [8, 128], strides = [1, 1]} : vector<8x512xf32> to vector<8x128xf32>
    %cst_46 = arith.constant 5.000000e-01 : f32
    %97 = vector.broadcast %cst_46 : f32 to vector<8x128xf32>
    %98 = arith.mulf %97, %96 : vector<8x128xf32>
    %99 = math.tanh %98 : vector<8x128xf32>
    %cst_47 = arith.constant 5.000000e-01 : f32
    %100 = vector.broadcast %cst_47 : f32 to vector<8x128xf32>
    %101 = arith.mulf %100, %99 : vector<8x128xf32>
    %cst_48 = arith.constant 5.000000e-01 : f32
    %102 = vector.broadcast %cst_48 : f32 to vector<8x128xf32>
    %103 = arith.addf %101, %102 : vector<8x128xf32>
    %104 = vector.extract_strided_slice %95 {offsets = [0, 128], sizes = [8, 128], strides = [1, 1]} : vector<8x512xf32> to vector<8x128xf32>
    %cst_49 = arith.constant 5.000000e-01 : f32
    %105 = vector.broadcast %cst_49 : f32 to vector<8x128xf32>
    %106 = arith.mulf %105, %104 : vector<8x128xf32>
    %107 = math.tanh %106 : vector<8x128xf32>
    %cst_50 = arith.constant 5.000000e-01 : f32
    %108 = vector.broadcast %cst_50 : f32 to vector<8x128xf32>
    %109 = arith.mulf %108, %107 : vector<8x128xf32>
    %cst_51 = arith.constant 5.000000e-01 : f32
    %110 = vector.broadcast %cst_51 : f32 to vector<8x128xf32>
    %111 = arith.addf %109, %110 : vector<8x128xf32>
    %112 = vector.extract_strided_slice %95 {offsets = [0, 256], sizes = [8, 128], strides = [1, 1]} : vector<8x512xf32> to vector<8x128xf32>
    %113 = math.tanh %112 : vector<8x128xf32>
    %114 = vector.extract_strided_slice %95 {offsets = [0, 384], sizes = [8, 128], strides = [1, 1]} : vector<8x512xf32> to vector<8x128xf32>
    %cst_52 = arith.constant 5.000000e-01 : f32
    %115 = vector.broadcast %cst_52 : f32 to vector<8x128xf32>
    %116 = arith.mulf %115, %114 : vector<8x128xf32>
    %117 = math.tanh %116 : vector<8x128xf32>
    %cst_53 = arith.constant 5.000000e-01 : f32
    %118 = vector.broadcast %cst_53 : f32 to vector<8x128xf32>
    %119 = arith.mulf %118, %117 : vector<8x128xf32>
    %cst_54 = arith.constant 5.000000e-01 : f32
    %120 = vector.broadcast %cst_54 : f32 to vector<8x128xf32>
    %121 = arith.addf %119, %120 : vector<8x128xf32>
    %122 = arith.mulf %111, %86 : vector<8x128xf32>
    %123 = arith.mulf %103, %113 : vector<8x128xf32>
    %124 = arith.addf %122, %123 : vector<8x128xf32>
    %125 = math.tanh %124 : vector<8x128xf32>
    %126 = arith.mulf %121, %125 : vector<8x128xf32>
    %c3_i32 = arith.constant 3 : i32
    %c8_i32_55 = arith.constant 8 : i32
    %127 = arith.muli %c3_i32, %c8_i32_55 : i32
    %128 = tpu.assume_multiple %127, 8 : i32
    %129 = arith.index_cast %128 : i32 to index
    %c0_56 = arith.constant 0 : index
    %130 = vector.load %arg11[%129, %c0_56] : memref<64x512xf32, #tpu.memory_space<vmem>>, vector<8x512xf32>
    %c0_57 = arith.constant 0 : index
    %c0_58 = arith.constant 0 : index
    %131 = vector.load %arg4[%c0_57, %c0_58] : memref<128x512xf32, #tpu.memory_space<vmem>>, vector<128x512xf32>
    %cst_59 = arith.constant dense<0.000000e+00> : vector<8x512xf32>
    %132 = tpu.matmul %126, %131, %cst_59 {dimension_numbers = #tpu.dot_dimension_numbers<[1], [0], [0], [1], [0, 0, 1, 1], [], []>} : vector<8x128xf32>, vector<128x512xf32>, vector<8x512xf32> -> vector<8x512xf32>
    %133 = arith.addf %130, %132 : vector<8x512xf32>
    %134 = vector.extract_strided_slice %133 {offsets = [0, 0], sizes = [8, 128], strides = [1, 1]} : vector<8x512xf32> to vector<8x128xf32>
    %cst_60 = arith.constant 5.000000e-01 : f32
    %135 = vector.broadcast %cst_60 : f32 to vector<8x128xf32>
    %136 = arith.mulf %135, %134 : vector<8x128xf32>
    %137 = math.tanh %136 : vector<8x128xf32>
    %cst_61 = arith.constant 5.000000e-01 : f32
    %138 = vector.broadcast %cst_61 : f32 to vector<8x128xf32>
    %139 = arith.mulf %138, %137 : vector<8x128xf32>
    %cst_62 = arith.constant 5.000000e-01 : f32
    %140 = vector.broadcast %cst_62 : f32 to vector<8x128xf32>
    %141 = arith.addf %139, %140 : vector<8x128xf32>
    %142 = vector.extract_strided_slice %133 {offsets = [0, 128], sizes = [8, 128], strides = [1, 1]} : vector<8x512xf32> to vector<8x128xf32>
    %cst_63 = arith.constant 5.000000e-01 : f32
    %143 = vector.broadcast %cst_63 : f32 to vector<8x128xf32>
    %144 = arith.mulf %143, %142 : vector<8x128xf32>
    %145 = math.tanh %144 : vector<8x128xf32>
    %cst_64 = arith.constant 5.000000e-01 : f32
    %146 = vector.broadcast %cst_64 : f32 to vector<8x128xf32>
    %147 = arith.mulf %146, %145 : vector<8x128xf32>
    %cst_65 = arith.constant 5.000000e-01 : f32
    %148 = vector.broadcast %cst_65 : f32 to vector<8x128xf32>
    %149 = arith.addf %147, %148 : vector<8x128xf32>
    %150 = vector.extract_strided_slice %133 {offsets = [0, 256], sizes = [8, 128], strides = [1, 1]} : vector<8x512xf32> to vector<8x128xf32>
    %151 = math.tanh %150 : vector<8x128xf32>
    %152 = vector.extract_strided_slice %133 {offsets = [0, 384], sizes = [8, 128], strides = [1, 1]} : vector<8x512xf32> to vector<8x128xf32>
    %cst_66 = arith.constant 5.000000e-01 : f32
    %153 = vector.broadcast %cst_66 : f32 to vector<8x128xf32>
    %154 = arith.mulf %153, %152 : vector<8x128xf32>
    %155 = math.tanh %154 : vector<8x128xf32>
    %cst_67 = arith.constant 5.000000e-01 : f32
    %156 = vector.broadcast %cst_67 : f32 to vector<8x128xf32>
    %157 = arith.mulf %156, %155 : vector<8x128xf32>
    %cst_68 = arith.constant 5.000000e-01 : f32
    %158 = vector.broadcast %cst_68 : f32 to vector<8x128xf32>
    %159 = arith.addf %157, %158 : vector<8x128xf32>
    %160 = arith.mulf %149, %124 : vector<8x128xf32>
    %161 = arith.mulf %141, %151 : vector<8x128xf32>
    %162 = arith.addf %160, %161 : vector<8x128xf32>
    %163 = math.tanh %162 : vector<8x128xf32>
    %164 = arith.mulf %159, %163 : vector<8x128xf32>
    %c4_i32 = arith.constant 4 : i32
    %c8_i32_69 = arith.constant 8 : i32
    %165 = arith.muli %c4_i32, %c8_i32_69 : i32
    %166 = tpu.assume_multiple %165, 8 : i32
    %167 = arith.index_cast %166 : i32 to index
    %c0_70 = arith.constant 0 : index
    %168 = vector.load %arg11[%167, %c0_70] : memref<64x512xf32, #tpu.memory_space<vmem>>, vector<8x512xf32>
    %c0_71 = arith.constant 0 : index
    %c0_72 = arith.constant 0 : index
    %169 = vector.load %arg4[%c0_71, %c0_72] : memref<128x512xf32, #tpu.memory_space<vmem>>, vector<128x512xf32>
    %cst_73 = arith.constant dense<0.000000e+00> : vector<8x512xf32>
    %170 = tpu.matmul %164, %169, %cst_73 {dimension_numbers = #tpu.dot_dimension_numbers<[1], [0], [0], [1], [0, 0, 1, 1], [], []>} : vector<8x128xf32>, vector<128x512xf32>, vector<8x512xf32> -> vector<8x512xf32>
    %171 = arith.addf %168, %170 : vector<8x512xf32>
    %172 = vector.extract_strided_slice %171 {offsets = [0, 0], sizes = [8, 128], strides = [1, 1]} : vector<8x512xf32> to vector<8x128xf32>
    %cst_74 = arith.constant 5.000000e-01 : f32
    %173 = vector.broadcast %cst_74 : f32 to vector<8x128xf32>
    %174 = arith.mulf %173, %172 : vector<8x128xf32>
    %175 = math.tanh %174 : vector<8x128xf32>
    %cst_75 = arith.constant 5.000000e-01 : f32
    %176 = vector.broadcast %cst_75 : f32 to vector<8x128xf32>
    %177 = arith.mulf %176, %175 : vector<8x128xf32>
    %cst_76 = arith.constant 5.000000e-01 : f32
    %178 = vector.broadcast %cst_76 : f32 to vector<8x128xf32>
    %179 = arith.addf %177, %178 : vector<8x128xf32>
    %180 = vector.extract_strided_slice %171 {offsets = [0, 128], sizes = [8, 128], strides = [1, 1]} : vector<8x512xf32> to vector<8x128xf32>
    %cst_77 = arith.constant 5.000000e-01 : f32
    %181 = vector.broadcast %cst_77 : f32 to vector<8x128xf32>
    %182 = arith.mulf %181, %180 : vector<8x128xf32>
    %183 = math.tanh %182 : vector<8x128xf32>
    %cst_78 = arith.constant 5.000000e-01 : f32
    %184 = vector.broadcast %cst_78 : f32 to vector<8x128xf32>
    %185 = arith.mulf %184, %183 : vector<8x128xf32>
    %cst_79 = arith.constant 5.000000e-01 : f32
    %186 = vector.broadcast %cst_79 : f32 to vector<8x128xf32>
    %187 = arith.addf %185, %186 : vector<8x128xf32>
    %188 = vector.extract_strided_slice %171 {offsets = [0, 256], sizes = [8, 128], strides = [1, 1]} : vector<8x512xf32> to vector<8x128xf32>
    %189 = math.tanh %188 : vector<8x128xf32>
    %190 = vector.extract_strided_slice %171 {offsets = [0, 384], sizes = [8, 128], strides = [1, 1]} : vector<8x512xf32> to vector<8x128xf32>
    %cst_80 = arith.constant 5.000000e-01 : f32
    %191 = vector.broadcast %cst_80 : f32 to vector<8x128xf32>
    %192 = arith.mulf %191, %190 : vector<8x128xf32>
    %193 = math.tanh %192 : vector<8x128xf32>
    %cst_81 = arith.constant 5.000000e-01 : f32
    %194 = vector.broadcast %cst_81 : f32 to vector<8x128xf32>
    %195 = arith.mulf %194, %193 : vector<8x128xf32>
    %cst_82 = arith.constant 5.000000e-01 : f32
    %196 = vector.broadcast %cst_82 : f32 to vector<8x128xf32>
    %197 = arith.addf %195, %196 : vector<8x128xf32>
    %198 = arith.mulf %187, %162 : vector<8x128xf32>
    %199 = arith.mulf %179, %189 : vector<8x128xf32>
    %200 = arith.addf %198, %199 : vector<8x128xf32>
    %201 = math.tanh %200 : vector<8x128xf32>
    %202 = arith.mulf %197, %201 : vector<8x128xf32>
    %c5_i32 = arith.constant 5 : i32
    %c8_i32_83 = arith.constant 8 : i32
    %203 = arith.muli %c5_i32, %c8_i32_83 : i32
    %204 = tpu.assume_multiple %203, 8 : i32
    %205 = arith.index_cast %204 : i32 to index
    %c0_84 = arith.constant 0 : index
    %206 = vector.load %arg11[%205, %c0_84] : memref<64x512xf32, #tpu.memory_space<vmem>>, vector<8x512xf32>
    %c0_85 = arith.constant 0 : index
    %c0_86 = arith.constant 0 : index
    %207 = vector.load %arg4[%c0_85, %c0_86] : memref<128x512xf32, #tpu.memory_space<vmem>>, vector<128x512xf32>
    %cst_87 = arith.constant dense<0.000000e+00> : vector<8x512xf32>
    %208 = tpu.matmul %202, %207, %cst_87 {dimension_numbers = #tpu.dot_dimension_numbers<[1], [0], [0], [1], [0, 0, 1, 1], [], []>} : vector<8x128xf32>, vector<128x512xf32>, vector<8x512xf32> -> vector<8x512xf32>
    %209 = arith.addf %206, %208 : vector<8x512xf32>
    %210 = vector.extract_strided_slice %209 {offsets = [0, 0], sizes = [8, 128], strides = [1, 1]} : vector<8x512xf32> to vector<8x128xf32>
    %cst_88 = arith.constant 5.000000e-01 : f32
    %211 = vector.broadcast %cst_88 : f32 to vector<8x128xf32>
    %212 = arith.mulf %211, %210 : vector<8x128xf32>
    %213 = math.tanh %212 : vector<8x128xf32>
    %cst_89 = arith.constant 5.000000e-01 : f32
    %214 = vector.broadcast %cst_89 : f32 to vector<8x128xf32>
    %215 = arith.mulf %214, %213 : vector<8x128xf32>
    %cst_90 = arith.constant 5.000000e-01 : f32
    %216 = vector.broadcast %cst_90 : f32 to vector<8x128xf32>
    %217 = arith.addf %215, %216 : vector<8x128xf32>
    %218 = vector.extract_strided_slice %209 {offsets = [0, 128], sizes = [8, 128], strides = [1, 1]} : vector<8x512xf32> to vector<8x128xf32>
    %cst_91 = arith.constant 5.000000e-01 : f32
    %219 = vector.broadcast %cst_91 : f32 to vector<8x128xf32>
    %220 = arith.mulf %219, %218 : vector<8x128xf32>
    %221 = math.tanh %220 : vector<8x128xf32>
    %cst_92 = arith.constant 5.000000e-01 : f32
    %222 = vector.broadcast %cst_92 : f32 to vector<8x128xf32>
    %223 = arith.mulf %222, %221 : vector<8x128xf32>
    %cst_93 = arith.constant 5.000000e-01 : f32
    %224 = vector.broadcast %cst_93 : f32 to vector<8x128xf32>
    %225 = arith.addf %223, %224 : vector<8x128xf32>
    %226 = vector.extract_strided_slice %209 {offsets = [0, 256], sizes = [8, 128], strides = [1, 1]} : vector<8x512xf32> to vector<8x128xf32>
    %227 = math.tanh %226 : vector<8x128xf32>
    %228 = vector.extract_strided_slice %209 {offsets = [0, 384], sizes = [8, 128], strides = [1, 1]} : vector<8x512xf32> to vector<8x128xf32>
    %cst_94 = arith.constant 5.000000e-01 : f32
    %229 = vector.broadcast %cst_94 : f32 to vector<8x128xf32>
    %230 = arith.mulf %229, %228 : vector<8x128xf32>
    %231 = math.tanh %230 : vector<8x128xf32>
    %cst_95 = arith.constant 5.000000e-01 : f32
    %232 = vector.broadcast %cst_95 : f32 to vector<8x128xf32>
    %233 = arith.mulf %232, %231 : vector<8x128xf32>
    %cst_96 = arith.constant 5.000000e-01 : f32
    %234 = vector.broadcast %cst_96 : f32 to vector<8x128xf32>
    %235 = arith.addf %233, %234 : vector<8x128xf32>
    %236 = arith.mulf %225, %200 : vector<8x128xf32>
    %237 = arith.mulf %217, %227 : vector<8x128xf32>
    %238 = arith.addf %236, %237 : vector<8x128xf32>
    %239 = math.tanh %238 : vector<8x128xf32>
    %240 = arith.mulf %235, %239 : vector<8x128xf32>
    %c6_i32 = arith.constant 6 : i32
    %c8_i32_97 = arith.constant 8 : i32
    %241 = arith.muli %c6_i32, %c8_i32_97 : i32
    %242 = tpu.assume_multiple %241, 8 : i32
    %243 = arith.index_cast %242 : i32 to index
    %c0_98 = arith.constant 0 : index
    %244 = vector.load %arg11[%243, %c0_98] : memref<64x512xf32, #tpu.memory_space<vmem>>, vector<8x512xf32>
    %c0_99 = arith.constant 0 : index
    %c0_100 = arith.constant 0 : index
    %245 = vector.load %arg4[%c0_99, %c0_100] : memref<128x512xf32, #tpu.memory_space<vmem>>, vector<128x512xf32>
    %cst_101 = arith.constant dense<0.000000e+00> : vector<8x512xf32>
    %246 = tpu.matmul %240, %245, %cst_101 {dimension_numbers = #tpu.dot_dimension_numbers<[1], [0], [0], [1], [0, 0, 1, 1], [], []>} : vector<8x128xf32>, vector<128x512xf32>, vector<8x512xf32> -> vector<8x512xf32>
    %247 = arith.addf %244, %246 : vector<8x512xf32>
    %248 = vector.extract_strided_slice %247 {offsets = [0, 0], sizes = [8, 128], strides = [1, 1]} : vector<8x512xf32> to vector<8x128xf32>
    %cst_102 = arith.constant 5.000000e-01 : f32
    %249 = vector.broadcast %cst_102 : f32 to vector<8x128xf32>
    %250 = arith.mulf %249, %248 : vector<8x128xf32>
    %251 = math.tanh %250 : vector<8x128xf32>
    %cst_103 = arith.constant 5.000000e-01 : f32
    %252 = vector.broadcast %cst_103 : f32 to vector<8x128xf32>
    %253 = arith.mulf %252, %251 : vector<8x128xf32>
    %cst_104 = arith.constant 5.000000e-01 : f32
    %254 = vector.broadcast %cst_104 : f32 to vector<8x128xf32>
    %255 = arith.addf %253, %254 : vector<8x128xf32>
    %256 = vector.extract_strided_slice %247 {offsets = [0, 128], sizes = [8, 128], strides = [1, 1]} : vector<8x512xf32> to vector<8x128xf32>
    %cst_105 = arith.constant 5.000000e-01 : f32
    %257 = vector.broadcast %cst_105 : f32 to vector<8x128xf32>
    %258 = arith.mulf %257, %256 : vector<8x128xf32>
    %259 = math.tanh %258 : vector<8x128xf32>
    %cst_106 = arith.constant 5.000000e-01 : f32
    %260 = vector.broadcast %cst_106 : f32 to vector<8x128xf32>
    %261 = arith.mulf %260, %259 : vector<8x128xf32>
    %cst_107 = arith.constant 5.000000e-01 : f32
    %262 = vector.broadcast %cst_107 : f32 to vector<8x128xf32>
    %263 = arith.addf %261, %262 : vector<8x128xf32>
    %264 = vector.extract_strided_slice %247 {offsets = [0, 256], sizes = [8, 128], strides = [1, 1]} : vector<8x512xf32> to vector<8x128xf32>
    %265 = math.tanh %264 : vector<8x128xf32>
    %266 = vector.extract_strided_slice %247 {offsets = [0, 384], sizes = [8, 128], strides = [1, 1]} : vector<8x512xf32> to vector<8x128xf32>
    %cst_108 = arith.constant 5.000000e-01 : f32
    %267 = vector.broadcast %cst_108 : f32 to vector<8x128xf32>
    %268 = arith.mulf %267, %266 : vector<8x128xf32>
    %269 = math.tanh %268 : vector<8x128xf32>
    %cst_109 = arith.constant 5.000000e-01 : f32
    %270 = vector.broadcast %cst_109 : f32 to vector<8x128xf32>
    %271 = arith.mulf %270, %269 : vector<8x128xf32>
    %cst_110 = arith.constant 5.000000e-01 : f32
    %272 = vector.broadcast %cst_110 : f32 to vector<8x128xf32>
    %273 = arith.addf %271, %272 : vector<8x128xf32>
    %274 = arith.mulf %263, %238 : vector<8x128xf32>
    %275 = arith.mulf %255, %265 : vector<8x128xf32>
    %276 = arith.addf %274, %275 : vector<8x128xf32>
    %277 = math.tanh %276 : vector<8x128xf32>
    %278 = arith.mulf %273, %277 : vector<8x128xf32>
    %c7_i32 = arith.constant 7 : i32
    %c8_i32_111 = arith.constant 8 : i32
    %279 = arith.muli %c7_i32, %c8_i32_111 : i32
    %280 = tpu.assume_multiple %279, 8 : i32
    %281 = arith.index_cast %280 : i32 to index
    %c0_112 = arith.constant 0 : index
    %282 = vector.load %arg11[%281, %c0_112] : memref<64x512xf32, #tpu.memory_space<vmem>>, vector<8x512xf32>
    %c0_113 = arith.constant 0 : index
    %c0_114 = arith.constant 0 : index
    %283 = vector.load %arg4[%c0_113, %c0_114] : memref<128x512xf32, #tpu.memory_space<vmem>>, vector<128x512xf32>
    %cst_115 = arith.constant dense<0.000000e+00> : vector<8x512xf32>
    %284 = tpu.matmul %278, %283, %cst_115 {dimension_numbers = #tpu.dot_dimension_numbers<[1], [0], [0], [1], [0, 0, 1, 1], [], []>} : vector<8x128xf32>, vector<128x512xf32>, vector<8x512xf32> -> vector<8x512xf32>
    %285 = arith.addf %282, %284 : vector<8x512xf32>
    %286 = vector.extract_strided_slice %285 {offsets = [0, 0], sizes = [8, 128], strides = [1, 1]} : vector<8x512xf32> to vector<8x128xf32>
    %cst_116 = arith.constant 5.000000e-01 : f32
    %287 = vector.broadcast %cst_116 : f32 to vector<8x128xf32>
    %288 = arith.mulf %287, %286 : vector<8x128xf32>
    %289 = math.tanh %288 : vector<8x128xf32>
    %cst_117 = arith.constant 5.000000e-01 : f32
    %290 = vector.broadcast %cst_117 : f32 to vector<8x128xf32>
    %291 = arith.mulf %290, %289 : vector<8x128xf32>
    %cst_118 = arith.constant 5.000000e-01 : f32
    %292 = vector.broadcast %cst_118 : f32 to vector<8x128xf32>
    %293 = arith.addf %291, %292 : vector<8x128xf32>
    %294 = vector.extract_strided_slice %285 {offsets = [0, 128], sizes = [8, 128], strides = [1, 1]} : vector<8x512xf32> to vector<8x128xf32>
    %cst_119 = arith.constant 5.000000e-01 : f32
    %295 = vector.broadcast %cst_119 : f32 to vector<8x128xf32>
    %296 = arith.mulf %295, %294 : vector<8x128xf32>
    %297 = math.tanh %296 : vector<8x128xf32>
    %cst_120 = arith.constant 5.000000e-01 : f32
    %298 = vector.broadcast %cst_120 : f32 to vector<8x128xf32>
    %299 = arith.mulf %298, %297 : vector<8x128xf32>
    %cst_121 = arith.constant 5.000000e-01 : f32
    %300 = vector.broadcast %cst_121 : f32 to vector<8x128xf32>
    %301 = arith.addf %299, %300 : vector<8x128xf32>
    %302 = vector.extract_strided_slice %285 {offsets = [0, 256], sizes = [8, 128], strides = [1, 1]} : vector<8x512xf32> to vector<8x128xf32>
    %303 = math.tanh %302 : vector<8x128xf32>
    %304 = vector.extract_strided_slice %285 {offsets = [0, 384], sizes = [8, 128], strides = [1, 1]} : vector<8x512xf32> to vector<8x128xf32>
    %cst_122 = arith.constant 5.000000e-01 : f32
    %305 = vector.broadcast %cst_122 : f32 to vector<8x128xf32>
    %306 = arith.mulf %305, %304 : vector<8x128xf32>
    %307 = math.tanh %306 : vector<8x128xf32>
    %cst_123 = arith.constant 5.000000e-01 : f32
    %308 = vector.broadcast %cst_123 : f32 to vector<8x128xf32>
    %309 = arith.mulf %308, %307 : vector<8x128xf32>
    %cst_124 = arith.constant 5.000000e-01 : f32
    %310 = vector.broadcast %cst_124 : f32 to vector<8x128xf32>
    %311 = arith.addf %309, %310 : vector<8x128xf32>
    %312 = arith.mulf %301, %276 : vector<8x128xf32>
    %313 = arith.mulf %293, %303 : vector<8x128xf32>
    %314 = arith.addf %312, %313 : vector<8x128xf32>
    %315 = math.tanh %314 : vector<8x128xf32>
    %316 = arith.mulf %311, %315 : vector<8x128xf32>
    %c8_i32_125 = arith.constant 8 : i32
    %c0_126 = arith.constant 0 : index
    %c0_127 = arith.constant 0 : index
    %317 = vector.load %arg9[%c0_126, %c0_127] : memref<8x128xf32, #tpu.memory_space<vmem>>, vector<8x128xf32>
    tpu.vector_store %arg9[%c0_126, %c0_127], %316 {strides = array<i32>} : memref<8x128xf32, #tpu.memory_space<vmem>>, vector<8x128xf32>,
    %c0_128 = arith.constant 0 : index
    %c0_129 = arith.constant 0 : index
    %318 = vector.load %arg10[%c0_128, %c0_129] : memref<8x128xf32, #tpu.memory_space<vmem>>, vector<8x128xf32>
    tpu.vector_store %arg10[%c0_128, %c0_129], %314 {strides = array<i32>} : memref<8x128xf32, #tpu.memory_space<vmem>>, vector<8x128xf32>,
    %c0_i32_130 = arith.constant 0 : i32
    %319 = arith.cmpi eq, %arg1, %c0_i32_130 : i32
    %320 = arith.extui %319 : i1 to i32
    %c0_i32_131 = arith.constant 0 : i32
    %321 = arith.cmpi ne, %320, %c0_i32_131 : i32
    scf.if %321 {
      %c0_132 = arith.constant 0 : index
      %c0_133 = arith.constant 0 : index
      %322 = vector.load %arg6[%c0_132, %c0_133] : memref<128x128xf32, #tpu.memory_space<vmem>>, vector<128x128xf32>
      %cst_134 = arith.constant dense<0.000000e+00> : vector<8x128xf32>
      %323 = tpu.matmul %316, %322, %cst_134 {dimension_numbers = #tpu.dot_dimension_numbers<[1], [0], [0], [1], [0, 0, 1, 1], [], []>} : vector<8x128xf32>, vector<128x128xf32>, vector<8x128xf32> -> vector<8x128xf32>
      %c0_135 = arith.constant 0 : index
      %c0_136 = arith.constant 0 : index
      %324 = vector.load %arg7[%c0_135, %c0_136] : memref<1x128xf32, #tpu.memory_space<vmem>>, vector<1x128xf32>
      %325 = vector.broadcast %324 : vector<1x128xf32> to vector<8x128xf32>
      %326 = arith.addf %323, %325 : vector<8x128xf32>
      %c0_137 = arith.constant 0 : index
      %c0_138 = arith.constant 0 : index
      %327 = vector.load %arg8[%c0_137, %c0_138] : memref<8x128xf32, #tpu.memory_space<vmem>>, vector<8x128xf32>
      tpu.vector_store %arg8[%c0_137, %c0_138], %326 {strides = array<i32>} : memref<8x128xf32, #tpu.memory_space<vmem>>, vector<8x128xf32>,
    } else {
    }
    return
  }
  func.func @transform_0(%arg0: i32, %arg1: i32) -> (i32, i32, i32) {
    %c0_i32 = arith.constant 0 : i32
    %c0_i32_0 = arith.constant 0 : i32
    return %arg0, %arg1, %c0_i32 : i32, i32, i32
  }
  func.func @transform_1(%arg0: i32, %arg1: i32) -> (i32, i32) {
    %c0_i32 = arith.constant 0 : i32
    %c0_i32_0 = arith.constant 0 : i32
    %c0_i32_1 = arith.constant 0 : i32
    return %c0_i32, %c0_i32_0 : i32, i32
  }
  func.func @transform_2(%arg0: i32, %arg1: i32) -> (i32, i32) {
    %c0_i32 = arith.constant 0 : i32
    %c0_i32_0 = arith.constant 0 : i32
    %c0_i32_1 = arith.constant 0 : i32
    return %c0_i32, %c0_i32_0 : i32, i32
  }
  func.func @transform_3(%arg0: i32, %arg1: i32) -> (i32, i32) {
    %c0_i32 = arith.constant 0 : i32
    %c0_i32_0 = arith.constant 0 : i32
    %c0_i32_1 = arith.constant 0 : i32
    return %c0_i32, %c0_i32_0 : i32, i32
  }
  func.func @transform_4(%arg0: i32, %arg1: i32) -> (i32, i32) {
    %c0_i32 = arith.constant 0 : i32
    %c0_i32_0 = arith.constant 0 : i32
    %c0_i32_1 = arith.constant 0 : i32
    return %c0_i32, %c0_i32_0 : i32, i32
  }
  func.func @transform_5(%arg0: i32, %arg1: i32) -> (i32, i32) {
    %c0_i32 = arith.constant 0 : i32
    %c0_i32_0 = arith.constant 0 : i32
    %c0_i32_1 = arith.constant 0 : i32
    return %c0_i32, %c0_i32_0 : i32, i32
  }
  func.func @transform_6(%arg0: i32, %arg1: i32) -> (i32, i32) {
    %c0_i32 = arith.constant 0 : i32
    %c0_i32_0 = arith.constant 0 : i32
    return %arg0, %c0_i32 : i32, i32
  }
}

</mosaic_0001>

<llo_original>
// kernel: tpu_custom_call.1
$region0: #{tpu_custom_call.1}
  #allocation0 [shape = 'u32[]', space=smem, size = 0x4, offset = 0x4, fixed_abs, tag = 'smem constant byte address 0x4 - core index']
  #allocation1 [shape = 'u32[144,128]{1,0:T(1,128)}', space=vmem, size = 0x12000, scoped, tag = 'internal scratch']
  #allocation2 [shape = 'f32[8,128]{1,0:T(8,128)}', space=vmem, size = 0x1000, scoped, tag = 'scratch operand']
  #allocation3 [shape = 'f32[8,128]{1,0:T(8,128)}', space=vmem, size = 0x1000, scoped, tag = 'scratch operand']
  #allocation4 [shape = 'f32[64,512]{1,0:T(8,128)}', space=vmem, size = 0x20000, scoped, tag = 'scratch operand']
  %s0 = inlined_call_operand.vmem [shape: f32[1,64,16], index: 0, kind: input, shape index: {}]
  %s1 = inlined_call_operand.vmem [shape: f32[16,512], index: 1, kind: input, shape index: {}]
  %s2 = inlined_call_operand.hbm [shape: f32[128,512], index: 2, kind: input, shape index: {}]
  %s3 = inlined_call_operand.vmem [shape: f32[1,512], index: 3, kind: input, shape index: {}]
  %s4 = inlined_call_operand.hbm [shape: f32[128,128], index: 4, kind: input, shape index: {}]
  %s5 = inlined_call_operand.vmem [shape: f32[1,128], index: 5, kind: input, shape index: {}]
  %s6 = inlined_call_operand.hbm [shape: f32[8,128], index: 6, kind: output, shape index: {}]
  %s7 = sld [smem:[#allocation0]]
  $region50: #{tpu_custom_call.1} parent=0
    _
  %s9 = ssub.s32 1, %s7
  %s10 = scalar_select 0, %s9, %s7
  $region1: #{tpu_custom_call.1} parent=0
    #allocation5 [shape = 'u8[262144]{0}', space=vmem, size = 0x40000, scoped, tag = 'input window, operand 2, single buffered']
    #allocation6 [shape = 's32[1]{0}', space=sflag, size = 0x4, scoped, tag = 'scoped memory for tpu_custom_call.1']
    #allocation7 [shape = 's32[1]{0}', space=sflag, size = 0x4, scoped, tag = 'scoped memory for tpu_custom_call.1']
    #allocation8 [shape = 'u8[65536]{0}', space=vmem, size = 0x10000, scoped, tag = 'input window, operand 4, single buffered']
    #allocation9 [shape = 's32[1]{0}', space=sflag, size = 0x4, scoped, tag = 'scoped memory for tpu_custom_call.1']
    #allocation10 [shape = 'u8[4096]{0}', space=vmem, size = 0x1000, scoped, tag = 'output window, operand 0, single buffered']
    %11 = vsyncpa [#allocation6], 0
    %12 = vsyncpa [#allocation9], 0
    %13 = vsyncpa [#allocation7], 0
    // Predicated region
    $region2: #{tpu_custom_call.1} parent=1 // pred_check
      _
    $region3: #{tpu_custom_call.1} parent=1 // pred_check_branch
      %15 = sbr.rel (0) target = $region5
    $region4: #{tpu_custom_call.1} parent=1 // pred_region
      _
    $region5: #{tpu_custom_call.1} parent=1 // pred_fallthru
      _
    // Predicated region
    $region6: #{tpu_custom_call.1} parent=1 // pred_check
      _
    $region7: #{tpu_custom_call.1} parent=1 // pred_check_branch
      %17 = sbr.rel (0) target = $region9
    $region8: #{tpu_custom_call.1} parent=1 // pred_region
      _
    $region9: #{tpu_custom_call.1} parent=1 // pred_fallthru
      _
    // Predicated region
    $region10: #{tpu_custom_call.1} parent=1 // pred_check
      _
    $region11: #{tpu_custom_call.1} parent=1 // pred_check_branch
      %19 = sbr.rel (0) target = $region13
    $region12: #{tpu_custom_call.1} parent=1 // pred_region
      %s21 = ssub.s32 8192, 8192
      %22 = vsyncadd [#allocation6], %s21
      %s23 = sshll.u32 [#allocation5], 4
      %s24 = int_to_ptr.vmem [resolvable:$true] %s23
      %29 = dma.hbm_to_vmem [thread:$0]  %s2, 8192, %s24, [#allocation6], 512, 512, 32
    $region13: #{tpu_custom_call.1} parent=1 // pred_fallthru
      _
    // Predicated region
    $region14: #{tpu_custom_call.1} parent=1 // pred_check
      _
    $region15: #{tpu_custom_call.1} parent=1 // pred_check_branch
      %31 = sbr.rel (0) target = $region17
    $region16: #{tpu_custom_call.1} parent=1 // pred_region
      _
    $region17: #{tpu_custom_call.1} parent=1 // pred_fallthru
      _
    // Predicated region
    $region18: #{tpu_custom_call.1} parent=1 // pred_check
      _
    $region19: #{tpu_custom_call.1} parent=1 // pred_check_branch
      %33 = sbr.rel (0) target = $region21
    $region20: #{tpu_custom_call.1} parent=1 // pred_region
      %s35 = ssub.s32 2048, 2048
      %36 = vsyncadd [#allocation9], %s35
      %s37 = sshll.u32 [#allocation8], 4
      %s38 = int_to_ptr.vmem [resolvable:$true] %s37
      %43 = dma.hbm_to_vmem [thread:$0]  %s4, 2048, %s38, [#allocation9], 128, 128, 8
    $region21: #{tpu_custom_call.1} parent=1 // pred_fallthru
      _
    // Predicated region
    $region22: #{tpu_custom_call.1} parent=1 // pred_check
      _
    $region23: #{tpu_custom_call.1} parent=1 // pred_check_branch
      %45 = sbr.rel (0) target = $region25
    $region24: #{tpu_custom_call.1} parent=1 // pred_region
      _
    $region25: #{tpu_custom_call.1} parent=1 // pred_fallthru
      _
    // Predicated region
    $region26: #{tpu_custom_call.1} parent=1 // pred_check
      _
    $region27: #{tpu_custom_call.1} parent=1 // pred_check_branch
      %47 = sbr.rel (0) target = $region29
    $region28: #{tpu_custom_call.1} parent=1 // pred_region
      %48 = dma.done [#allocation6], 8192
    $region29: #{tpu_custom_call.1} parent=1 // pred_fallthru
      _
    // Predicated region
    $region30: #{tpu_custom_call.1} parent=1 // pred_check
      _
    $region31: #{tpu_custom_call.1} parent=1 // pred_check_branch
      %50 = sbr.rel (0) target = $region33
    $region32: #{tpu_custom_call.1} parent=1 // pred_region
      %51 = dma.done [#allocation9], 2048
    $region33: #{tpu_custom_call.1} parent=1 // pred_fallthru
      _
    %p52 = scmp.eq.s32.totalorder 0, 0
    // Predicated region
    $region34: #{tpu_custom_call.1} parent=1 // pred_check
      %p53 = pneg %p52
    $region35: #{tpu_custom_call.1} parent=1 // pred_check_branch
      %55 = sbr.rel (%p53) target = $region37
    $region36: #{tpu_custom_call.1} parent=1 // pred_region
      %56 = vst [vmem:[#allocation2] sm:$0xff] 0.0
      %57 = vst [vmem:[#allocation3] sm:$0xff] 0.0
    $region37: #{tpu_custom_call.1} parent=1 // pred_fallthru
      _
    %v58 = vld [vmem:[%s0] sm:$0xff]
    %v59 = vld [vmem:[%s0 + $0x8] sm:$0xff]
    %v60 = vld [vmem:[%s0 + $0x10] sm:$0xff]
    %v61 = vld [vmem:[%s0 + $0x18] sm:$0xff]
    %v62 = vld [vmem:[%s0 + $0x20] sm:$0xff]
    %v63 = vld [vmem:[%s0 + $0x28] sm:$0xff]
    %v64 = vld [vmem:[%s0 + $0x30] sm:$0xff]
    %v65 = vld [vmem:[%s0 + $0x38] sm:$0xff]
    %v66 = vld [vmem:[%s1] sm:$0xff]
    %v67 = vld [vmem:[%s1 + $0x8] sm:$0xff]
    %v68 = vld [vmem:[%s1 + $0x10] sm:$0xff]
    %v69 = vld [vmem:[%s1 + $0x18] sm:$0xff]
    %v70 = vld [vmem:[%s1 + $0x20] sm:$0xff]
    %v71 = vld [vmem:[%s1 + $0x28] sm:$0xff]
    %v72 = vld [vmem:[%s1 + $0x30] sm:$0xff]
    %v73 = vld [vmem:[%s1 + $0x38] sm:$0xff]
    %v74 = vld [vmem:[%s3] sm:$0xf]
    %v76 = vlaneseq
    %v77 = vshrl.u32 %v76, 7
    %v78 = vsub.s32 0, %v77
    %v79 = vrot.slane %v74, %v78
    %v80 = vlaneseq
    %v81 = vshrl.u32 %v80, 7
    %v82 = vsub.s32 1, %v81
    %v83 = vrot.slane %v74, %v82
    %v84 = vlaneseq
    %v85 = vshrl.u32 %v84, 7
    %v86 = vsub.s32 2, %v85
    %v87 = vrot.slane %v74, %v86
    %v88 = vlaneseq
    %v89 = vshrl.u32 %v88, 7
    %v90 = vsub.s32 3, %v89
    %v91 = vrot.slane %v74, %v90
    %vm96 = vcmask 130048
    %v98 = vsel %vm96, %v58, 0
    %v101 = vsel %vm96, %v59, 0
    %v104 = vsel %vm96, %v60, 0
    %v107 = vsel %vm96, %v61, 0
    %v110 = vsel %vm96, %v62, 0
    %v113 = vsel %vm96, %v63, 0
    %v116 = vsel %vm96, %v64, 0
    %v119 = vsel %vm96, %v65, 0
    %121 = vmatprep.subr.mxu0 0.0
    %122 = vmatpush1.msra.mxu0 0.0
    %123 = vmatprep.subr.mxu0 0.0
    %124 = vmatpush1.msra.mxu0 0.0
    %125 = vmatprep.subr.mxu0 0.0
    %126 = vmatpush1.msra.mxu0 0.0
    %127 = vmatprep.subr.mxu0 0.0
    %128 = vmatpush1.msra.mxu0 0.0
    %129 = vmatprep.subr.mxu0 0.0
    %130 = vmatpush1.msra.mxu0 0.0
    %131 = vmatprep.subr.mxu0 0.0
    %132 = vmatpush1.msra.mxu0 0.0
    %133 = vmatprep.subr.mxu0 0.0
    %134 = vmatpush1.msra.mxu0 0.0
    %135 = vmatprep.subr.mxu0 0.0
    %136 = vmatpush1.msra.mxu0 0.0
    %137 = vmatprep.subr.mxu0 0.0
    %138 = vmatpush1.msra.mxu0 0.0
    %139 = vmatprep.subr.mxu0 0.0
    %140 = vmatpush1.msra.mxu0 0.0
    %141 = vmatprep.subr.mxu0 0.0
    %142 = vmatpush1.msra.mxu0 0.0
    %143 = vmatprep.subr.mxu0 0.0
    %144 = vmatpush1.msra.mxu0 0.0
    %145 = vmatprep.subr.mxu0 0.0
    %146 = vmatpush1.msra.mxu0 0.0
    %147 = vmatprep.subr.mxu0 0.0
    %148 = vmatpush1.msra.mxu0 0.0
    %149 = vmatprep.subr.mxu0 %v71
    %150 = vmatpush1.msra.mxu0 %v70
    %151 = vmatprep.subr.mxu0 %v67
    %152 = vmatpush1.msra.mxu0 %v66
    %153 = vmatprep.subr.mxu0 0.0
    %154 = vmatpush2.msra.mxu0 0.0
    %155 = vmatprep.subr.mxu0 0.0
    %156 = vmatpush2.msra.mxu0 0.0
    %157 = vmatprep.subr.mxu0 0.0
    %158 = vmatpush2.msra.mxu0 0.0
    %159 = vmatprep.subr.mxu0 0.0
    %160 = vmatpush2.msra.mxu0 0.0
    %161 = vmatprep.subr.mxu0 0.0
    %162 = vmatpush2.msra.mxu0 0.0
    %163 = vmatprep.subr.mxu0 0.0
    %164 = vmatpush2.msra.mxu0 0.0
    %165 = vmatprep.subr.mxu0 0.0
    %166 = vmatpush2.msra.mxu0 0.0
    %167 = vmatprep.subr.mxu0 0.0
    %168 = vmatpush2.msra.mxu0 0.0
    %169 = vmatprep.subr.mxu0 0.0
    %170 = vmatpush2.msra.mxu0 0.0
    %171 = vmatprep.subr.mxu0 0.0
    %172 = vmatpush2.msra.mxu0 0.0
    %173 = vmatprep.subr.mxu0 0.0
    %174 = vmatpush2.msra.mxu0 0.0
    %175 = vmatprep.subr.mxu0 0.0
    %176 = vmatpush2.msra.mxu0 0.0
    %177 = vmatprep.subr.mxu0 0.0
    %178 = vmatpush2.msra.mxu0 0.0
    %179 = vmatprep.subr.mxu0 0.0
    %180 = vmatpush2.msra.mxu0 0.0
    %181 = vmatprep.subr.mxu0 0.0
    %182 = vmatpush2.msra.mxu0 0.0
    %183 = vmatprep.subr.mxu0 0.0
    %184 = vmatpush2.msra.mxu0 0.0
    %185 = vmatprep.mubr.f32.mxu0 0.0
    %186 = vmatmul.mubr.f32.gmra.mxu0 %v98
    %v187 = vpop.f32.mrf.mxu0
    %v188 = vadd.f32 %v79, %v187
    %v189 = vpop.f32.mrf.mxu0
    %v190 = vadd.f32 %v83, %v189
    %191 = vmatprep.mubr.f32.mxu0 0.0
    %192 = vmatmul.mubr.f32.gmra.mxu0 %v101
    %v193 = vpop.f32.mrf.mxu0
    %v194 = vadd.f32 %v79, %v193
    %v195 = vpop.f32.mrf.mxu0
    %v196 = vadd.f32 %v83, %v195
    %197 = vmatprep.mubr.f32.mxu0 0.0
    %198 = vmatmul.mubr.f32.gmra.mxu0 %v104
    %v199 = vpop.f32.mrf.mxu0
    %v200 = vadd.f32 %v79, %v199
    %v201 = vpop.f32.mrf.mxu0
    %v202 = vadd.f32 %v83, %v201
    %203 = vmatprep.mubr.f32.mxu0 0.0
    %204 = vmatmul.mubr.f32.gmra.mxu0 %v107
    %v205 = vpop.f32.mrf.mxu0
    %v206 = vadd.f32 %v79, %v205
    %v207 = vpop.f32.mrf.mxu0
    %v208 = vadd.f32 %v83, %v207
    %209 = vmatprep.mubr.f32.mxu0 0.0
    %210 = vmatmul.mubr.f32.gmra.mxu0 %v110
    %v211 = vpop.f32.mrf.mxu0
    %v212 = vadd.f32 %v79, %v211
    %v213 = vpop.f32.mrf.mxu0
    %v214 = vadd.f32 %v83, %v213
    %215 = vmatprep.mubr.f32.mxu0 0.0
    %216 = vmatmul.mubr.f32.gmra.mxu0 %v113
    %v217 = vpop.f32.mrf.mxu0
    %v218 = vadd.f32 %v79, %v217
    %v219 = vpop.f32.mrf.mxu0
    %v220 = vadd.f32 %v83, %v219
    %221 = vmatprep.mubr.f32.mxu0 0.0
    %222 = vmatmul.mubr.f32.gmra.mxu0 %v116
    %v223 = vpop.f32.mrf.mxu0
    %v224 = vadd.f32 %v79, %v223
    %v225 = vpop.f32.mrf.mxu0
    %v226 = vadd.f32 %v83, %v225
    %227 = vmatprep.mubr.f32.mxu0 0.0
    %228 = vmatmul.mubr.f32.gmra.mxu0 %v119
    %v229 = vpop.f32.mrf.mxu0
    %v230 = vadd.f32 %v79, %v229
    %v231 = vpop.f32.mrf.mxu0
    %v232 = vadd.f32 %v83, %v231
    %233 = vdwg.mxu0
    %234 = vmatprep.subr.mxu0 0.0
    %235 = vmatpush1.msra.mxu0 0.0
    %236 = vmatprep.subr.mxu0 0.0
    %237 = vmatpush1.msra.mxu0 0.0
    %238 = vmatprep.subr.mxu0 0.0
    %239 = vmatpush1.msra.mxu0 0.0
    %240 = vmatprep.subr.mxu0 0.0
    %241 = vmatpush1.msra.mxu0 0.0
    %242 = vmatprep.subr.mxu0 0.0
    %243 = vmatpush1.msra.mxu0 0.0
    %244 = vmatprep.subr.mxu0 0.0
    %245 = vmatpush1.msra.mxu0 0.0
    %246 = vmatprep.subr.mxu0 0.0
    %247 = vmatpush1.msra.mxu0 0.0
    %248 = vmatprep.subr.mxu0 0.0
    %249 = vmatpush1.msra.mxu0 0.0
    %250 = vmatprep.subr.mxu0 0.0
    %251 = vmatpush1.msra.mxu0 0.0
    %252 = vmatprep.subr.mxu0 0.0
    %253 = vmatpush1.msra.mxu0 0.0
    %254 = vmatprep.subr.mxu0 0.0
    %255 = vmatpush1.msra.mxu0 0.0
    %256 = vmatprep.subr.mxu0 0.0
    %257 = vmatpush1.msra.mxu0 0.0
    %258 = vmatprep.subr.mxu0 0.0
    %259 = vmatpush1.msra.mxu0 0.0
    %260 = vmatprep.subr.mxu0 0.0
    %261 = vmatpush1.msra.mxu0 0.0
    %262 = vmatprep.subr.mxu0 %v73
    %263 = vmatpush1.msra.mxu0 %v72
    %264 = vmatprep.subr.mxu0 %v69
    %265 = vmatpush1.msra.mxu0 %v68
    %266 = vmatprep.subr.mxu0 0.0
    %267 = vmatpush2.msra.mxu0 0.0
    %268 = vmatprep.subr.mxu0 0.0
    %269 = vmatpush2.msra.mxu0 0.0
    %270 = vmatprep.subr.mxu0 0.0
    %271 = vmatpush2.msra.mxu0 0.0
    %272 = vmatprep.subr.mxu0 0.0
    %273 = vmatpush2.msra.mxu0 0.0
    %274 = vmatprep.subr.mxu0 0.0
    %275 = vmatpush2.msra.mxu0 0.0
    %276 = vmatprep.subr.mxu0 0.0
    %277 = vmatpush2.msra.mxu0 0.0
    %278 = vmatprep.subr.mxu0 0.0
    %279 = vmatpush2.msra.mxu0 0.0
    %280 = vmatprep.subr.mxu0 0.0
    %281 = vmatpush2.msra.mxu0 0.0
    %282 = vmatprep.subr.mxu0 0.0
    %283 = vmatpush2.msra.mxu0 0.0
    %284 = vmatprep.subr.mxu0 0.0
    %285 = vmatpush2.msra.mxu0 0.0
    %286 = vmatprep.subr.mxu0 0.0
    %287 = vmatpush2.msra.mxu0 0.0
    %288 = vmatprep.subr.mxu0 0.0
    %289 = vmatpush2.msra.mxu0 0.0
    %290 = vmatprep.subr.mxu0 0.0
    %291 = vmatpush2.msra.mxu0 0.0
    %292 = vmatprep.subr.mxu0 0.0
    %293 = vmatpush2.msra.mxu0 0.0
    %294 = vmatprep.subr.mxu0 0.0
    %295 = vmatpush2.msra.mxu0 0.0
    %296 = vmatprep.subr.mxu0 0.0
    %297 = vmatpush2.msra.mxu0 0.0
    %298 = vmatprep.mubr.f32.mxu0 0.0
    %299 = vmatmul.mubr.f32.gmra.mxu0 %v98
    %v300 = vpop.f32.mrf.mxu0
    %v301 = vadd.f32 %v87, %v300
    %v302 = vpop.f32.mrf.mxu0
    %v303 = vadd.f32 %v91, %v302
    %304 = vmatprep.mubr.f32.mxu0 0.0
    %305 = vmatmul.mubr.f32.gmra.mxu0 %v101
    %v306 = vpop.f32.mrf.mxu0
    %v307 = vadd.f32 %v87, %v306
    %v308 = vpop.f32.mrf.mxu0
    %v309 = vadd.f32 %v91, %v308
    %310 = vmatprep.mubr.f32.mxu0 0.0
    %311 = vmatmul.mubr.f32.gmra.mxu0 %v104
    %v312 = vpop.f32.mrf.mxu0
    %v313 = vadd.f32 %v87, %v312
    %v314 = vpop.f32.mrf.mxu0
    %v315 = vadd.f32 %v91, %v314
    %316 = vmatprep.mubr.f32.mxu0 0.0
    %317 = vmatmul.mubr.f32.gmra.mxu0 %v107
    %v318 = vpop.f32.mrf.mxu0
    %v319 = vadd.f32 %v87, %v318
    %v320 = vpop.f32.mrf.mxu0
    %v321 = vadd.f32 %v91, %v320
    %322 = vmatprep.mubr.f32.mxu0 0.0
    %323 = vmatmul.mubr.f32.gmra.mxu0 %v110
    %v324 = vpop.f32.mrf.mxu0
    %v325 = vadd.f32 %v87, %v324
    %v326 = vpop.f32.mrf.mxu0
    %v327 = vadd.f32 %v91, %v326
    %328 = vmatprep.mubr.f32.mxu0 0.0
    %329 = vmatmul.mubr.f32.gmra.mxu0 %v113
    %v330 = vpop.f32.mrf.mxu0
    %v331 = vadd.f32 %v87, %v330
    %v332 = vpop.f32.mrf.mxu0
    %v333 = vadd.f32 %v91, %v332
    %334 = vmatprep.mubr.f32.mxu0 0.0
    %335 = vmatmul.mubr.f32.gmra.mxu0 %v116
    %v336 = vpop.f32.mrf.mxu0
    %v337 = vadd.f32 %v87, %v336
    %v338 = vpop.f32.mrf.mxu0
    %v339 = vadd.f32 %v91, %v338
    %340 = vmatprep.mubr.f32.mxu0 0.0
    %341 = vmatmul.mubr.f32.gmra.mxu0 %v119
    %v342 = vpop.f32.mrf.mxu0
    %v343 = vadd.f32 %v87, %v342
    %v344 = vpop.f32.mrf.mxu0
    %v345 = vadd.f32 %v91, %v344
    %346 = vdwg.mxu0
    %347 = vst [vmem:[#allocation4] sm:$0xff] %v188
    %348 = vst [vmem:[#allocation4 + $0x8] sm:$0xff] %v190
    %349 = vst [vmem:[#allocation4 + $0x10] sm:$0xff] %v301
    %350 = vst [vmem:[#allocation4 + $0x18] sm:$0xff] %v303
    %351 = vst [vmem:[#allocation4 + $0x20] sm:$0xff] %v194
    %352 = vst [vmem:[#allocation4 + $0x28] sm:$0xff] %v196
    %353 = vst [vmem:[#allocation4 + $0x30] sm:$0xff] %v307
    %354 = vst [vmem:[#allocation4 + $0x38] sm:$0xff] %v309
    %355 = vst [vmem:[#allocation4 + $0x40] sm:$0xff] %v200
    %356 = vst [vmem:[#allocation4 + $0x48] sm:$0xff] %v202
    %357 = vst [vmem:[#allocation4 + $0x50] sm:$0xff] %v313
    %358 = vst [vmem:[#allocation4 + $0x58] sm:$0xff] %v315
    %359 = vst [vmem:[#allocation4 + $0x60] sm:$0xff] %v206
    %360 = vst [vmem:[#allocation4 + $0x68] sm:$0xff] %v208
    %361 = vst [vmem:[#allocation4 + $0x70] sm:$0xff] %v319
    %362 = vst [vmem:[#allocation4 + $0x78] sm:$0xff] %v321
    %363 = vst [vmem:[#allocation4 + $0x80] sm:$0xff] %v212
    %364 = vst [vmem:[#allocation4 + $0x88] sm:$0xff] %v214
    %365 = vst [vmem:[#allocation4 + $0x90] sm:$0xff] %v325
    %366 = vst [vmem:[#allocation4 + $0x98] sm:$0xff] %v327
    %367 = vst [vmem:[#allocation4 + $0xa0] sm:$0xff] %v218
    %368 = vst [vmem:[#allocation4 + $0xa8] sm:$0xff] %v220
    %369 = vst [vmem:[#allocation4 + $0xb0] sm:$0xff] %v331
    %370 = vst [vmem:[#allocation4 + $0xb8] sm:$0xff] %v333
    %371 = vst [vmem:[#allocation4 + $0xc0] sm:$0xff] %v224
    %372 = vst [vmem:[#allocation4 + $0xc8] sm:$0xff] %v226
    %373 = vst [vmem:[#allocation4 + $0xd0] sm:$0xff] %v337
    %374 = vst [vmem:[#allocation4 + $0xd8] sm:$0xff] %v339
    %375 = vst [vmem:[#allocation4 + $0xe0] sm:$0xff] %v230
    %376 = vst [vmem:[#allocation4 + $0xe8] sm:$0xff] %v232
    %377 = vst [vmem:[#allocation4 + $0xf0] sm:$0xff] %v343
    %378 = vst [vmem:[#allocation4 + $0xf8] sm:$0xff] %v345
    %v379 = vld [vmem:[#allocation2] sm:$0xff]
    %v380 = vld [vmem:[#allocation3] sm:$0xff]
    %s381 = smul.u32 0, 4
    %s382 = smul.addr %s381, 8
    %s383 = scalar_lea.vmem [#allocation4], %s382
    %v384 = vld [vmem:[%s383] sm:$0xff]
    %v385 = vld [vmem:[%s383 + $0x8] sm:$0xff]
    %v386 = vld [vmem:[%s383 + $0x10] sm:$0xff]
    %v387 = vld [vmem:[%s383 + $0x18] sm:$0xff]
    %v388 = vld [vmem:[#allocation5] sm:$0xff]
    %v389 = vld [vmem:[#allocation5 + $0x8] sm:$0xff]
    %v390 = vld [vmem:[#allocation5 + $0x10] sm:$0xff]
    %v391 = vld [vmem:[#allocation5 + $0x18] sm:$0xff]
    %v392 = vld [vmem:[#allocation5 + $0x20] sm:$0xff]
    %v393 = vld [vmem:[#allocation5 + $0x28] sm:$0xff]
    %v394 = vld [vmem:[#allocation5 + $0x30] sm:$0xff]
    %v395 = vld [vmem:[#allocation5 + $0x38] sm:$0xff]
    %v396 = vld [vmem:[#allocation5 + $0x40] sm:$0xff]
    %v397 = vld [vmem:[#allocation5 + $0x48] sm:$0xff]
    %v398 = vld [vmem:[#allocation5 + $0x50] sm:$0xff]
    %v399 = vld [vmem:[#allocation5 + $0x58] sm:$0xff]
    %v400 = vld [vmem:[#allocation5 + $0x60] sm:$0xff]
    %v401 = vld [vmem:[#allocation5 + $0x68] sm:$0xff]
    %v402 = vld [vmem:[#allocation5 + $0x70] sm:$0xff]
    %v403 = vld [vmem:[#allocation5 + $0x78] sm:$0xff]
    %v404 = vld [vmem:[#allocation5 + $0x80] sm:$0xff]
    %v405 = vld [vmem:[#allocation5 + $0x88] sm:$0xff]
    %v406 = vld [vmem:[#allocation5 + $0x90] sm:$0xff]
    %v407 = vld [vmem:[#allocation5 + $0x98] sm:$0xff]
    %v408 = vld [vmem:[#allocation5 + $0xa0] sm:$0xff]
    %v409 = vld [vmem:[#allocation5 + $0xa8] sm:$0xff]
    %v410 = vld [vmem:[#allocation5 + $0xb0] sm:$0xff]
    %v411 = vld [vmem:[#allocation5 + $0xb8] sm:$0xff]
    %v412 = vld [vmem:[#allocation5 + $0xc0] sm:$0xff]
    %v413 = vld [vmem:[#allocation5 + $0xc8] sm:$0xff]
    %v414 = vld [vmem:[#allocation5 + $0xd0] sm:$0xff]
    %v415 = vld [vmem:[#allocation5 + $0xd8] sm:$0xff]
    %v416 = vld [vmem:[#allocation5 + $0xe0] sm:$0xff]
    %v417 = vld [vmem:[#allocation5 + $0xe8] sm:$0xff]
    %v418 = vld [vmem:[#allocation5 + $0xf0] sm:$0xff]
    %v419 = vld [vmem:[#allocation5 + $0xf8] sm:$0xff]
    %v420 = vld [vmem:[#allocation5 + $0x100] sm:$0xff]
    %v421 = vld [vmem:[#allocation5 + $0x108] sm:$0xff]
    %v422 = vld [vmem:[#allocation5 + $0x110] sm:$0xff]
    %v423 = vld [vmem:[#allocation5 + $0x118] sm:$0xff]
    %v424 = vld [vmem:[#allocation5 + $0x120] sm:$0xff]
    %v425 = vld [vmem:[#allocation5 + $0x128] sm:$0xff]
    %v426 = vld [vmem:[#allocation5 + $0x130] sm:$0xff]
    %v427 = vld [vmem:[#allocation5 + $0x138] sm:$0xff]
    %v428 = vld [vmem:[#allocation5 + $0x140] sm:$0xff]
    %v429 = vld [vmem:[#allocation5 + $0x148] sm:$0xff]
    %v430 = vld [vmem:[#allocation5 + $0x150] sm:$0xff]
    %v431 = vld [vmem:[#allocation5 + $0x158] sm:$0xff]
    %v432 = vld [vmem:[#allocation5 + $0x160] sm:$0xff]
    %v433 = vld [vmem:[#allocation5 + $0x168] sm:$0xff]
    %v434 = vld [vmem:[#allocation5 + $0x170] sm:$0xff]
    %v435 = vld [vmem:[#allocation5 + $0x178] sm:$0xff]
    %v436 = vld [vmem:[#allocation5 + $0x180] sm:$0xff]
    %v437 = vld [vmem:[#allocation5 + $0x188] sm:$0xff]
    %v438 = vld [vmem:[#allocation5 + $0x190] sm:$0xff]
    %v439 = vld [vmem:[#allocation5 + $0x198] sm:$0xff]
    %v440 = vld [vmem:[#allocation5 + $0x1a0] sm:$0xff]
    %v441 = vld [vmem:[#allocation5 + $0x1a8] sm:$0xff]
    %v442 = vld [vmem:[#allocation5 + $0x1b0] sm:$0xff]
    %v443 = vld [vmem:[#allocation5 + $0x1b8] sm:$0xff]
    %v444 = vld [vmem:[#allocation5 + $0x1c0] sm:$0xff]
    %v445 = vld [vmem:[#allocation5 + $0x1c8] sm:$0xff]
    %v446 = vld [vmem:[#allocation5 + $0x1d0] sm:$0xff]
    %v447 = vld [vmem:[#allocation5 + $0x1d8] sm:$0xff]
    %v448 = vld [vmem:[#allocation5 + $0x1e0] sm:$0xff]
    %v449 = vld [vmem:[#allocation5 + $0x1e8] sm:$0xff]
    %v450 = vld [vmem:[#allocation5 + $0x1f0] sm:$0xff]
    %v451 = vld [vmem:[#allocation5 + $0x1f8] sm:$0xff]
    %452 = vmatprep.subr.mxu0 %v449
    %453 = vmatpush1.msra.mxu0 %v448
    %454 = vmatprep.subr.mxu0 %v445
    %455 = vmatpush1.msra.mxu0 %v444
    %456 = vmatprep.subr.mxu0 %v441
    %457 = vmatpush1.msra.mxu0 %v440
    %458 = vmatprep.subr.mxu0 %v437
    %459 = vmatpush1.msra.mxu0 %v436
    %460 = vmatprep.subr.mxu0 %v433
    %461 = vmatpush1.msra.mxu0 %v432
    %462 = vmatprep.subr.mxu0 %v429
    %463 = vmatpush1.msra.mxu0 %v428
    %464 = vmatprep.subr.mxu0 %v425
    %465 = vmatpush1.msra.mxu0 %v424
    %466 = vmatprep.subr.mxu0 %v421
    %467 = vmatpush1.msra.mxu0 %v420
    %468 = vmatprep.subr.mxu0 %v417
    %469 = vmatpush1.msra.mxu0 %v416
    %470 = vmatprep.subr.mxu0 %v413
    %471 = vmatpush1.msra.mxu0 %v412
    %472 = vmatprep.subr.mxu0 %v409
    %473 = vmatpush1.msra.mxu0 %v408
    %474 = vmatprep.subr.mxu0 %v405
    %475 = vmatpush1.msra.mxu0 %v404
    %476 = vmatprep.subr.mxu0 %v401
    %477 = vmatpush1.msra.mxu0 %v400
    %478 = vmatprep.subr.mxu0 %v397
    %479 = vmatpush1.msra.mxu0 %v396
    %480 = vmatprep.subr.mxu0 %v393
    %481 = vmatpush1.msra.mxu0 %v392
    %482 = vmatprep.subr.mxu0 %v389
    %483 = vmatpush1.msra.mxu0 %v388
    %484 = vmatprep.subr.mxu0 0.0
    %485 = vmatpush2.msra.mxu0 0.0
    %486 = vmatprep.subr.mxu0 0.0
    %487 = vmatpush2.msra.mxu0 0.0
    %488 = vmatprep.subr.mxu0 0.0
    %489 = vmatpush2.msra.mxu0 0.0
    %490 = vmatprep.subr.mxu0 0.0
    %491 = vmatpush2.msra.mxu0 0.0
    %492 = vmatprep.subr.mxu0 0.0
    %493 = vmatpush2.msra.mxu0 0.0
    %494 = vmatprep.subr.mxu0 0.0
    %495 = vmatpush2.msra.mxu0 0.0
    %496 = vmatprep.subr.mxu0 0.0
    %497 = vmatpush2.msra.mxu0 0.0
    %498 = vmatprep.subr.mxu0 0.0
    %499 = vmatpush2.msra.mxu0 0.0
    %500 = vmatprep.subr.mxu0 0.0
    %501 = vmatpush2.msra.mxu0 0.0
    %502 = vmatprep.subr.mxu0 0.0
    %503 = vmatpush2.msra.mxu0 0.0
    %504 = vmatprep.subr.mxu0 0.0
    %505 = vmatpush2.msra.mxu0 0.0
    %506 = vmatprep.subr.mxu0 0.0
    %507 = vmatpush2.msra.mxu0 0.0
    %508 = vmatprep.subr.mxu0 0.0
    %509 = vmatpush2.msra.mxu0 0.0
    %510 = vmatprep.subr.mxu0 0.0
    %511 = vmatpush2.msra.mxu0 0.0
    %512 = vmatprep.subr.mxu0 0.0
    %513 = vmatpush2.msra.mxu0 0.0
    %514 = vmatprep.subr.mxu0 0.0
    %515 = vmatpush2.msra.mxu0 0.0
    %516 = vmatprep.mubr.f32.mxu0 0.0
    %517 = vmatmul.mubr.f32.gmra.mxu0 %v379
    %v518 = vpop.f32.mrf.mxu0
    %v519 = vadd.f32 0.0, %v518
    %v520 = vpop.f32.mrf.mxu0
    %v521 = vadd.f32 0.0, %v520
    %522 = vdwg.mxu0
    %523 = vmatprep.subr.mxu0 %v451
    %524 = vmatpush1.msra.mxu0 %v450
    %525 = vmatprep.subr.mxu0 %v447
    %526 = vmatpush1.msra.mxu0 %v446
    %527 = vmatprep.subr.mxu0 %v443
    %528 = vmatpush1.msra.mxu0 %v442
    %529 = vmatprep.subr.mxu0 %v439
    %530 = vmatpush1.msra.mxu0 %v438
    %531 = vmatprep.subr.mxu0 %v435
    %532 = vmatpush1.msra.mxu0 %v434
    %533 = vmatprep.subr.mxu0 %v431
    %534 = vmatpush1.msra.mxu0 %v430
    %535 = vmatprep.subr.mxu0 %v427
    %536 = vmatpush1.msra.mxu0 %v426
    %537 = vmatprep.subr.mxu0 %v423
    %538 = vmatpush1.msra.mxu0 %v422
    %539 = vmatprep.subr.mxu0 %v419
    %540 = vmatpush1.msra.mxu0 %v418
    %541 = vmatprep.subr.mxu0 %v415
    %542 = vmatpush1.msra.mxu0 %v414
    %543 = vmatprep.subr.mxu0 %v411
    %544 = vmatpush1.msra.mxu0 %v410
    %545 = vmatprep.subr.mxu0 %v407
    %546 = vmatpush1.msra.mxu0 %v406
    %547 = vmatprep.subr.mxu0 %v403
    %548 = vmatpush1.msra.mxu0 %v402
    %549 = vmatprep.subr.mxu0 %v399
    %550 = vmatpush1.msra.mxu0 %v398
    %551 = vmatprep.subr.mxu0 %v395
    %552 = vmatpush1.msra.mxu0 %v394
    %553 = vmatprep.subr.mxu0 %v391
    %554 = vmatpush1.msra.mxu0 %v390
    %555 = vmatprep.subr.mxu0 0.0
    %556 = vmatpush2.msra.mxu0 0.0
    %557 = vmatprep.subr.mxu0 0.0
    %558 = vmatpush2.msra.mxu0 0.0
    %559 = vmatprep.subr.mxu0 0.0
    %560 = vmatpush2.msra.mxu0 0.0
    %561 = vmatprep.subr.mxu0 0.0
    %562 = vmatpush2.msra.mxu0 0.0
    %563 = vmatprep.subr.mxu0 0.0
    %564 = vmatpush2.msra.mxu0 0.0
    %565 = vmatprep.subr.mxu0 0.0
    %566 = vmatpush2.msra.mxu0 0.0
    %567 = vmatprep.subr.mxu0 0.0
    %568 = vmatpush2.msra.mxu0 0.0
    %569 = vmatprep.subr.mxu0 0.0
    %570 = vmatpush2.msra.mxu0 0.0
    %571 = vmatprep.subr.mxu0 0.0
    %572 = vmatpush2.msra.mxu0 0.0
    %573 = vmatprep.subr.mxu0 0.0
    %574 = vmatpush2.msra.mxu0 0.0
    %575 = vmatprep.subr.mxu0 0.0
    %576 = vmatpush2.msra.mxu0 0.0
    %577 = vmatprep.subr.mxu0 0.0
    %578 = vmatpush2.msra.mxu0 0.0
    %579 = vmatprep.subr.mxu0 0.0
    %580 = vmatpush2.msra.mxu0 0.0
    %581 = vmatprep.subr.mxu0 0.0
    %582 = vmatpush2.msra.mxu0 0.0
    %583 = vmatprep.subr.mxu0 0.0
    %584 = vmatpush2.msra.mxu0 0.0
    %585 = vmatprep.subr.mxu0 0.0
    %586 = vmatpush2.msra.mxu0 0.0
    %587 = vmatprep.mubr.f32.mxu0 0.0
    %588 = vmatmul.mubr.f32.gmra.mxu0 %v379
    %v589 = vpop.f32.mrf.mxu0
    %v590 = vadd.f32 0.0, %v589
    %v591 = vpop.f32.mrf.mxu0
    %v592 = vadd.f32 0.0, %v591
    %593 = vdwg.mxu0
    %v594 = vadd.f32 %v384, %v519
    %v595 = vadd.f32 %v385, %v521
    %v596 = vadd.f32 %v386, %v590
    %v597 = vadd.f32 %v387, %v592
    %v598 = vmul.f32 %v594, 0.5
    %v599 = vtanh.pop %v598
    %v600 = vmul.f32 %v599, 0.5
    %v601 = vadd.f32 %v600, 0.5
    %v602 = vmul.f32 %v595, 0.5
    %v603 = vtanh.pop %v602
    %v604 = vmul.f32 %v603, 0.5
    %v605 = vadd.f32 %v604, 0.5
    %v606 = vtanh.pop %v596
    %v607 = vmul.f32 %v597, 0.5
    %v608 = vtanh.pop %v607
    %v609 = vmul.f32 %v608, 0.5
    %v610 = vadd.f32 %v609, 0.5
    %v611 = vmul.f32 %v605, %v380
    %v612 = vmul.f32 %v601, %v606
    %v613 = vadd.f32 %v611, %v612
    %v614 = vtanh.pop %v613
    %v615 = vmul.f32 %v610, %v614
    %s616 = smul.u32 1, 4
    %s617 = smul.addr %s616, 8
    %s618 = scalar_lea.vmem [#allocation4], %s617
    %v619 = vld [vmem:[%s618] sm:$0xff]
    %v620 = vld [vmem:[%s618 + $0x8] sm:$0xff]
    %v621 = vld [vmem:[%s618 + $0x10] sm:$0xff]
    %v622 = vld [vmem:[%s618 + $0x18] sm:$0xff]
    %623 = vmatprep.subr.mxu0 %v449
    %624 = vmatpush1.msra.mxu0 %v448
    %625 = vmatprep.subr.mxu0 %v445
    %626 = vmatpush1.msra.mxu0 %v444
    %627 = vmatprep.subr.mxu0 %v441
    %628 = vmatpush1.msra.mxu0 %v440
    %629 = vmatprep.subr.mxu0 %v437
    %630 = vmatpush1.msra.mxu0 %v436
    %631 = vmatprep.subr.mxu0 %v433
    %632 = vmatpush1.msra.mxu0 %v432
    %633 = vmatprep.subr.mxu0 %v429
    %634 = vmatpush1.msra.mxu0 %v428
    %635 = vmatprep.subr.mxu0 %v425
    %636 = vmatpush1.msra.mxu0 %v424
    %637 = vmatprep.subr.mxu0 %v421
    %638 = vmatpush1.msra.mxu0 %v420
    %639 = vmatprep.subr.mxu0 %v417
    %640 = vmatpush1.msra.mxu0 %v416
    %641 = vmatprep.subr.mxu0 %v413
    %642 = vmatpush1.msra.mxu0 %v412
    %643 = vmatprep.subr.mxu0 %v409
    %644 = vmatpush1.msra.mxu0 %v408
    %645 = vmatprep.subr.mxu0 %v405
    %646 = vmatpush1.msra.mxu0 %v404
    %647 = vmatprep.subr.mxu0 %v401
    %648 = vmatpush1.msra.mxu0 %v400
    %649 = vmatprep.subr.mxu0 %v397
    %650 = vmatpush1.msra.mxu0 %v396
    %651 = vmatprep.subr.mxu0 %v393
    %652 = vmatpush1.msra.mxu0 %v392
    %653 = vmatprep.subr.mxu0 %v389
    %654 = vmatpush1.msra.mxu0 %v388
    %655 = vmatprep.subr.mxu0 0.0
    %656 = vmatpush2.msra.mxu0 0.0
    %657 = vmatprep.subr.mxu0 0.0
    %658 = vmatpush2.msra.mxu0 0.0
    %659 = vmatprep.subr.mxu0 0.0
    %660 = vmatpush2.msra.mxu0 0.0
    %661 = vmatprep.subr.mxu0 0.0
    %662 = vmatpush2.msra.mxu0 0.0
    %663 = vmatprep.subr.mxu0 0.0
    %664 = vmatpush2.msra.mxu0 0.0
    %665 = vmatprep.subr.mxu0 0.0
    %666 = vmatpush2.msra.mxu0 0.0
    %667 = vmatprep.subr.mxu0 0.0
    %668 = vmatpush2.msra.mxu0 0.0
    %669 = vmatprep.subr.mxu0 0.0
    %670 = vmatpush2.msra.mxu0 0.0
    %671 = vmatprep.subr.mxu0 0.0
    %672 = vmatpush2.msra.mxu0 0.0
    %673 = vmatprep.subr.mxu0 0.0
    %674 = vmatpush2.msra.mxu0 0.0
    %675 = vmatprep.subr.mxu0 0.0
    %676 = vmatpush2.msra.mxu0 0.0
    %677 = vmatprep.subr.mxu0 0.0
    %678 = vmatpush2.msra.mxu0 0.0
    %679 = vmatprep.subr.mxu0 0.0
    %680 = vmatpush2.msra.mxu0 0.0
    %681 = vmatprep.subr.mxu0 0.0
    %682 = vmatpush2.msra.mxu0 0.0
    %683 = vmatprep.subr.mxu0 0.0
    %684 = vmatpush2.msra.mxu0 0.0
    %685 = vmatprep.subr.mxu0 0.0
    %686 = vmatpush2.msra.mxu0 0.0
    %687 = vmatprep.mubr.f32.mxu0 0.0
    %688 = vmatmul.mubr.f32.gmra.mxu0 %v615
    %v689 = vpop.f32.mrf.mxu0
    %v690 = vadd.f32 0.0, %v689
    %v691 = vpop.f32.mrf.mxu0
    %v692 = vadd.f32 0.0, %v691
    %693 = vdwg.mxu0
    %694 = vmatprep.subr.mxu0 %v451
    %695 = vmatpush1.msra.mxu0 %v450
    %696 = vmatprep.subr.mxu0 %v447
    %697 = vmatpush1.msra.mxu0 %v446
    %698 = vmatprep.subr.mxu0 %v443
    %699 = vmatpush1.msra.mxu0 %v442
    %700 = vmatprep.subr.mxu0 %v439
    %701 = vmatpush1.msra.mxu0 %v438
    %702 = vmatprep.subr.mxu0 %v435
    %703 = vmatpush1.msra.mxu0 %v434
    %704 = vmatprep.subr.mxu0 %v431
    %705 = vmatpush1.msra.mxu0 %v430
    %706 = vmatprep.subr.mxu0 %v427
    %707 = vmatpush1.msra.mxu0 %v426
    %708 = vmatprep.subr.mxu0 %v423
    %709 = vmatpush1.msra.mxu0 %v422
    %710 = vmatprep.subr.mxu0 %v419
    %711 = vmatpush1.msra.mxu0 %v418
    %712 = vmatprep.subr.mxu0 %v415
    %713 = vmatpush1.msra.mxu0 %v414
    %714 = vmatprep.subr.mxu0 %v411
    %715 = vmatpush1.msra.mxu0 %v410
    %716 = vmatprep.subr.mxu0 %v407
    %717 = vmatpush1.msra.mxu0 %v406
    %718 = vmatprep.subr.mxu0 %v403
    %719 = vmatpush1.msra.mxu0 %v402
    %720 = vmatprep.subr.mxu0 %v399
    %721 = vmatpush1.msra.mxu0 %v398
    %722 = vmatprep.subr.mxu0 %v395
    %723 = vmatpush1.msra.mxu0 %v394
    %724 = vmatprep.subr.mxu0 %v391
    %725 = vmatpush1.msra.mxu0 %v390
    %726 = vmatprep.subr.mxu0 0.0
    %727 = vmatpush2.msra.mxu0 0.0
    %728 = vmatprep.subr.mxu0 0.0
    %729 = vmatpush2.msra.mxu0 0.0
    %730 = vmatprep.subr.mxu0 0.0
    %731 = vmatpush2.msra.mxu0 0.0
    %732 = vmatprep.subr.mxu0 0.0
    %733 = vmatpush2.msra.mxu0 0.0
    %734 = vmatprep.subr.mxu0 0.0
    %735 = vmatpush2.msra.mxu0 0.0
    %736 = vmatprep.subr.mxu0 0.0
    %737 = vmatpush2.msra.mxu0 0.0
    %738 = vmatprep.subr.mxu0 0.0
    %739 = vmatpush2.msra.mxu0 0.0
    %740 = vmatprep.subr.mxu0 0.0
    %741 = vmatpush2.msra.mxu0 0.0
    %742 = vmatprep.subr.mxu0 0.0
    %743 = vmatpush2.msra.mxu0 0.0
    %744 = vmatprep.subr.mxu0 0.0
    %745 = vmatpush2.msra.mxu0 0.0
    %746 = vmatprep.subr.mxu0 0.0
    %747 = vmatpush2.msra.mxu0 0.0
    %748 = vmatprep.subr.mxu0 0.0
    %749 = vmatpush2.msra.mxu0 0.0
    %750 = vmatprep.subr.mxu0 0.0
    %751 = vmatpush2.msra.mxu0 0.0
    %752 = vmatprep.subr.mxu0 0.0
    %753 = vmatpush2.msra.mxu0 0.0
    %754 = vmatprep.subr.mxu0 0.0
    %755 = vmatpush2.msra.mxu0 0.0
    %756 = vmatprep.subr.mxu0 0.0
    %757 = vmatpush2.msra.mxu0 0.0
    %758 = vmatprep.mubr.f32.mxu0 0.0
    %759 = vmatmul.mubr.f32.gmra.mxu0 %v615
    %v760 = vpop.f32.mrf.mxu0
    %v761 = vadd.f32 0.0, %v760
    %v762 = vpop.f32.mrf.mxu0
    %v763 = vadd.f32 0.0, %v762
    %764 = vdwg.mxu0
    %v765 = vadd.f32 %v619, %v690
    %v766 = vadd.f32 %v620, %v692
    %v767 = vadd.f32 %v621, %v761
    %v768 = vadd.f32 %v622, %v763
    %v769 = vmul.f32 %v765, 0.5
    %v770 = vtanh.pop %v769
    %v771 = vmul.f32 %v770, 0.5
    %v772 = vadd.f32 %v771, 0.5
    %v773 = vmul.f32 %v766, 0.5
    %v774 = vtanh.pop %v773
    %v775 = vmul.f32 %v774, 0.5
    %v776 = vadd.f32 %v775, 0.5
    %v777 = vtanh.pop %v767
    %v778 = vmul.f32 %v768, 0.5
    %v779 = vtanh.pop %v778
    %v780 = vmul.f32 %v779, 0.5
    %v781 = vadd.f32 %v780, 0.5
    %v782 = vmul.f32 %v776, %v613
    %v783 = vmul.f32 %v772, %v777
    %v784 = vadd.f32 %v782, %v783
    %v785 = vtanh.pop %v784
    %v786 = vmul.f32 %v781, %v785
    %s787 = smul.u32 2, 4
    %s788 = smul.addr %s787, 8
    %s789 = scalar_lea.vmem [#allocation4], %s788
    %v790 = vld [vmem:[%s789] sm:$0xff]
    %v791 = vld [vmem:[%s789 + $0x8] sm:$0xff]
    %v792 = vld [vmem:[%s789 + $0x10] sm:$0xff]
    %v793 = vld [vmem:[%s789 + $0x18] sm:$0xff]
    %794 = vmatprep.subr.mxu0 %v449
    %795 = vmatpush1.msra.mxu0 %v448
    %796 = vmatprep.subr.mxu0 %v445
    %797 = vmatpush1.msra.mxu0 %v444
    %798 = vmatprep.subr.mxu0 %v441
    %799 = vmatpush1.msra.mxu0 %v440
    %800 = vmatprep.subr.mxu0 %v437
    %801 = vmatpush1.msra.mxu0 %v436
    %802 = vmatprep.subr.mxu0 %v433
    %803 = vmatpush1.msra.mxu0 %v432
    %804 = vmatprep.subr.mxu0 %v429
    %805 = vmatpush1.msra.mxu0 %v428
    %806 = vmatprep.subr.mxu0 %v425
    %807 = vmatpush1.msra.mxu0 %v424
    %808 = vmatprep.subr.mxu0 %v421
    %809 = vmatpush1.msra.mxu0 %v420
    %810 = vmatprep.subr.mxu0 %v417
    %811 = vmatpush1.msra.mxu0 %v416
    %812 = vmatprep.subr.mxu0 %v413
    %813 = vmatpush1.msra.mxu0 %v412
    %814 = vmatprep.subr.mxu0 %v409
    %815 = vmatpush1.msra.mxu0 %v408
    %816 = vmatprep.subr.mxu0 %v405
    %817 = vmatpush1.msra.mxu0 %v404
    %818 = vmatprep.subr.mxu0 %v401
    %819 = vmatpush1.msra.mxu0 %v400
    %820 = vmatprep.subr.mxu0 %v397
    %821 = vmatpush1.msra.mxu0 %v396
    %822 = vmatprep.subr.mxu0 %v393
    %823 = vmatpush1.msra.mxu0 %v392
    %824 = vmatprep.subr.mxu0 %v389
    %825 = vmatpush1.msra.mxu0 %v388
    %826 = vmatprep.subr.mxu0 0.0
    %827 = vmatpush2.msra.mxu0 0.0
    %828 = vmatprep.subr.mxu0 0.0
    %829 = vmatpush2.msra.mxu0 0.0
    %830 = vmatprep.subr.mxu0 0.0
    %831 = vmatpush2.msra.mxu0 0.0
    %832 = vmatprep.subr.mxu0 0.0
    %833 = vmatpush2.msra.mxu0 0.0
    %834 = vmatprep.subr.mxu0 0.0
    %835 = vmatpush2.msra.mxu0 0.0
    %836 = vmatprep.subr.mxu0 0.0
    %837 = vmatpush2.msra.mxu0 0.0
    %838 = vmatprep.subr.mxu0 0.0
    %839 = vmatpush2.msra.mxu0 0.0
    %840 = vmatprep.subr.mxu0 0.0
    %841 = vmatpush2.msra.mxu0 0.0
    %842 = vmatprep.subr.mxu0 0.0
    %843 = vmatpush2.msra.mxu0 0.0
    %844 = vmatprep.subr.mxu0 0.0
    %845 = vmatpush2.msra.mxu0 0.0
    %846 = vmatprep.subr.mxu0 0.0
    %847 = vmatpush2.msra.mxu0 0.0
    %848 = vmatprep.subr.mxu0 0.0
    %849 = vmatpush2.msra.mxu0 0.0
    %850 = vmatprep.subr.mxu0 0.0
    %851 = vmatpush2.msra.mxu0 0.0
    %852 = vmatprep.subr.mxu0 0.0
    %853 = vmatpush2.msra.mxu0 0.0
    %854 = vmatprep.subr.mxu0 0.0
    %855 = vmatpush2.msra.mxu0 0.0
    %856 = vmatprep.subr.mxu0 0.0
    %857 = vmatpush2.msra.mxu0 0.0
    %858 = vmatprep.mubr.f32.mxu0 0.0
    %859 = vmatmul.mubr.f32.gmra.mxu0 %v786
    %v860 = vpop.f32.mrf.mxu0
    %v861 = vadd.f32 0.0, %v860
    %v862 = vpop.f32.mrf.mxu0
    %v863 = vadd.f32 0.0, %v862
    %864 = vdwg.mxu0
    %865 = vmatprep.subr.mxu0 %v451
    %866 = vmatpush1.msra.mxu0 %v450
    %867 = vmatprep.subr.mxu0 %v447
    %868 = vmatpush1.msra.mxu0 %v446
    %869 = vmatprep.subr.mxu0 %v443
    %870 = vmatpush1.msra.mxu0 %v442
    %871 = vmatprep.subr.mxu0 %v439
    %872 = vmatpush1.msra.mxu0 %v438
    %873 = vmatprep.subr.mxu0 %v435
    %874 = vmatpush1.msra.mxu0 %v434
    %875 = vmatprep.subr.mxu0 %v431
    %876 = vmatpush1.msra.mxu0 %v430
    %877 = vmatprep.subr.mxu0 %v427
    %878 = vmatpush1.msra.mxu0 %v426
    %879 = vmatprep.subr.mxu0 %v423
    %880 = vmatpush1.msra.mxu0 %v422
    %881 = vmatprep.subr.mxu0 %v419
    %882 = vmatpush1.msra.mxu0 %v418
    %883 = vmatprep.subr.mxu0 %v415
    %884 = vmatpush1.msra.mxu0 %v414
    %885 = vmatprep.subr.mxu0 %v411
    %886 = vmatpush1.msra.mxu0 %v410
    %887 = vmatprep.subr.mxu0 %v407
    %888 = vmatpush1.msra.mxu0 %v406
    %889 = vmatprep.subr.mxu0 %v403
    %890 = vmatpush1.msra.mxu0 %v402
    %891 = vmatprep.subr.mxu0 %v399
    %892 = vmatpush1.msra.mxu0 %v398
    %893 = vmatprep.subr.mxu0 %v395
    %894 = vmatpush1.msra.mxu0 %v394
    %895 = vmatprep.subr.mxu0 %v391
    %896 = vmatpush1.msra.mxu0 %v390
    %897 = vmatprep.subr.mxu0 0.0
    %898 = vmatpush2.msra.mxu0 0.0
    %899 = vmatprep.subr.mxu0 0.0
    %900 = vmatpush2.msra.mxu0 0.0
    %901 = vmatprep.subr.mxu0 0.0
    %902 = vmatpush2.msra.mxu0 0.0
    %903 = vmatprep.subr.mxu0 0.0
    %904 = vmatpush2.msra.mxu0 0.0
    %905 = vmatprep.subr.mxu0 0.0
    %906 = vmatpush2.msra.mxu0 0.0
    %907 = vmatprep.subr.mxu0 0.0
    %908 = vmatpush2.msra.mxu0 0.0
    %909 = vmatprep.subr.mxu0 0.0
    %910 = vmatpush2.msra.mxu0 0.0
    %911 = vmatprep.subr.mxu0 0.0
    %912 = vmatpush2.msra.mxu0 0.0
    %913 = vmatprep.subr.mxu0 0.0
    %914 = vmatpush2.msra.mxu0 0.0
    %915 = vmatprep.subr.mxu0 0.0
    %916 = vmatpush2.msra.mxu0 0.0
    %917 = vmatprep.subr.mxu0 0.0
    %918 = vmatpush2.msra.mxu0 0.0
    %919 = vmatprep.subr.mxu0 0.0
    %920 = vmatpush2.msra.mxu0 0.0
    %921 = vmatprep.subr.mxu0 0.0
    %922 = vmatpush2.msra.mxu0 0.0
    %923 = vmatprep.subr.mxu0 0.0
    %924 = vmatpush2.msra.mxu0 0.0
    %925 = vmatprep.subr.mxu0 0.0
    %926 = vmatpush2.msra.mxu0 0.0
    %927 = vmatprep.subr.mxu0 0.0
    %928 = vmatpush2.msra.mxu0 0.0
    %929 = vmatprep.mubr.f32.mxu0 0.0
    %930 = vmatmul.mubr.f32.gmra.mxu0 %v786
    %v931 = vpop.f32.mrf.mxu0
    %v932 = vadd.f32 0.0, %v931
    %v933 = vpop.f32.mrf.mxu0
    %v934 = vadd.f32 0.0, %v933
    %935 = vdwg.mxu0
    %v936 = vadd.f32 %v790, %v861
    %v937 = vadd.f32 %v791, %v863
    %v938 = vadd.f32 %v792, %v932
    %v939 = vadd.f32 %v793, %v934
    %v940 = vmul.f32 %v936, 0.5
    %v941 = vtanh.pop %v940
    %v942 = vmul.f32 %v941, 0.5
    %v943 = vadd.f32 %v942, 0.5
    %v944 = vmul.f32 %v937, 0.5
    %v945 = vtanh.pop %v944
    %v946 = vmul.f32 %v945, 0.5
    %v947 = vadd.f32 %v946, 0.5
    %v948 = vtanh.pop %v938
    %v949 = vmul.f32 %v939, 0.5
    %v950 = vtanh.pop %v949
    %v951 = vmul.f32 %v950, 0.5
    %v952 = vadd.f32 %v951, 0.5
    %v953 = vmul.f32 %v947, %v784
    %v954 = vmul.f32 %v943, %v948
    %v955 = vadd.f32 %v953, %v954
    %v956 = vtanh.pop %v955
    %v957 = vmul.f32 %v952, %v956
    %s958 = smul.u32 3, 4
    %s959 = smul.addr %s958, 8
    %s960 = scalar_lea.vmem [#allocation4], %s959
    %v961 = vld [vmem:[%s960] sm:$0xff]
    %v962 = vld [vmem:[%s960 + $0x8] sm:$0xff]
    %v963 = vld [vmem:[%s960 + $0x10] sm:$0xff]
    %v964 = vld [vmem:[%s960 + $0x18] sm:$0xff]
    %965 = vmatprep.subr.mxu0 %v449
    %966 = vmatpush1.msra.mxu0 %v448
    %967 = vmatprep.subr.mxu0 %v445
    %968 = vmatpush1.msra.mxu0 %v444
    %969 = vmatprep.subr.mxu0 %v441
    %970 = vmatpush1.msra.mxu0 %v440
    %971 = vmatprep.subr.mxu0 %v437
    %972 = vmatpush1.msra.mxu0 %v436
    %973 = vmatprep.subr.mxu0 %v433
    %974 = vmatpush1.msra.mxu0 %v432
    %975 = vmatprep.subr.mxu0 %v429
    %976 = vmatpush1.msra.mxu0 %v428
    %977 = vmatprep.subr.mxu0 %v425
    %978 = vmatpush1.msra.mxu0 %v424
    %979 = vmatprep.subr.mxu0 %v421
    %980 = vmatpush1.msra.mxu0 %v420
    %981 = vmatprep.subr.mxu0 %v417
    %982 = vmatpush1.msra.mxu0 %v416
    %983 = vmatprep.subr.mxu0 %v413
    %984 = vmatpush1.msra.mxu0 %v412
    %985 = vmatprep.subr.mxu0 %v409
    %986 = vmatpush1.msra.mxu0 %v408
    %987 = vmatprep.subr.mxu0 %v405
    %988 = vmatpush1.msra.mxu0 %v404
    %989 = vmatprep.subr.mxu0 %v401
    %990 = vmatpush1.msra.mxu0 %v400
    %991 = vmatprep.subr.mxu0 %v397
    %992 = vmatpush1.msra.mxu0 %v396
    %993 = vmatprep.subr.mxu0 %v393
    %994 = vmatpush1.msra.mxu0 %v392
    %995 = vmatprep.subr.mxu0 %v389
    %996 = vmatpush1.msra.mxu0 %v388
    %997 = vmatprep.subr.mxu0 0.0
    %998 = vmatpush2.msra.mxu0 0.0
    %999 = vmatprep.subr.mxu0 0.0
    %1000 = vmatpush2.msra.mxu0 0.0
    %1001 = vmatprep.subr.mxu0 0.0
    %1002 = vmatpush2.msra.mxu0 0.0
    %1003 = vmatprep.subr.mxu0 0.0
    %1004 = vmatpush2.msra.mxu0 0.0
    %1005 = vmatprep.subr.mxu0 0.0
    %1006 = vmatpush2.msra.mxu0 0.0
    %1007 = vmatprep.subr.mxu0 0.0
    %1008 = vmatpush2.msra.mxu0 0.0
    %1009 = vmatprep.subr.mxu0 0.0
    %1010 = vmatpush2.msra.mxu0 0.0
    %1011 = vmatprep.subr.mxu0 0.0
    %1012 = vmatpush2.msra.mxu0 0.0
    %1013 = vmatprep.subr.mxu0 0.0
    %1014 = vmatpush2.msra.mxu0 0.0
    %1015 = vmatprep.subr.mxu0 0.0
    %1016 = vmatpush2.msra.mxu0 0.0
    %1017 = vmatprep.subr.mxu0 0.0
    %1018 = vmatpush2.msra.mxu0 0.0
    %1019 = vmatprep.subr.mxu0 0.0
    %1020 = vmatpush2.msra.mxu0 0.0
    %1021 = vmatprep.subr.mxu0 0.0
    %1022 = vmatpush2.msra.mxu0 0.0
    %1023 = vmatprep.subr.mxu0 0.0
    %1024 = vmatpush2.msra.mxu0 0.0
    %1025 = vmatprep.subr.mxu0 0.0
    %1026 = vmatpush2.msra.mxu0 0.0
    %1027 = vmatprep.subr.mxu0 0.0
    %1028 = vmatpush2.msra.mxu0 0.0
    %1029 = vmatprep.mubr.f32.mxu0 0.0
    %1030 = vmatmul.mubr.f32.gmra.mxu0 %v957
    %v1031 = vpop.f32.mrf.mxu0
    %v1032 = vadd.f32 0.0, %v1031
    %v1033 = vpop.f32.mrf.mxu0
    %v1034 = vadd.f32 0.0, %v1033
    %1035 = vdwg.mxu0
    %1036 = vmatprep.subr.mxu0 %v451
    %1037 = vmatpush1.msra.mxu0 %v450
    %1038 = vmatprep.subr.mxu0 %v447
    %1039 = vmatpush1.msra.mxu0 %v446
    %1040 = vmatprep.subr.mxu0 %v443
    %1041 = vmatpush1.msra.mxu0 %v442
    %1042 = vmatprep.subr.mxu0 %v439
    %1043 = vmatpush1.msra.mxu0 %v438
    %1044 = vmatprep.subr.mxu0 %v435
    %1045 = vmatpush1.msra.mxu0 %v434
    %1046 = vmatprep.subr.mxu0 %v431
    %1047 = vmatpush1.msra.mxu0 %v430
    %1048 = vmatprep.subr.mxu0 %v427
    %1049 = vmatpush1.msra.mxu0 %v426
    %1050 = vmatprep.subr.mxu0 %v423
    %1051 = vmatpush1.msra.mxu0 %v422
    %1052 = vmatprep.subr.mxu0 %v419
    %1053 = vmatpush1.msra.mxu0 %v418
    %1054 = vmatprep.subr.mxu0 %v415
    %1055 = vmatpush1.msra.mxu0 %v414
    %1056 = vmatprep.subr.mxu0 %v411
    %1057 = vmatpush1.msra.mxu0 %v410
    %1058 = vmatprep.subr.mxu0 %v407
    %1059 = vmatpush1.msra.mxu0 %v406
    %1060 = vmatprep.subr.mxu0 %v403
    %1061 = vmatpush1.msra.mxu0 %v402
    %1062 = vmatprep.subr.mxu0 %v399
    %1063 = vmatpush1.msra.mxu0 %v398
    %1064 = vmatprep.subr.mxu0 %v395
    %1065 = vmatpush1.msra.mxu0 %v394
    %1066 = vmatprep.subr.mxu0 %v391
    %1067 = vmatpush1.msra.mxu0 %v390
    %1068 = vmatprep.subr.mxu0 0.0
    %1069 = vmatpush2.msra.mxu0 0.0
    %1070 = vmatprep.subr.mxu0 0.0
    %1071 = vmatpush2.msra.mxu0 0.0
    %1072 = vmatprep.subr.mxu0 0.0
    %1073 = vmatpush2.msra.mxu0 0.0
    %1074 = vmatprep.subr.mxu0 0.0
    %1075 = vmatpush2.msra.mxu0 0.0
    %1076 = vmatprep.subr.mxu0 0.0
    %1077 = vmatpush2.msra.mxu0 0.0
    %1078 = vmatprep.subr.mxu0 0.0
    %1079 = vmatpush2.msra.mxu0 0.0
    %1080 = vmatprep.subr.mxu0 0.0
    %1081 = vmatpush2.msra.mxu0 0.0
    %1082 = vmatprep.subr.mxu0 0.0
    %1083 = vmatpush2.msra.mxu0 0.0
    %1084 = vmatprep.subr.mxu0 0.0
    %1085 = vmatpush2.msra.mxu0 0.0
    %1086 = vmatprep.subr.mxu0 0.0
    %1087 = vmatpush2.msra.mxu0 0.0
    %1088 = vmatprep.subr.mxu0 0.0
    %1089 = vmatpush2.msra.mxu0 0.0
    %1090 = vmatprep.subr.mxu0 0.0
    %1091 = vmatpush2.msra.mxu0 0.0
    %1092 = vmatprep.subr.mxu0 0.0
    %1093 = vmatpush2.msra.mxu0 0.0
    %1094 = vmatprep.subr.mxu0 0.0
    %1095 = vmatpush2.msra.mxu0 0.0
    %1096 = vmatprep.subr.mxu0 0.0
    %1097 = vmatpush2.msra.mxu0 0.0
    %1098 = vmatprep.subr.mxu0 0.0
    %1099 = vmatpush2.msra.mxu0 0.0
    %1100 = vmatprep.mubr.f32.mxu0 0.0
    %1101 = vmatmul.mubr.f32.gmra.mxu0 %v957
    %v1102 = vpop.f32.mrf.mxu0
    %v1103 = vadd.f32 0.0, %v1102
    %v1104 = vpop.f32.mrf.mxu0
    %v1105 = vadd.f32 0.0, %v1104
    %1106 = vdwg.mxu0
    %v1107 = vadd.f32 %v961, %v1032
    %v1108 = vadd.f32 %v962, %v1034
    %v1109 = vadd.f32 %v963, %v1103
    %v1110 = vadd.f32 %v964, %v1105
    %v1111 = vmul.f32 %v1107, 0.5
    %v1112 = vtanh.pop %v1111
    %v1113 = vmul.f32 %v1112, 0.5
    %v1114 = vadd.f32 %v1113, 0.5
    %v1115 = vmul.f32 %v1108, 0.5
    %v1116 = vtanh.pop %v1115
    %v1117 = vmul.f32 %v1116, 0.5
    %v1118 = vadd.f32 %v1117, 0.5
    %v1119 = vtanh.pop %v1109
    %v1120 = vmul.f32 %v1110, 0.5
    %v1121 = vtanh.pop %v1120
    %v1122 = vmul.f32 %v1121, 0.5
    %v1123 = vadd.f32 %v1122, 0.5
    %v1124 = vmul.f32 %v1118, %v955
    %v1125 = vmul.f32 %v1114, %v1119
    %v1126 = vadd.f32 %v1124, %v1125
    %v1127 = vtanh.pop %v1126
    %v1128 = vmul.f32 %v1123, %v1127
    %s1129 = smul.u32 4, 4
    %s1130 = smul.addr %s1129, 8
    %s1131 = scalar_lea.vmem [#allocation4], %s1130
    %v1132 = vld [vmem:[%s1131] sm:$0xff]
    %v1133 = vld [vmem:[%s1131 + $0x8] sm:$0xff]
    %v1134 = vld [vmem:[%s1131 + $0x10] sm:$0xff]
    %v1135 = vld [vmem:[%s1131 + $0x18] sm:$0xff]
    %1136 = vmatprep.subr.mxu0 %v449
    %1137 = vmatpush1.msra.mxu0 %v448
    %1138 = vmatprep.subr.mxu0 %v445
    %1139 = vmatpush1.msra.mxu0 %v444
    %1140 = vmatprep.subr.mxu0 %v441
    %1141 = vmatpush1.msra.mxu0 %v440
    %1142 = vmatprep.subr.mxu0 %v437
    %1143 = vmatpush1.msra.mxu0 %v436
    %1144 = vmatprep.subr.mxu0 %v433
    %1145 = vmatpush1.msra.mxu0 %v432
    %1146 = vmatprep.subr.mxu0 %v429
    %1147 = vmatpush1.msra.mxu0 %v428
    %1148 = vmatprep.subr.mxu0 %v425
    %1149 = vmatpush1.msra.mxu0 %v424
    %1150 = vmatprep.subr.mxu0 %v421
    %1151 = vmatpush1.msra.mxu0 %v420
    %1152 = vmatprep.subr.mxu0 %v417
    %1153 = vmatpush1.msra.mxu0 %v416
    %1154 = vmatprep.subr.mxu0 %v413
    %1155 = vmatpush1.msra.mxu0 %v412
    %1156 = vmatprep.subr.mxu0 %v409
    %1157 = vmatpush1.msra.mxu0 %v408
    %1158 = vmatprep.subr.mxu0 %v405
    %1159 = vmatpush1.msra.mxu0 %v404
    %1160 = vmatprep.subr.mxu0 %v401
    %1161 = vmatpush1.msra.mxu0 %v400
    %1162 = vmatprep.subr.mxu0 %v397
    %1163 = vmatpush1.msra.mxu0 %v396
    %1164 = vmatprep.subr.mxu0 %v393
    %1165 = vmatpush1.msra.mxu0 %v392
    %1166 = vmatprep.subr.mxu0 %v389
    %1167 = vmatpush1.msra.mxu0 %v388
    %1168 = vmatprep.subr.mxu0 0.0
    %1169 = vmatpush2.msra.mxu0 0.0
    %1170 = vmatprep.subr.mxu0 0.0
    %1171 = vmatpush2.msra.mxu0 0.0
    %1172 = vmatprep.subr.mxu0 0.0
    %1173 = vmatpush2.msra.mxu0 0.0
    %1174 = vmatprep.subr.mxu0 0.0
    %1175 = vmatpush2.msra.mxu0 0.0
    %1176 = vmatprep.subr.mxu0 0.0
    %1177 = vmatpush2.msra.mxu0 0.0
    %1178 = vmatprep.subr.mxu0 0.0
    %1179 = vmatpush2.msra.mxu0 0.0
    %1180 = vmatprep.subr.mxu0 0.0
    %1181 = vmatpush2.msra.mxu0 0.0
    %1182 = vmatprep.subr.mxu0 0.0
    %1183 = vmatpush2.msra.mxu0 0.0
    %1184 = vmatprep.subr.mxu0 0.0
    %1185 = vmatpush2.msra.mxu0 0.0
    %1186 = vmatprep.subr.mxu0 0.0
    %1187 = vmatpush2.msra.mxu0 0.0
    %1188 = vmatprep.subr.mxu0 0.0
    %1189 = vmatpush2.msra.mxu0 0.0
    %1190 = vmatprep.subr.mxu0 0.0
    %1191 = vmatpush2.msra.mxu0 0.0
    %1192 = vmatprep.subr.mxu0 0.0
    %1193 = vmatpush2.msra.mxu0 0.0
    %1194 = vmatprep.subr.mxu0 0.0
    %1195 = vmatpush2.msra.mxu0 0.0
    %1196 = vmatprep.subr.mxu0 0.0
    %1197 = vmatpush2.msra.mxu0 0.0
    %1198 = vmatprep.subr.mxu0 0.0
    %1199 = vmatpush2.msra.mxu0 0.0
    %1200 = vmatprep.mubr.f32.mxu0 0.0
    %1201 = vmatmul.mubr.f32.gmra.mxu0 %v1128
    %v1202 = vpop.f32.mrf.mxu0
    %v1203 = vadd.f32 0.0, %v1202
    %v1204 = vpop.f32.mrf.mxu0
    %v1205 = vadd.f32 0.0, %v1204
    %1206 = vdwg.mxu0
    %1207 = vmatprep.subr.mxu0 %v451
    %1208 = vmatpush1.msra.mxu0 %v450
    %1209 = vmatprep.subr.mxu0 %v447
    %1210 = vmatpush1.msra.mxu0 %v446
    %1211 = vmatprep.subr.mxu0 %v443
    %1212 = vmatpush1.msra.mxu0 %v442
    %1213 = vmatprep.subr.mxu0 %v439
    %1214 = vmatpush1.msra.mxu0 %v438
    %1215 = vmatprep.subr.mxu0 %v435
    %1216 = vmatpush1.msra.mxu0 %v434
    %1217 = vmatprep.subr.mxu0 %v431
    %1218 = vmatpush1.msra.mxu0 %v430
    %1219 = vmatprep.subr.mxu0 %v427
    %1220 = vmatpush1.msra.mxu0 %v426
    %1221 = vmatprep.subr.mxu0 %v423
    %1222 = vmatpush1.msra.mxu0 %v422
    %1223 = vmatprep.subr.mxu0 %v419
    %1224 = vmatpush1.msra.mxu0 %v418
    %1225 = vmatprep.subr.mxu0 %v415
    %1226 = vmatpush1.msra.mxu0 %v414
    %1227 = vmatprep.subr.mxu0 %v411
    %1228 = vmatpush1.msra.mxu0 %v410
    %1229 = vmatprep.subr.mxu0 %v407
    %1230 = vmatpush1.msra.mxu0 %v406
    %1231 = vmatprep.subr.mxu0 %v403
    %1232 = vmatpush1.msra.mxu0 %v402
    %1233 = vmatprep.subr.mxu0 %v399
    %1234 = vmatpush1.msra.mxu0 %v398
    %1235 = vmatprep.subr.mxu0 %v395
    %1236 = vmatpush1.msra.mxu0 %v394
    %1237 = vmatprep.subr.mxu0 %v391
    %1238 = vmatpush1.msra.mxu0 %v390
    %1239 = vmatprep.subr.mxu0 0.0
    %1240 = vmatpush2.msra.mxu0 0.0
    %1241 = vmatprep.subr.mxu0 0.0
    %1242 = vmatpush2.msra.mxu0 0.0
    %1243 = vmatprep.subr.mxu0 0.0
    %1244 = vmatpush2.msra.mxu0 0.0
    %1245 = vmatprep.subr.mxu0 0.0
    %1246 = vmatpush2.msra.mxu0 0.0
    %1247 = vmatprep.subr.mxu0 0.0
    %1248 = vmatpush2.msra.mxu0 0.0
    %1249 = vmatprep.subr.mxu0 0.0
    %1250 = vmatpush2.msra.mxu0 0.0
    %1251 = vmatprep.subr.mxu0 0.0
    %1252 = vmatpush2.msra.mxu0 0.0
    %1253 = vmatprep.subr.mxu0 0.0
    %1254 = vmatpush2.msra.mxu0 0.0
    %1255 = vmatprep.subr.mxu0 0.0
    %1256 = vmatpush2.msra.mxu0 0.0
    %1257 = vmatprep.subr.mxu0 0.0
    %1258 = vmatpush2.msra.mxu0 0.0
    %1259 = vmatprep.subr.mxu0 0.0
    %1260 = vmatpush2.msra.mxu0 0.0
    %1261 = vmatprep.subr.mxu0 0.0
    %1262 = vmatpush2.msra.mxu0 0.0
    %1263 = vmatprep.subr.mxu0 0.0
    %1264 = vmatpush2.msra.mxu0 0.0
    %1265 = vmatprep.subr.mxu0 0.0
    %1266 = vmatpush2.msra.mxu0 0.0
    %1267 = vmatprep.subr.mxu0 0.0
    %1268 = vmatpush2.msra.mxu0 0.0
    %1269 = vmatprep.subr.mxu0 0.0
    %1270 = vmatpush2.msra.mxu0 0.0
    %1271 = vmatprep.mubr.f32.mxu0 0.0
    %1272 = vmatmul.mubr.f32.gmra.mxu0 %v1128
    %v1273 = vpop.f32.mrf.mxu0
    %v1274 = vadd.f32 0.0, %v1273
    %v1275 = vpop.f32.mrf.mxu0
    %v1276 = vadd.f32 0.0, %v1275
    %1277 = vdwg.mxu0
    %v1278 = vadd.f32 %v1132, %v1203
    %v1279 = vadd.f32 %v1133, %v1205
    %v1280 = vadd.f32 %v1134, %v1274
    %v1281 = vadd.f32 %v1135, %v1276
    %v1282 = vmul.f32 %v1278, 0.5
    %v1283 = vtanh.pop %v1282
    %v1284 = vmul.f32 %v1283, 0.5
    %v1285 = vadd.f32 %v1284, 0.5
    %v1286 = vmul.f32 %v1279, 0.5
    %v1287 = vtanh.pop %v1286
    %v1288 = vmul.f32 %v1287, 0.5
    %v1289 = vadd.f32 %v1288, 0.5
    %v1290 = vtanh.pop %v1280
    %v1291 = vmul.f32 %v1281, 0.5
    %v1292 = vtanh.pop %v1291
    %v1293 = vmul.f32 %v1292, 0.5
    %v1294 = vadd.f32 %v1293, 0.5
    %v1295 = vmul.f32 %v1289, %v1126
    %v1296 = vmul.f32 %v1285, %v1290
    %v1297 = vadd.f32 %v1295, %v1296
    %v1298 = vtanh.pop %v1297
    %v1299 = vmul.f32 %v1294, %v1298
    %s1300 = smul.u32 5, 4
    %s1301 = smul.addr %s1300, 8
    %s1302 = scalar_lea.vmem [#allocation4], %s1301
    %v1303 = vld [vmem:[%s1302] sm:$0xff]
    %v1304 = vld [vmem:[%s1302 + $0x8] sm:$0xff]
    %v1305 = vld [vmem:[%s1302 + $0x10] sm:$0xff]
    %v1306 = vld [vmem:[%s1302 + $0x18] sm:$0xff]
    %1307 = vmatprep.subr.mxu0 %v449
    %1308 = vmatpush1.msra.mxu0 %v448
    %1309 = vmatprep.subr.mxu0 %v445
    %1310 = vmatpush1.msra.mxu0 %v444
    %1311 = vmatprep.subr.mxu0 %v441
    %1312 = vmatpush1.msra.mxu0 %v440
    %1313 = vmatprep.subr.mxu0 %v437
    %1314 = vmatpush1.msra.mxu0 %v436
    %1315 = vmatprep.subr.mxu0 %v433
    %1316 = vmatpush1.msra.mxu0 %v432
    %1317 = vmatprep.subr.mxu0 %v429
    %1318 = vmatpush1.msra.mxu0 %v428
    %1319 = vmatprep.subr.mxu0 %v425
    %1320 = vmatpush1.msra.mxu0 %v424
    %1321 = vmatprep.subr.mxu0 %v421
    %1322 = vmatpush1.msra.mxu0 %v420
    %1323 = vmatprep.subr.mxu0 %v417
    %1324 = vmatpush1.msra.mxu0 %v416
    %1325 = vmatprep.subr.mxu0 %v413
    %1326 = vmatpush1.msra.mxu0 %v412
    %1327 = vmatprep.subr.mxu0 %v409
    %1328 = vmatpush1.msra.mxu0 %v408
    %1329 = vmatprep.subr.mxu0 %v405
    %1330 = vmatpush1.msra.mxu0 %v404
    %1331 = vmatprep.subr.mxu0 %v401
    %1332 = vmatpush1.msra.mxu0 %v400
    %1333 = vmatprep.subr.mxu0 %v397
    %1334 = vmatpush1.msra.mxu0 %v396
    %1335 = vmatprep.subr.mxu0 %v393
    %1336 = vmatpush1.msra.mxu0 %v392
    %1337 = vmatprep.subr.mxu0 %v389
    %1338 = vmatpush1.msra.mxu0 %v388
    %1339 = vmatprep.subr.mxu0 0.0
    %1340 = vmatpush2.msra.mxu0 0.0
    %1341 = vmatprep.subr.mxu0 0.0
    %1342 = vmatpush2.msra.mxu0 0.0
    %1343 = vmatprep.subr.mxu0 0.0
    %1344 = vmatpush2.msra.mxu0 0.0
    %1345 = vmatprep.subr.mxu0 0.0
    %1346 = vmatpush2.msra.mxu0 0.0
    %1347 = vmatprep.subr.mxu0 0.0
    %1348 = vmatpush2.msra.mxu0 0.0
    %1349 = vmatprep.subr.mxu0 0.0
    %1350 = vmatpush2.msra.mxu0 0.0
    %1351 = vmatprep.subr.mxu0 0.0
    %1352 = vmatpush2.msra.mxu0 0.0
    %1353 = vmatprep.subr.mxu0 0.0
    %1354 = vmatpush2.msra.mxu0 0.0
    %1355 = vmatprep.subr.mxu0 0.0
    %1356 = vmatpush2.msra.mxu0 0.0
    %1357 = vmatprep.subr.mxu0 0.0
    %1358 = vmatpush2.msra.mxu0 0.0
    %1359 = vmatprep.subr.mxu0 0.0
    %1360 = vmatpush2.msra.mxu0 0.0
    %1361 = vmatprep.subr.mxu0 0.0
    %1362 = vmatpush2.msra.mxu0 0.0
    %1363 = vmatprep.subr.mxu0 0.0
    %1364 = vmatpush2.msra.mxu0 0.0
    %1365 = vmatprep.subr.mxu0 0.0
    %1366 = vmatpush2.msra.mxu0 0.0
    %1367 = vmatprep.subr.mxu0 0.0
    %1368 = vmatpush2.msra.mxu0 0.0
    %1369 = vmatprep.subr.mxu0 0.0
    %1370 = vmatpush2.msra.mxu0 0.0
    %1371 = vmatprep.mubr.f32.mxu0 0.0
    %1372 = vmatmul.mubr.f32.gmra.mxu0 %v1299
    %v1373 = vpop.f32.mrf.mxu0
    %v1374 = vadd.f32 0.0, %v1373
    %v1375 = vpop.f32.mrf.mxu0
    %v1376 = vadd.f32 0.0, %v1375
    %1377 = vdwg.mxu0
    %1378 = vmatprep.subr.mxu0 %v451
    %1379 = vmatpush1.msra.mxu0 %v450
    %1380 = vmatprep.subr.mxu0 %v447
    %1381 = vmatpush1.msra.mxu0 %v446
    %1382 = vmatprep.subr.mxu0 %v443
    %1383 = vmatpush1.msra.mxu0 %v442
    %1384 = vmatprep.subr.mxu0 %v439
    %1385 = vmatpush1.msra.mxu0 %v438
    %1386 = vmatprep.subr.mxu0 %v435
    %1387 = vmatpush1.msra.mxu0 %v434
    %1388 = vmatprep.subr.mxu0 %v431
    %1389 = vmatpush1.msra.mxu0 %v430
    %1390 = vmatprep.subr.mxu0 %v427
    %1391 = vmatpush1.msra.mxu0 %v426
    %1392 = vmatprep.subr.mxu0 %v423
    %1393 = vmatpush1.msra.mxu0 %v422
    %1394 = vmatprep.subr.mxu0 %v419
    %1395 = vmatpush1.msra.mxu0 %v418
    %1396 = vmatprep.subr.mxu0 %v415
    %1397 = vmatpush1.msra.mxu0 %v414
    %1398 = vmatprep.subr.mxu0 %v411
    %1399 = vmatpush1.msra.mxu0 %v410
    %1400 = vmatprep.subr.mxu0 %v407
    %1401 = vmatpush1.msra.mxu0 %v406
    %1402 = vmatprep.subr.mxu0 %v403
    %1403 = vmatpush1.msra.mxu0 %v402
    %1404 = vmatprep.subr.mxu0 %v399
    %1405 = vmatpush1.msra.mxu0 %v398
    %1406 = vmatprep.subr.mxu0 %v395
    %1407 = vmatpush1.msra.mxu0 %v394
    %1408 = vmatprep.subr.mxu0 %v391
    %1409 = vmatpush1.msra.mxu0 %v390
    %1410 = vmatprep.subr.mxu0 0.0
    %1411 = vmatpush2.msra.mxu0 0.0
    %1412 = vmatprep.subr.mxu0 0.0
    %1413 = vmatpush2.msra.mxu0 0.0
    %1414 = vmatprep.subr.mxu0 0.0
    %1415 = vmatpush2.msra.mxu0 0.0
    %1416 = vmatprep.subr.mxu0 0.0
    %1417 = vmatpush2.msra.mxu0 0.0
    %1418 = vmatprep.subr.mxu0 0.0
    %1419 = vmatpush2.msra.mxu0 0.0
    %1420 = vmatprep.subr.mxu0 0.0
    %1421 = vmatpush2.msra.mxu0 0.0
    %1422 = vmatprep.subr.mxu0 0.0
    %1423 = vmatpush2.msra.mxu0 0.0
    %1424 = vmatprep.subr.mxu0 0.0
    %1425 = vmatpush2.msra.mxu0 0.0
    %1426 = vmatprep.subr.mxu0 0.0
    %1427 = vmatpush2.msra.mxu0 0.0
    %1428 = vmatprep.subr.mxu0 0.0
    %1429 = vmatpush2.msra.mxu0 0.0
    %1430 = vmatprep.subr.mxu0 0.0
    %1431 = vmatpush2.msra.mxu0 0.0
    %1432 = vmatprep.subr.mxu0 0.0
    %1433 = vmatpush2.msra.mxu0 0.0
    %1434 = vmatprep.subr.mxu0 0.0
    %1435 = vmatpush2.msra.mxu0 0.0
    %1436 = vmatprep.subr.mxu0 0.0
    %1437 = vmatpush2.msra.mxu0 0.0
    %1438 = vmatprep.subr.mxu0 0.0
    %1439 = vmatpush2.msra.mxu0 0.0
    %1440 = vmatprep.subr.mxu0 0.0
    %1441 = vmatpush2.msra.mxu0 0.0
    %1442 = vmatprep.mubr.f32.mxu0 0.0
    %1443 = vmatmul.mubr.f32.gmra.mxu0 %v1299
    %v1444 = vpop.f32.mrf.mxu0
    %v1445 = vadd.f32 0.0, %v1444
    %v1446 = vpop.f32.mrf.mxu0
    %v1447 = vadd.f32 0.0, %v1446
    %1448 = vdwg.mxu0
    %v1449 = vadd.f32 %v1303, %v1374
    %v1450 = vadd.f32 %v1304, %v1376
    %v1451 = vadd.f32 %v1305, %v1445
    %v1452 = vadd.f32 %v1306, %v1447
    %v1453 = vmul.f32 %v1449, 0.5
    %v1454 = vtanh.pop %v1453
    %v1455 = vmul.f32 %v1454, 0.5
    %v1456 = vadd.f32 %v1455, 0.5
    %v1457 = vmul.f32 %v1450, 0.5
    %v1458 = vtanh.pop %v1457
    %v1459 = vmul.f32 %v1458, 0.5
    %v1460 = vadd.f32 %v1459, 0.5
    %v1461 = vtanh.pop %v1451
    %v1462 = vmul.f32 %v1452, 0.5
    %v1463 = vtanh.pop %v1462
    %v1464 = vmul.f32 %v1463, 0.5
    %v1465 = vadd.f32 %v1464, 0.5
    %v1466 = vmul.f32 %v1460, %v1297
    %v1467 = vmul.f32 %v1456, %v1461
    %v1468 = vadd.f32 %v1466, %v1467
    %v1469 = vtanh.pop %v1468
    %v1470 = vmul.f32 %v1465, %v1469
    %s1471 = smul.u32 6, 4
    %s1472 = smul.addr %s1471, 8
    %s1473 = scalar_lea.vmem [#allocation4], %s1472
    %v1474 = vld [vmem:[%s1473] sm:$0xff]
    %v1475 = vld [vmem:[%s1473 + $0x8] sm:$0xff]
    %v1476 = vld [vmem:[%s1473 + $0x10] sm:$0xff]
    %v1477 = vld [vmem:[%s1473 + $0x18] sm:$0xff]
    %1478 = vmatprep.subr.mxu0 %v449
    %1479 = vmatpush1.msra.mxu0 %v448
    %1480 = vmatprep.subr.mxu0 %v445
    %1481 = vmatpush1.msra.mxu0 %v444
    %1482 = vmatprep.subr.mxu0 %v441
    %1483 = vmatpush1.msra.mxu0 %v440
    %1484 = vmatprep.subr.mxu0 %v437
    %1485 = vmatpush1.msra.mxu0 %v436
    %1486 = vmatprep.subr.mxu0 %v433
    %1487 = vmatpush1.msra.mxu0 %v432
    %1488 = vmatprep.subr.mxu0 %v429
    %1489 = vmatpush1.msra.mxu0 %v428
    %1490 = vmatprep.subr.mxu0 %v425
    %1491 = vmatpush1.msra.mxu0 %v424
    %1492 = vmatprep.subr.mxu0 %v421
    %1493 = vmatpush1.msra.mxu0 %v420
    %1494 = vmatprep.subr.mxu0 %v417
    %1495 = vmatpush1.msra.mxu0 %v416
    %1496 = vmatprep.subr.mxu0 %v413
    %1497 = vmatpush1.msra.mxu0 %v412
    %1498 = vmatprep.subr.mxu0 %v409
    %1499 = vmatpush1.msra.mxu0 %v408
    %1500 = vmatprep.subr.mxu0 %v405
    %1501 = vmatpush1.msra.mxu0 %v404
    %1502 = vmatprep.subr.mxu0 %v401
    %1503 = vmatpush1.msra.mxu0 %v400
    %1504 = vmatprep.subr.mxu0 %v397
    %1505 = vmatpush1.msra.mxu0 %v396
    %1506 = vmatprep.subr.mxu0 %v393
    %1507 = vmatpush1.msra.mxu0 %v392
    %1508 = vmatprep.subr.mxu0 %v389
    %1509 = vmatpush1.msra.mxu0 %v388
    %1510 = vmatprep.subr.mxu0 0.0
    %1511 = vmatpush2.msra.mxu0 0.0
    %1512 = vmatprep.subr.mxu0 0.0
    %1513 = vmatpush2.msra.mxu0 0.0
    %1514 = vmatprep.subr.mxu0 0.0
    %1515 = vmatpush2.msra.mxu0 0.0
    %1516 = vmatprep.subr.mxu0 0.0
    %1517 = vmatpush2.msra.mxu0 0.0
    %1518 = vmatprep.subr.mxu0 0.0
    %1519 = vmatpush2.msra.mxu0 0.0
    %1520 = vmatprep.subr.mxu0 0.0
    %1521 = vmatpush2.msra.mxu0 0.0
    %1522 = vmatprep.subr.mxu0 0.0
    %1523 = vmatpush2.msra.mxu0 0.0
    %1524 = vmatprep.subr.mxu0 0.0
    %1525 = vmatpush2.msra.mxu0 0.0
    %1526 = vmatprep.subr.mxu0 0.0
    %1527 = vmatpush2.msra.mxu0 0.0
    %1528 = vmatprep.subr.mxu0 0.0
    %1529 = vmatpush2.msra.mxu0 0.0
    %1530 = vmatprep.subr.mxu0 0.0
    %1531 = vmatpush2.msra.mxu0 0.0
    %1532 = vmatprep.subr.mxu0 0.0
    %1533 = vmatpush2.msra.mxu0 0.0
    %1534 = vmatprep.subr.mxu0 0.0
    %1535 = vmatpush2.msra.mxu0 0.0
    %1536 = vmatprep.subr.mxu0 0.0
    %1537 = vmatpush2.msra.mxu0 0.0
    %1538 = vmatprep.subr.mxu0 0.0
    %1539 = vmatpush2.msra.mxu0 0.0
    %1540 = vmatprep.subr.mxu0 0.0
    %1541 = vmatpush2.msra.mxu0 0.0
    %1542 = vmatprep.mubr.f32.mxu0 0.0
    %1543 = vmatmul.mubr.f32.gmra.mxu0 %v1470
    %v1544 = vpop.f32.mrf.mxu0
    %v1545 = vadd.f32 0.0, %v1544
    %v1546 = vpop.f32.mrf.mxu0
    %v1547 = vadd.f32 0.0, %v1546
    %1548 = vdwg.mxu0
    %1549 = vmatprep.subr.mxu0 %v451
    %1550 = vmatpush1.msra.mxu0 %v450
    %1551 = vmatprep.subr.mxu0 %v447
    %1552 = vmatpush1.msra.mxu0 %v446
    %1553 = vmatprep.subr.mxu0 %v443
    %1554 = vmatpush1.msra.mxu0 %v442
    %1555 = vmatprep.subr.mxu0 %v439
    %1556 = vmatpush1.msra.mxu0 %v438
    %1557 = vmatprep.subr.mxu0 %v435
    %1558 = vmatpush1.msra.mxu0 %v434
    %1559 = vmatprep.subr.mxu0 %v431
    %1560 = vmatpush1.msra.mxu0 %v430
    %1561 = vmatprep.subr.mxu0 %v427
    %1562 = vmatpush1.msra.mxu0 %v426
    %1563 = vmatprep.subr.mxu0 %v423
    %1564 = vmatpush1.msra.mxu0 %v422
    %1565 = vmatprep.subr.mxu0 %v419
    %1566 = vmatpush1.msra.mxu0 %v418
    %1567 = vmatprep.subr.mxu0 %v415
    %1568 = vmatpush1.msra.mxu0 %v414
    %1569 = vmatprep.subr.mxu0 %v411
    %1570 = vmatpush1.msra.mxu0 %v410
    %1571 = vmatprep.subr.mxu0 %v407
    %1572 = vmatpush1.msra.mxu0 %v406
    %1573 = vmatprep.subr.mxu0 %v403
    %1574 = vmatpush1.msra.mxu0 %v402
    %1575 = vmatprep.subr.mxu0 %v399
    %1576 = vmatpush1.msra.mxu0 %v398
    %1577 = vmatprep.subr.mxu0 %v395
    %1578 = vmatpush1.msra.mxu0 %v394
    %1579 = vmatprep.subr.mxu0 %v391
    %1580 = vmatpush1.msra.mxu0 %v390
    %1581 = vmatprep.subr.mxu0 0.0
    %1582 = vmatpush2.msra.mxu0 0.0
    %1583 = vmatprep.subr.mxu0 0.0
    %1584 = vmatpush2.msra.mxu0 0.0
    %1585 = vmatprep.subr.mxu0 0.0
    %1586 = vmatpush2.msra.mxu0 0.0
    %1587 = vmatprep.subr.mxu0 0.0
    %1588 = vmatpush2.msra.mxu0 0.0
    %1589 = vmatprep.subr.mxu0 0.0
    %1590 = vmatpush2.msra.mxu0 0.0
    %1591 = vmatprep.subr.mxu0 0.0
    %1592 = vmatpush2.msra.mxu0 0.0
    %1593 = vmatprep.subr.mxu0 0.0
    %1594 = vmatpush2.msra.mxu0 0.0
    %1595 = vmatprep.subr.mxu0 0.0
    %1596 = vmatpush2.msra.mxu0 0.0
    %1597 = vmatprep.subr.mxu0 0.0
    %1598 = vmatpush2.msra.mxu0 0.0
    %1599 = vmatprep.subr.mxu0 0.0
    %1600 = vmatpush2.msra.mxu0 0.0
    %1601 = vmatprep.subr.mxu0 0.0
    %1602 = vmatpush2.msra.mxu0 0.0
    %1603 = vmatprep.subr.mxu0 0.0
    %1604 = vmatpush2.msra.mxu0 0.0
    %1605 = vmatprep.subr.mxu0 0.0
    %1606 = vmatpush2.msra.mxu0 0.0
    %1607 = vmatprep.subr.mxu0 0.0
    %1608 = vmatpush2.msra.mxu0 0.0
    %1609 = vmatprep.subr.mxu0 0.0
    %1610 = vmatpush2.msra.mxu0 0.0
    %1611 = vmatprep.subr.mxu0 0.0
    %1612 = vmatpush2.msra.mxu0 0.0
    %1613 = vmatprep.mubr.f32.mxu0 0.0
    %1614 = vmatmul.mubr.f32.gmra.mxu0 %v1470
    %v1615 = vpop.f32.mrf.mxu0
    %v1616 = vadd.f32 0.0, %v1615
    %v1617 = vpop.f32.mrf.mxu0
    %v1618 = vadd.f32 0.0, %v1617
    %1619 = vdwg.mxu0
    %v1620 = vadd.f32 %v1474, %v1545
    %v1621 = vadd.f32 %v1475, %v1547
    %v1622 = vadd.f32 %v1476, %v1616
    %v1623 = vadd.f32 %v1477, %v1618
    %v1624 = vmul.f32 %v1620, 0.5
    %v1625 = vtanh.pop %v1624
    %v1626 = vmul.f32 %v1625, 0.5
    %v1627 = vadd.f32 %v1626, 0.5
    %v1628 = vmul.f32 %v1621, 0.5
    %v1629 = vtanh.pop %v1628
    %v1630 = vmul.f32 %v1629, 0.5
    %v1631 = vadd.f32 %v1630, 0.5
    %v1632 = vtanh.pop %v1622
    %v1633 = vmul.f32 %v1623, 0.5
    %v1634 = vtanh.pop %v1633
    %v1635 = vmul.f32 %v1634, 0.5
    %v1636 = vadd.f32 %v1635, 0.5
    %v1637 = vmul.f32 %v1631, %v1468
    %v1638 = vmul.f32 %v1627, %v1632
    %v1639 = vadd.f32 %v1637, %v1638
    %v1640 = vtanh.pop %v1639
    %v1641 = vmul.f32 %v1636, %v1640
    %s1642 = smul.u32 7, 4
    %s1643 = smul.addr %s1642, 8
    %s1644 = scalar_lea.vmem [#allocation4], %s1643
    %v1645 = vld [vmem:[%s1644] sm:$0xff]
    %v1646 = vld [vmem:[%s1644 + $0x8] sm:$0xff]
    %v1647 = vld [vmem:[%s1644 + $0x10] sm:$0xff]
    %v1648 = vld [vmem:[%s1644 + $0x18] sm:$0xff]
    %1649 = vmatprep.subr.mxu0 %v449
    %1650 = vmatpush1.msra.mxu0 %v448
    %1651 = vmatprep.subr.mxu0 %v445
    %1652 = vmatpush1.msra.mxu0 %v444
    %1653 = vmatprep.subr.mxu0 %v441
    %1654 = vmatpush1.msra.mxu0 %v440
    %1655 = vmatprep.subr.mxu0 %v437
    %1656 = vmatpush1.msra.mxu0 %v436
    %1657 = vmatprep.subr.mxu0 %v433
    %1658 = vmatpush1.msra.mxu0 %v432
    %1659 = vmatprep.subr.mxu0 %v429
    %1660 = vmatpush1.msra.mxu0 %v428
    %1661 = vmatprep.subr.mxu0 %v425
    %1662 = vmatpush1.msra.mxu0 %v424
    %1663 = vmatprep.subr.mxu0 %v421
    %1664 = vmatpush1.msra.mxu0 %v420
    %1665 = vmatprep.subr.mxu0 %v417
    %1666 = vmatpush1.msra.mxu0 %v416
    %1667 = vmatprep.subr.mxu0 %v413
    %1668 = vmatpush1.msra.mxu0 %v412
    %1669 = vmatprep.subr.mxu0 %v409
    %1670 = vmatpush1.msra.mxu0 %v408
    %1671 = vmatprep.subr.mxu0 %v405
    %1672 = vmatpush1.msra.mxu0 %v404
    %1673 = vmatprep.subr.mxu0 %v401
    %1674 = vmatpush1.msra.mxu0 %v400
    %1675 = vmatprep.subr.mxu0 %v397
    %1676 = vmatpush1.msra.mxu0 %v396
    %1677 = vmatprep.subr.mxu0 %v393
    %1678 = vmatpush1.msra.mxu0 %v392
    %1679 = vmatprep.subr.mxu0 %v389
    %1680 = vmatpush1.msra.mxu0 %v388
    %1681 = vmatprep.subr.mxu0 0.0
    %1682 = vmatpush2.msra.mxu0 0.0
    %1683 = vmatprep.subr.mxu0 0.0
    %1684 = vmatpush2.msra.mxu0 0.0
    %1685 = vmatprep.subr.mxu0 0.0
    %1686 = vmatpush2.msra.mxu0 0.0
    %1687 = vmatprep.subr.mxu0 0.0
    %1688 = vmatpush2.msra.mxu0 0.0
    %1689 = vmatprep.subr.mxu0 0.0
    %1690 = vmatpush2.msra.mxu0 0.0
    %1691 = vmatprep.subr.mxu0 0.0
    %1692 = vmatpush2.msra.mxu0 0.0
    %1693 = vmatprep.subr.mxu0 0.0
    %1694 = vmatpush2.msra.mxu0 0.0
    %1695 = vmatprep.subr.mxu0 0.0
    %1696 = vmatpush2.msra.mxu0 0.0
    %1697 = vmatprep.subr.mxu0 0.0
    %1698 = vmatpush2.msra.mxu0 0.0
    %1699 = vmatprep.subr.mxu0 0.0
    %1700 = vmatpush2.msra.mxu0 0.0
    %1701 = vmatprep.subr.mxu0 0.0
    %1702 = vmatpush2.msra.mxu0 0.0
    %1703 = vmatprep.subr.mxu0 0.0
    %1704 = vmatpush2.msra.mxu0 0.0
    %1705 = vmatprep.subr.mxu0 0.0
    %1706 = vmatpush2.msra.mxu0 0.0
    %1707 = vmatprep.subr.mxu0 0.0
    %1708 = vmatpush2.msra.mxu0 0.0
    %1709 = vmatprep.subr.mxu0 0.0
    %1710 = vmatpush2.msra.mxu0 0.0
    %1711 = vmatprep.subr.mxu0 0.0
    %1712 = vmatpush2.msra.mxu0 0.0
    %1713 = vmatprep.mubr.f32.mxu0 0.0
    %1714 = vmatmul.mubr.f32.gmra.mxu0 %v1641
    %v1715 = vpop.f32.mrf.mxu0
    %v1716 = vadd.f32 0.0, %v1715
    %v1717 = vpop.f32.mrf.mxu0
    %v1718 = vadd.f32 0.0, %v1717
    %1719 = vdwg.mxu0
    %1720 = vmatprep.subr.mxu0 %v451
    %1721 = vmatpush1.msra.mxu0 %v450
    %1722 = vmatprep.subr.mxu0 %v447
    %1723 = vmatpush1.msra.mxu0 %v446
    %1724 = vmatprep.subr.mxu0 %v443
    %1725 = vmatpush1.msra.mxu0 %v442
    %1726 = vmatprep.subr.mxu0 %v439
    %1727 = vmatpush1.msra.mxu0 %v438
    %1728 = vmatprep.subr.mxu0 %v435
    %1729 = vmatpush1.msra.mxu0 %v434
    %1730 = vmatprep.subr.mxu0 %v431
    %1731 = vmatpush1.msra.mxu0 %v430
    %1732 = vmatprep.subr.mxu0 %v427
    %1733 = vmatpush1.msra.mxu0 %v426
    %1734 = vmatprep.subr.mxu0 %v423
    %1735 = vmatpush1.msra.mxu0 %v422
    %1736 = vmatprep.subr.mxu0 %v419
    %1737 = vmatpush1.msra.mxu0 %v418
    %1738 = vmatprep.subr.mxu0 %v415
    %1739 = vmatpush1.msra.mxu0 %v414
    %1740 = vmatprep.subr.mxu0 %v411
    %1741 = vmatpush1.msra.mxu0 %v410
    %1742 = vmatprep.subr.mxu0 %v407
    %1743 = vmatpush1.msra.mxu0 %v406
    %1744 = vmatprep.subr.mxu0 %v403
    %1745 = vmatpush1.msra.mxu0 %v402
    %1746 = vmatprep.subr.mxu0 %v399
    %1747 = vmatpush1.msra.mxu0 %v398
    %1748 = vmatprep.subr.mxu0 %v395
    %1749 = vmatpush1.msra.mxu0 %v394
    %1750 = vmatprep.subr.mxu0 %v391
    %1751 = vmatpush1.msra.mxu0 %v390
    %1752 = vmatprep.subr.mxu0 0.0
    %1753 = vmatpush2.msra.mxu0 0.0
    %1754 = vmatprep.subr.mxu0 0.0
    %1755 = vmatpush2.msra.mxu0 0.0
    %1756 = vmatprep.subr.mxu0 0.0
    %1757 = vmatpush2.msra.mxu0 0.0
    %1758 = vmatprep.subr.mxu0 0.0
    %1759 = vmatpush2.msra.mxu0 0.0
    %1760 = vmatprep.subr.mxu0 0.0
    %1761 = vmatpush2.msra.mxu0 0.0
    %1762 = vmatprep.subr.mxu0 0.0
    %1763 = vmatpush2.msra.mxu0 0.0
    %1764 = vmatprep.subr.mxu0 0.0
    %1765 = vmatpush2.msra.mxu0 0.0
    %1766 = vmatprep.subr.mxu0 0.0
    %1767 = vmatpush2.msra.mxu0 0.0
    %1768 = vmatprep.subr.mxu0 0.0
    %1769 = vmatpush2.msra.mxu0 0.0
    %1770 = vmatprep.subr.mxu0 0.0
    %1771 = vmatpush2.msra.mxu0 0.0
    %1772 = vmatprep.subr.mxu0 0.0
    %1773 = vmatpush2.msra.mxu0 0.0
    %1774 = vmatprep.subr.mxu0 0.0
    %1775 = vmatpush2.msra.mxu0 0.0
    %1776 = vmatprep.subr.mxu0 0.0
    %1777 = vmatpush2.msra.mxu0 0.0
    %1778 = vmatprep.subr.mxu0 0.0
    %1779 = vmatpush2.msra.mxu0 0.0
    %1780 = vmatprep.subr.mxu0 0.0
    %1781 = vmatpush2.msra.mxu0 0.0
    %1782 = vmatprep.subr.mxu0 0.0
    %1783 = vmatpush2.msra.mxu0 0.0
    %1784 = vmatprep.mubr.f32.mxu0 0.0
    %1785 = vmatmul.mubr.f32.gmra.mxu0 %v1641
    %v1786 = vpop.f32.mrf.mxu0
    %v1787 = vadd.f32 0.0, %v1786
    %v1788 = vpop.f32.mrf.mxu0
    %v1789 = vadd.f32 0.0, %v1788
    %1790 = vdwg.mxu0
    %v1791 = vadd.f32 %v1645, %v1716
    %v1792 = vadd.f32 %v1646, %v1718
    %v1793 = vadd.f32 %v1647, %v1787
    %v1794 = vadd.f32 %v1648, %v1789
    %v1795 = vmul.f32 %v1791, 0.5
    %v1796 = vtanh.pop %v1795
    %v1797 = vmul.f32 %v1796, 0.5
    %v1798 = vadd.f32 %v1797, 0.5
    %v1799 = vmul.f32 %v1792, 0.5
    %v1800 = vtanh.pop %v1799
    %v1801 = vmul.f32 %v1800, 0.5
    %v1802 = vadd.f32 %v1801, 0.5
    %v1803 = vtanh.pop %v1793
    %v1804 = vmul.f32 %v1794, 0.5
    %v1805 = vtanh.pop %v1804
    %v1806 = vmul.f32 %v1805, 0.5
    %v1807 = vadd.f32 %v1806, 0.5
    %v1808 = vmul.f32 %v1802, %v1639
    %v1809 = vmul.f32 %v1798, %v1803
    %v1810 = vadd.f32 %v1808, %v1809
    %v1811 = vtanh.pop %v1810
    %v1812 = vmul.f32 %v1807, %v1811
    %1813 = vst [vmem:[#allocation2] sm:$0xff] %v1812
    %1814 = vst [vmem:[#allocation3] sm:$0xff] %v1810
    // Predicated region
    $region38: #{tpu_custom_call.1} parent=1 // pred_check
      %p1815 = pneg %p52
    $region39: #{tpu_custom_call.1} parent=1 // pred_check_branch
      %1817 = sbr.rel (%p1815) target = $region41
    $region40: #{tpu_custom_call.1} parent=1 // pred_region
      %v1818 = vld [vmem:[#allocation8] sm:$0xff]
      %v1819 = vld [vmem:[#allocation8 + $0x8] sm:$0xff]
      %v1820 = vld [vmem:[#allocation8 + $0x10] sm:$0xff]
      %v1821 = vld [vmem:[#allocation8 + $0x18] sm:$0xff]
      %v1822 = vld [vmem:[#allocation8 + $0x20] sm:$0xff]
      %v1823 = vld [vmem:[#allocation8 + $0x28] sm:$0xff]
      %v1824 = vld [vmem:[#allocation8 + $0x30] sm:$0xff]
      %v1825 = vld [vmem:[#allocation8 + $0x38] sm:$0xff]
      %v1826 = vld [vmem:[#allocation8 + $0x40] sm:$0xff]
      %v1827 = vld [vmem:[#allocation8 + $0x48] sm:$0xff]
      %v1828 = vld [vmem:[#allocation8 + $0x50] sm:$0xff]
      %v1829 = vld [vmem:[#allocation8 + $0x58] sm:$0xff]
      %v1830 = vld [vmem:[#allocation8 + $0x60] sm:$0xff]
      %v1831 = vld [vmem:[#allocation8 + $0x68] sm:$0xff]
      %v1832 = vld [vmem:[#allocation8 + $0x70] sm:$0xff]
      %v1833 = vld [vmem:[#allocation8 + $0x78] sm:$0xff]
      %v1834 = vld [vmem:[%s5] sm:$0x1]
      %v1836 = vlaneseq
      %v1837 = vshrl.u32 %v1836, 7
      %v1838 = vsub.s32 0, %v1837
      %v1839 = vrot.slane %v1834, %v1838
      %1841 = vmatprep.subr.mxu0 0.0
      %1842 = vmatpush1.msra.mxu0 %v1833
      %1843 = vmatprep.subr.mxu0 0.0
      %1844 = vmatpush1.msra.mxu0 %v1832
      %1845 = vmatprep.subr.mxu0 0.0
      %1846 = vmatpush1.msra.mxu0 %v1831
      %1847 = vmatprep.subr.mxu0 0.0
      %1848 = vmatpush1.msra.mxu0 %v1830
      %1849 = vmatprep.subr.mxu0 0.0
      %1850 = vmatpush1.msra.mxu0 %v1829
      %1851 = vmatprep.subr.mxu0 0.0
      %1852 = vmatpush1.msra.mxu0 %v1828
      %1853 = vmatprep.subr.mxu0 0.0
      %1854 = vmatpush1.msra.mxu0 %v1827
      %1855 = vmatprep.subr.mxu0 0.0
      %1856 = vmatpush1.msra.mxu0 %v1826
      %1857 = vmatprep.subr.mxu0 0.0
      %1858 = vmatpush1.msra.mxu0 %v1825
      %1859 = vmatprep.subr.mxu0 0.0
      %1860 = vmatpush1.msra.mxu0 %v1824
      %1861 = vmatprep.subr.mxu0 0.0
      %1862 = vmatpush1.msra.mxu0 %v1823
      %1863 = vmatprep.subr.mxu0 0.0
      %1864 = vmatpush1.msra.mxu0 %v1822
      %1865 = vmatprep.subr.mxu0 0.0
      %1866 = vmatpush1.msra.mxu0 %v1821
      %1867 = vmatprep.subr.mxu0 0.0
      %1868 = vmatpush1.msra.mxu0 %v1820
      %1869 = vmatprep.subr.mxu0 0.0
      %1870 = vmatpush1.msra.mxu0 %v1819
      %1871 = vmatprep.subr.mxu0 0.0
      %1872 = vmatpush1.msra.mxu0 %v1818
      %1873 = vmatprep.subr.mxu0 0.0
      %1874 = vmatpush2.msra.mxu0 0.0
      %1875 = vmatprep.subr.mxu0 0.0
      %1876 = vmatpush2.msra.mxu0 0.0
      %1877 = vmatprep.subr.mxu0 0.0
      %1878 = vmatpush2.msra.mxu0 0.0
      %1879 = vmatprep.subr.mxu0 0.0
      %1880 = vmatpush2.msra.mxu0 0.0
      %1881 = vmatprep.subr.mxu0 0.0
      %1882 = vmatpush2.msra.mxu0 0.0
      %1883 = vmatprep.subr.mxu0 0.0
      %1884 = vmatpush2.msra.mxu0 0.0
      %1885 = vmatprep.subr.mxu0 0.0
      %1886 = vmatpush2.msra.mxu0 0.0
      %1887 = vmatprep.subr.mxu0 0.0
      %1888 = vmatpush2.msra.mxu0 0.0
      %1889 = vmatprep.subr.mxu0 0.0
      %1890 = vmatpush2.msra.mxu0 0.0
      %1891 = vmatprep.subr.mxu0 0.0
      %1892 = vmatpush2.msra.mxu0 0.0
      %1893 = vmatprep.subr.mxu0 0.0
      %1894 = vmatpush2.msra.mxu0 0.0
      %1895 = vmatprep.subr.mxu0 0.0
      %1896 = vmatpush2.msra.mxu0 0.0
      %1897 = vmatprep.subr.mxu0 0.0
      %1898 = vmatpush2.msra.mxu0 0.0
      %1899 = vmatprep.subr.mxu0 0.0
      %1900 = vmatpush2.msra.mxu0 0.0
      %1901 = vmatprep.subr.mxu0 0.0
      %1902 = vmatpush2.msra.mxu0 0.0
      %1903 = vmatprep.subr.mxu0 0.0
      %1904 = vmatpush2.msra.mxu0 0.0
      %1905 = vmatprep.mubr.f32.mxu0 0.0
      %1906 = vmatmul.mubr.f32.gmra.mxu0 %v1812
      %v1907 = vpop.f32.mrf.mxu0
      %v1908 = vadd.f32 %v1839, %v1907
      %v1909 = vpop.f32.mrf.mxu0
      %1910 = vdwg.mxu0
      %1911 = vst [vmem:[#allocation10] sm:$0xff] %v1908
    $region41: #{tpu_custom_call.1} parent=1 // pred_fallthru
      _
    // Predicated region
    $region42: #{tpu_custom_call.1} parent=1 // pred_check
      _
    $region43: #{tpu_custom_call.1} parent=1 // pred_check_branch
      %1913 = sbr.rel (0) target = $region45
    $region44: #{tpu_custom_call.1} parent=1 // pred_region
      %s1915 = ssub.s32 128, 128
      %1916 = vsyncadd [#allocation7], %s1915
      %s1918 = sshll.u32 [#allocation10], 4
      %s1919 = int_to_ptr.vmem [resolvable:$true] %s1918
      %1921 = dma.vmem_to_hbm [thread:$0]  %s1919, 128, %s6, [#allocation7]
    $region45: #{tpu_custom_call.1} parent=1 // pred_fallthru
      _
    // Predicated region
    $region46: #{tpu_custom_call.1} parent=1 // pred_check
      _
    $region47: #{tpu_custom_call.1} parent=1 // pred_check_branch
      %1923 = sbr.rel (0) target = $region49
    $region48: #{tpu_custom_call.1} parent=1 // pred_region
      %1924 = dma.done [#allocation7], 128
    $region49: #{tpu_custom_call.1} parent=1 // pred_fallthru
      _
    %1925 = vsyncpa [#allocation6], 1
    %1926 = vsyncpa [#allocation9], 1
    %1927 = vsyncpa [#allocation7], 1

// kernel: tpu_custom_call.1
$region0: #{tpu_custom_call.1}
  #allocation0 [shape = 'u32[]', space=smem, size = 0x4, offset = 0x4, fixed_abs, tag = 'smem constant byte address 0x4 - core index']
  #allocation1 [shape = 'u32[144,128]{1,0:T(1,128)}', space=vmem, size = 0x12000, scoped, tag = 'internal scratch']
  #allocation2 [shape = 'f32[8,128]{1,0:T(8,128)}', space=vmem, size = 0x1000, scoped, tag = 'scratch operand']
  #allocation3 [shape = 'f32[8,128]{1,0:T(8,128)}', space=vmem, size = 0x1000, scoped, tag = 'scratch operand']
  #allocation4 [shape = 'f32[64,512]{1,0:T(8,128)}', space=vmem, size = 0x20000, scoped, tag = 'scratch operand']
  %s0 = inlined_call_operand.vmem [shape: f32[1,64,16], index: 0, kind: input, shape index: {}]
  %s1 = inlined_call_operand.vmem [shape: f32[16,512], index: 1, kind: input, shape index: {}]
  %s2 = inlined_call_operand.hbm [shape: f32[128,512], index: 2, kind: input, shape index: {}]
  %s3 = inlined_call_operand.vmem [shape: f32[1,512], index: 3, kind: input, shape index: {}]
  %s4 = inlined_call_operand.hbm [shape: f32[128,128], index: 4, kind: input, shape index: {}]
  %s5 = inlined_call_operand.vmem [shape: f32[1,128], index: 5, kind: input, shape index: {}]
  %s6 = inlined_call_operand.hbm [shape: f32[8,128], index: 6, kind: output, shape index: {}]
  %s7 = sld [smem:[#allocation0]]
  $region50: #{tpu_custom_call.1} parent=0
    _
  %s9 = ssub.s32 1, %s7
  %s10 = scalar_select 0, %s9, %s7
  $region1: #{tpu_custom_call.1} parent=0
    #allocation5 [shape = 'u8[262144]{0}', space=vmem, size = 0x40000, scoped, tag = 'input window, operand 2, single buffered']
    #allocation6 [shape = 's32[1]{0}', space=sflag, size = 0x4, scoped, tag = 'scoped memory for tpu_custom_call.1']
    #allocation7 [shape = 's32[1]{0}', space=sflag, size = 0x4, scoped, tag = 'scoped memory for tpu_custom_call.1']
    #allocation8 [shape = 'u8[65536]{0}', space=vmem, size = 0x10000, scoped, tag = 'input window, operand 4, single buffered']
    #allocation9 [shape = 's32[1]{0}', space=sflag, size = 0x4, scoped, tag = 'scoped memory for tpu_custom_call.1']
    #allocation10 [shape = 'u8[4096]{0}', space=vmem, size = 0x1000, scoped, tag = 'output window, operand 0, single buffered']
    %11 = vsyncpa [#allocation6], 0
    %12 = vsyncpa [#allocation9], 0
    %13 = vsyncpa [#allocation7], 0
    // Predicated region
    $region2: #{tpu_custom_call.1} parent=1 // pred_check
      _
    $region3: #{tpu_custom_call.1} parent=1 // pred_check_branch
      %15 = sbr.rel (0) target = $region5
    $region4: #{tpu_custom_call.1} parent=1 // pred_region
      _
    $region5: #{tpu_custom_call.1} parent=1 // pred_fallthru
      _
    // Predicated region
    $region6: #{tpu_custom_call.1} parent=1 // pred_check
      _
    $region7: #{tpu_custom_call.1} parent=1 // pred_check_branch
      %17 = sbr.rel (0) target = $region9
    $region8: #{tpu_custom_call.1} parent=1 // pred_region
      _
    $region9: #{tpu_custom_call.1} parent=1 // pred_fallthru
      _
    // Predicated region
    $region10: #{tpu_custom_call.1} parent=1 // pred_check
      _
    $region11: #{tpu_custom_call.1} parent=1 // pred_check_branch
      %19 = sbr.rel (0) target = $region13
    $region12: #{tpu_custom_call.1} parent=1 // pred_region
      %s21 = ssub.s32 8192, 8192
      %22 = vsyncadd [#allocation6], %s21
      %s23 = sshll.u32 [#allocation5], 4
      %s24 = int_to_ptr.vmem [resolvable:$true] %s23
      %29 = dma.hbm_to_vmem [thread:$0]  %s2, 8192, %s24, [#allocation6], 512, 512, 32
    $region13: #{tpu_custom_call.1} parent=1 // pred_fallthru
      _
    // Predicated region
    $region14: #{tpu_custom_call.1} parent=1 // pred_check
      _
    $region15: #{tpu_custom_call.1} parent=1 // pred_check_branch
      %31 = sbr.rel (0) target = $region17
    $region16: #{tpu_custom_call.1} parent=1 // pred_region
      _
    $region17: #{tpu_custom_call.1} parent=1 // pred_fallthru
      _
    // Predicated region
    $region18: #{tpu_custom_call.1} parent=1 // pred_check
      _
    $region19: #{tpu_custom_call.1} parent=1 // pred_check_branch
      %33 = sbr.rel (0) target = $region21
    $region20: #{tpu_custom_call.1} parent=1 // pred_region
      %s35 = ssub.s32 2048, 2048
      %36 = vsyncadd [#allocation9], %s35
      %s37 = sshll.u32 [#allocation8], 4
      %s38 = int_to_ptr.vmem [resolvable:$true] %s37
      %43 = dma.hbm_to_vmem [thread:$0]  %s4, 2048, %s38, [#allocation9], 128, 128, 8
    $region21: #{tpu_custom_call.1} parent=1 // pred_fallthru
      _
    // Predicated region
    $region22: #{tpu_custom_call.1} parent=1 // pred_check
      _
    $region23: #{tpu_custom_call.1} parent=1 // pred_check_branch
      %45 = sbr.rel (0) target = $region25
    $region24: #{tpu_custom_call.1} parent=1 // pred_region
      _
    $region25: #{tpu_custom_call.1} parent=1 // pred_fallthru
      _
    // Predicated region
    $region26: #{tpu_custom_call.1} parent=1 // pred_check
      _
    $region27: #{tpu_custom_call.1} parent=1 // pred_check_branch
      %47 = sbr.rel (0) target = $region29
    $region28: #{tpu_custom_call.1} parent=1 // pred_region
      %48 = dma.done [#allocation6], 8192
    $region29: #{tpu_custom_call.1} parent=1 // pred_fallthru
      _
    // Predicated region
    $region30: #{tpu_custom_call.1} parent=1 // pred_check
      _
    $region31: #{tpu_custom_call.1} parent=1 // pred_check_branch
      %50 = sbr.rel (0) target = $region33
    $region32: #{tpu_custom_call.1} parent=1 // pred_region
      %51 = dma.done [#allocation9], 2048
    $region33: #{tpu_custom_call.1} parent=1 // pred_fallthru
      _
    %p52 = scmp.eq.s32.totalorder 0, 0
    // Predicated region
    $region34: #{tpu_custom_call.1} parent=1 // pred_check
      %p53 = pneg %p52
    $region35: #{tpu_custom_call.1} parent=1 // pred_check_branch
      %55 = sbr.rel (%p53) target = $region37
    $region36: #{tpu_custom_call.1} parent=1 // pred_region
      %56 = vst [vmem:[#allocation2] sm:$0xff] 0.0
      %57 = vst [vmem:[#allocation3] sm:$0xff] 0.0
    $region37: #{tpu_custom_call.1} parent=1 // pred_fallthru
      _
    %v58 = vld [vmem:[%s0] sm:$0xff]
    %v59 = vld [vmem:[%s0 + $0x8] sm:$0xff]
    %v60 = vld [vmem:[%s0 + $0x10] sm:$0xff]
    %v61 = vld [vmem:[%s0 + $0x18] sm:$0xff]
    %v62 = vld [vmem:[%s0 + $0x20] sm:$0xff]
    %v63 = vld [vmem:[%s0 + $0x28] sm:$0xff]
    %v64 = vld [vmem:[%s0 + $0x30] sm:$0xff]
    %v65 = vld [vmem:[%s0 + $0x38] sm:$0xff]
    %v66 = vld [vmem:[%s1] sm:$0xff]
    %v67 = vld [vmem:[%s1 + $0x8] sm:$0xff]
    %v68 = vld [vmem:[%s1 + $0x10] sm:$0xff]
    %v69 = vld [vmem:[%s1 + $0x18] sm:$0xff]
    %v70 = vld [vmem:[%s1 + $0x20] sm:$0xff]
    %v71 = vld [vmem:[%s1 + $0x28] sm:$0xff]
    %v72 = vld [vmem:[%s1 + $0x30] sm:$0xff]
    %v73 = vld [vmem:[%s1 + $0x38] sm:$0xff]
    %v74 = vld [vmem:[%s3] sm:$0xf]
    %v76 = vlaneseq
    %v77 = vshrl.u32 %v76, 7
    %v78 = vsub.s32 0, %v77
    %v79 = vrot.slane %v74, %v78
    %v80 = vlaneseq
    %v81 = vshrl.u32 %v80, 7
    %v82 = vsub.s32 1, %v81
    %v83 = vrot.slane %v74, %v82
    %v84 = vlaneseq
    %v85 = vshrl.u32 %v84, 7
    %v86 = vsub.s32 2, %v85
    %v87 = vrot.slane %v74, %v86
    %v88 = vlaneseq
    %v89 = vshrl.u32 %v88, 7
    %v90 = vsub.s32 3, %v89
    %v91 = vrot.slane %v74, %v90
    %vm96 = vcmask 130048
    %v98 = vsel %vm96, %v58, 0
    %v101 = vsel %vm96, %v59, 0
    %v104 = vsel %vm96, %v60, 0
    %v107 = vsel %vm96, %v61, 0
    %v110 = vsel %vm96, %v62, 0
    %v113 = vsel %vm96, %v63, 0
    %v116 = vsel %vm96, %v64, 0
    %v119 = vsel %vm96, %v65, 0
    %121 = vmatprep.subr.mxu0 0.0
    %122 = vmatpush1.msra.mxu0 0.0
    %123 = vmatprep.subr.mxu0 0.0
    %124 = vmatpush1.msra.mxu0 0.0
    %125 = vmatprep.subr.mxu0 0.0
    %126 = vmatpush1.msra.mxu0 0.0
    %127 = vmatprep.subr.mxu0 0.0
    %128 = vmatpush1.msra.mxu0 0.0
    %129 = vmatprep.subr.mxu0 0.0
    %130 = vmatpush1.msra.mxu0 0.0
    %131 = vmatprep.subr.mxu0 0.0
    %132 = vmatpush1.msra.mxu0 0.0
    %133 = vmatprep.subr.mxu0 0.0
    %134 = vmatpush1.msra.mxu0 0.0
    %135 = vmatprep.subr.mxu0 0.0
    %136 = vmatpush1.msra.mxu0 0.0
    %137 = vmatprep.subr.mxu0 0.0
    %138 = vmatpush1.msra.mxu0 0.0
    %139 = vmatprep.subr.mxu0 0.0
    %140 = vmatpush1.msra.mxu0 0.0
    %141 = vmatprep.subr.mxu0 0.0
    %142 = vmatpush1.msra.mxu0 0.0
    %143 = vmatprep.subr.mxu0 0.0
    %144 = vmatpush1.msra.mxu0 0.0
    %145 = vmatprep.subr.mxu0 0.0
    %146 = vmatpush1.msra.mxu0 0.0
    %147 = vmatprep.subr.mxu0 0.0
    %148 = vmatpush1.msra.mxu0 0.0
    %149 = vmatprep.subr.mxu0 %v71
    %150 = vmatpush1.msra.mxu0 %v70
    %151 = vmatprep.subr.mxu0 %v67
    %152 = vmatpush1.msra.mxu0 %v66
    %153 = vmatprep.subr.mxu0 0.0
    %154 = vmatpush2.msra.mxu0 0.0
    %155 = vmatprep.subr.mxu0 0.0
    %156 = vmatpush2.msra.mxu0 0.0
    %157 = vmatprep.subr.mxu0 0.0
    %158 = vmatpush2.msra.mxu0 0.0
    %159 = vmatprep.subr.mxu0 0.0
    %160 = vmatpush2.msra.mxu0 0.0
    %161 = vmatprep.subr.mxu0 0.0
    %162 = vmatpush2.msra.mxu0 0.0
    %163 = vmatprep.subr.mxu0 0.0
    %164 = vmatpush2.msra.mxu0 0.0
    %165 = vmatprep.subr.mxu0 0.0
    %166 = vmatpush2.msra.mxu0 0.0
    %167 = vmatprep.subr.mxu0 0.0
    %168 = vmatpush2.msra.mxu0 0.0
    %169 = vmatprep.subr.mxu0 0.0
    %170 = vmatpush2.msra.mxu0 0.0
    %171 = vmatprep.subr.mxu0 0.0
    %172 = vmatpush2.msra.mxu0 0.0
    %173 = vmatprep.subr.mxu0 0.0
    %174 = vmatpush2.msra.mxu0 0.0
    %175 = vmatprep.subr.mxu0 0.0
    %176 = vmatpush2.msra.mxu0 0.0
    %177 = vmatprep.subr.mxu0 0.0
    %178 = vmatpush2.msra.mxu0 0.0
    %179 = vmatprep.subr.mxu0 0.0
    %180 = vmatpush2.msra.mxu0 0.0
    %181 = vmatprep.subr.mxu0 0.0
    %182 = vmatpush2.msra.mxu0 0.0
    %183 = vmatprep.subr.mxu0 0.0
    %184 = vmatpush2.msra.mxu0 0.0
    %185 = vmatprep.mubr.f32.mxu0 0.0
    %186 = vmatmul.mubr.f32.gmra.mxu0 %v98
    %v187 = vpop.f32.mrf.mxu0
    %v188 = vadd.f32 %v79, %v187
    %v189 = vpop.f32.mrf.mxu0
    %v190 = vadd.f32 %v83, %v189
    %191 = vmatprep.mubr.f32.mxu0 0.0
    %192 = vmatmul.mubr.f32.gmra.mxu0 %v101
    %v193 = vpop.f32.mrf.mxu0
    %v194 = vadd.f32 %v79, %v193
    %v195 = vpop.f32.mrf.mxu0
    %v196 = vadd.f32 %v83, %v195
    %197 = vmatprep.mubr.f32.mxu0 0.0
    %198 = vmatmul.mubr.f32.gmra.mxu0 %v104
    %v199 = vpop.f32.mrf.mxu0
    %v200 = vadd.f32 %v79, %v199
    %v201 = vpop.f32.mrf.mxu0
    %v202 = vadd.f32 %v83, %v201
    %203 = vmatprep.mubr.f32.mxu0 0.0
    %204 = vmatmul.mubr.f32.gmra.mxu0 %v107
    %v205 = vpop.f32.mrf.mxu0
    %v206 = vadd.f32 %v79, %v205
    %v207 = vpop.f32.mrf.mxu0
    %v208 = vadd.f32 %v83, %v207
    %209 = vmatprep.mubr.f32.mxu0 0.0
    %210 = vmatmul.mubr.f32.gmra.mxu0 %v110
    %v211 = vpop.f32.mrf.mxu0
    %v212 = vadd.f32 %v79, %v211
    %v213 = vpop.f32.mrf.mxu0
    %v214 = vadd.f32 %v83, %v213
    %215 = vmatprep.mubr.f32.mxu0 0.0
    %216 = vmatmul.mubr.f32.gmra.mxu0 %v113
    %v217 = vpop.f32.mrf.mxu0
    %v218 = vadd.f32 %v79, %v217
    %v219 = vpop.f32.mrf.mxu0
    %v220 = vadd.f32 %v83, %v219
    %221 = vmatprep.mubr.f32.mxu0 0.0
    %222 = vmatmul.mubr.f32.gmra.mxu0 %v116
    %v223 = vpop.f32.mrf.mxu0
    %v224 = vadd.f32 %v79, %v223
    %v225 = vpop.f32.mrf.mxu0
    %v226 = vadd.f32 %v83, %v225
    %227 = vmatprep.mubr.f32.mxu0 0.0
    %228 = vmatmul.mubr.f32.gmra.mxu0 %v119
    %v229 = vpop.f32.mrf.mxu0
    %v230 = vadd.f32 %v79, %v229
    %v231 = vpop.f32.mrf.mxu0
    %v232 = vadd.f32 %v83, %v231
    %233 = vdwg.mxu0
    %234 = vmatprep.subr.mxu0 0.0
    %235 = vmatpush1.msra.mxu0 0.0
    %236 = vmatprep.subr.mxu0 0.0
    %237 = vmatpush1.msra.mxu0 0.0
    %238 = vmatprep.subr.mxu0 0.0
    %239 = vmatpush1.msra.mxu0 0.0
    %240 = vmatprep.subr.mxu0 0.0
    %241 = vmatpush1.msra.mxu0 0.0
    %242 = vmatprep.subr.mxu0 0.0
    %243 = vmatpush1.msra.mxu0 0.0
    %244 = vmatprep.subr.mxu0 0.0
    %245 = vmatpush1.msra.mxu0 0.0
    %246 = vmatprep.subr.mxu0 0.0
    %247 = vmatpush1.msra.mxu0 0.0
    %248 = vmatprep.subr.mxu0 0.0
    %249 = vmatpush1.msra.mxu0 0.0
    %250 = vmatprep.subr.mxu0 0.0
    %251 = vmatpush1.msra.mxu0 0.0
    %252 = vmatprep.subr.mxu0 0.0
    %253 = vmatpush1.msra.mxu0 0.0
    %254 = vmatprep.subr.mxu0 0.0
    %255 = vmatpush1.msra.mxu0 0.0
    %256 = vmatprep.subr.mxu0 0.0
    %257 = vmatpush1.msra.mxu0 0.0
    %258 = vmatprep.subr.mxu0 0.0
    %259 = vmatpush1.msra.mxu0 0.0
    %260 = vmatprep.subr.mxu0 0.0
    %261 = vmatpush1.msra.mxu0 0.0
    %262 = vmatprep.subr.mxu0 %v73
    %263 = vmatpush1.msra.mxu0 %v72
    %264 = vmatprep.subr.mxu0 %v69
    %265 = vmatpush1.msra.mxu0 %v68
    %266 = vmatprep.subr.mxu0 0.0
    %267 = vmatpush2.msra.mxu0 0.0
    %268 = vmatprep.subr.mxu0 0.0
    %269 = vmatpush2.msra.mxu0 0.0
    %270 = vmatprep.subr.mxu0 0.0
    %271 = vmatpush2.msra.mxu0 0.0
    %272 = vmatprep.subr.mxu0 0.0
    %273 = vmatpush2.msra.mxu0 0.0
    %274 = vmatprep.subr.mxu0 0.0
    %275 = vmatpush2.msra.mxu0 0.0
    %276 = vmatprep.subr.mxu0 0.0
    %277 = vmatpush2.msra.mxu0 0.0
    %278 = vmatprep.subr.mxu0 0.0
    %279 = vmatpush2.msra.mxu0 0.0
    %280 = vmatprep.subr.mxu0 0.0
    %281 = vmatpush2.msra.mxu0 0.0
    %282 = vmatprep.subr.mxu0 0.0
    %283 = vmatpush2.msra.mxu0 0.0
    %284 = vmatprep.subr.mxu0 0.0
    %285 = vmatpush2.msra.mxu0 0.0
    %286 = vmatprep.subr.mxu0 0.0
    %287 = vmatpush2.msra.mxu0 0.0
    %288 = vmatprep.subr.mxu0 0.0
    %289 = vmatpush2.msra.mxu0 0.0
    %290 = vmatprep.subr.mxu0 0.0
    %291 = vmatpush2.msra.mxu0 0.0
    %292 = vmatprep.subr.mxu0 0.0
    %293 = vmatpush2.msra.mxu0 0.0
    %294 = vmatprep.subr.mxu0 0.0
    %295 = vmatpush2.msra.mxu0 0.0
    %296 = vmatprep.subr.mxu0 0.0
    %297 = vmatpush2.msra.mxu0 0.0
    %298 = vmatprep.mubr.f32.mxu0 0.0
    %299 = vmatmul.mubr.f32.gmra.mxu0 %v98
    %v300 = vpop.f32.mrf.mxu0
    %v301 = vadd.f32 %v87, %v300
    %v302 = vpop.f32.mrf.mxu0
    %v303 = vadd.f32 %v91, %v302
    %304 = vmatprep.mubr.f32.mxu0 0.0
    %305 = vmatmul.mubr.f32.gmra.mxu0 %v101
    %v306 = vpop.f32.mrf.mxu0
    %v307 = vadd.f32 %v87, %v306
    %v308 = vpop.f32.mrf.mxu0
    %v309 = vadd.f32 %v91, %v308
    %310 = vmatprep.mubr.f32.mxu0 0.0
    %311 = vmatmul.mubr.f32.gmra.mxu0 %v104
    %v312 = vpop.f32.mrf.mxu0
    %v313 = vadd.f32 %v87, %v312
    %v314 = vpop.f32.mrf.mxu0
    %v315 = vadd.f32 %v91, %v314
    %316 = vmatprep.mubr.f32.mxu0 0.0
    %317 = vmatmul.mubr.f32.gmra.mxu0 %v107
    %v318 = vpop.f32.mrf.mxu0
    %v319 = vadd.f32 %v87, %v318
    %v320 = vpop.f32.mrf.mxu0
    %v321 = vadd.f32 %v91, %v320
    %322 = vmatprep.mubr.f32.mxu0 0.0
    %323 = vmatmul.mubr.f32.gmra.mxu0 %v110
    %v324 = vpop.f32.mrf.mxu0
    %v325 = vadd.f32 %v87, %v324
    %v326 = vpop.f32.mrf.mxu0
    %v327 = vadd.f32 %v91, %v326
    %328 = vmatprep.mubr.f32.mxu0 0.0
    %329 = vmatmul.mubr.f32.gmra.mxu0 %v113
    %v330 = vpop.f32.mrf.mxu0
    %v331 = vadd.f32 %v87, %v330
    %v332 = vpop.f32.mrf.mxu0
    %v333 = vadd.f32 %v91, %v332
    %334 = vmatprep.mubr.f32.mxu0 0.0
    %335 = vmatmul.mubr.f32.gmra.mxu0 %v116
    %v336 = vpop.f32.mrf.mxu0
    %v337 = vadd.f32 %v87, %v336
    %v338 = vpop.f32.mrf.mxu0
    %v339 = vadd.f32 %v91, %v338
    %340 = vmatprep.mubr.f32.mxu0 0.0
    %341 = vmatmul.mubr.f32.gmra.mxu0 %v119
    %v342 = vpop.f32.mrf.mxu0
    %v343 = vadd.f32 %v87, %v342
    %v344 = vpop.f32.mrf.mxu0
    %v345 = vadd.f32 %v91, %v344
    %346 = vdwg.mxu0
    %347 = vst [vmem:[#allocation4] sm:$0xff] %v188
    %348 = vst [vmem:[#allocation4 + $0x8] sm:$0xff] %v190
    %349 = vst [vmem:[#allocation4 + $0x10] sm:$0xff] %v301
    %350 = vst [vmem:[#allocation4 + $0x18] sm:$0xff] %v303
    %351 = vst [vmem:[#allocation4 + $0x20] sm:$0xff] %v194
    %352 = vst [vmem:[#allocation4 + $0x28] sm:$0xff] %v196
    %353 = vst [vmem:[#allocation4 + $0x30] sm:$0xff] %v307
    %354 = vst [vmem:[#allocation4 + $0x38] sm:$0xff] %v309
    %355 = vst [vmem:[#allocation4 + $0x40] sm:$0xff] %v200
    %356 = vst [vmem:[#allocation4 + $0x48] sm:$0xff] %v202
    %357 = vst [vmem:[#allocation4 + $0x50] sm:$0xff] %v313
    %358 = vst [vmem:[#allocation4 + $0x58] sm:$0xff] %v315
    %359 = vst [vmem:[#allocation4 + $0x60] sm:$0xff] %v206
    %360 = vst [vmem:[#allocation4 + $0x68] sm:$0xff] %v208
    %361 = vst [vmem:[#allocation4 + $0x70] sm:$0xff] %v319
    %362 = vst [vmem:[#allocation4 + $0x78] sm:$0xff] %v321
    %363 = vst [vmem:[#allocation4 + $0x80] sm:$0xff] %v212
    %364 = vst [vmem:[#allocation4 + $0x88] sm:$0xff] %v214
    %365 = vst [vmem:[#allocation4 + $0x90] sm:$0xff] %v325
    %366 = vst [vmem:[#allocation4 + $0x98] sm:$0xff] %v327
    %367 = vst [vmem:[#allocation4 + $0xa0] sm:$0xff] %v218
    %368 = vst [vmem:[#allocation4 + $0xa8] sm:$0xff] %v220
    %369 = vst [vmem:[#allocation4 + $0xb0] sm:$0xff] %v331
    %370 = vst [vmem:[#allocation4 + $0xb8] sm:$0xff] %v333
    %371 = vst [vmem:[#allocation4 + $0xc0] sm:$0xff] %v224
    %372 = vst [vmem:[#allocation4 + $0xc8] sm:$0xff] %v226
    %373 = vst [vmem:[#allocation4 + $0xd0] sm:$0xff] %v337
    %374 = vst [vmem:[#allocation4 + $0xd8] sm:$0xff] %v339
    %375 = vst [vmem:[#allocation4 + $0xe0] sm:$0xff] %v230
    %376 = vst [vmem:[#allocation4 + $0xe8] sm:$0xff] %v232
    %377 = vst [vmem:[#allocation4 + $0xf0] sm:$0xff] %v343
    %378 = vst [vmem:[#allocation4 + $0xf8] sm:$0xff] %v345
    %v379 = vld [vmem:[#allocation2] sm:$0xff]
    %v380 = vld [vmem:[#allocation3] sm:$0xff]
    %s381 = smul.u32 0, 4
    %s382 = smul.addr %s381, 8
    %s383 = scalar_lea.vmem [#allocation4], %s382
    %v384 = vld [vmem:[%s383] sm:$0xff]
    %v385 = vld [vmem:[%s383 + $0x8] sm:$0xff]
    %v386 = vld [vmem:[%s383 + $0x10] sm:$0xff]
    %v387 = vld [vmem:[%s383 + $0x18] sm:$0xff]
    %v388 = vld [vmem:[#allocation5] sm:$0xff]
    %v389 = vld [vmem:[#allocation5 + $0x8] sm:$0xff]
    %v390 = vld [vmem:[#allocation5 + $0x10] sm:$0xff]
    %v391 = vld [vmem:[#allocation5 + $0x18] sm:$0xff]
    %v392 = vld [vmem:[#allocation5 + $0x20] sm:$0xff]
    %v393 = vld [vmem:[#allocation5 + $0x28] sm:$0xff]
    %v394 = vld [vmem:[#allocation5 + $0x30] sm:$0xff]
    %v395 = vld [vmem:[#allocation5 + $0x38] sm:$0xff]
    %v396 = vld [vmem:[#allocation5 + $0x40] sm:$0xff]
    %v397 = vld [vmem:[#allocation5 + $0x48] sm:$0xff]
    %v398 = vld [vmem:[#allocation5 + $0x50] sm:$0xff]
    %v399 = vld [vmem:[#allocation5 + $0x58] sm:$0xff]
    %v400 = vld [vmem:[#allocation5 + $0x60] sm:$0xff]
    %v401 = vld [vmem:[#allocation5 + $0x68] sm:$0xff]
    %v402 = vld [vmem:[#allocation5 + $0x70] sm:$0xff]
    %v403 = vld [vmem:[#allocation5 + $0x78] sm:$0xff]
    %v404 = vld [vmem:[#allocation5 + $0x80] sm:$0xff]
    %v405 = vld [vmem:[#allocation5 + $0x88] sm:$0xff]
    %v406 = vld [vmem:[#allocation5 + $0x90] sm:$0xff]
    %v407 = vld [vmem:[#allocation5 + $0x98] sm:$0xff]
    %v408 = vld [vmem:[#allocation5 + $0xa0] sm:$0xff]
    %v409 = vld [vmem:[#allocation5 + $0xa8] sm:$0xff]
    %v410 = vld [vmem:[#allocation5 + $0xb0] sm:$0xff]
    %v411 = vld [vmem:[#allocation5 + $0xb8] sm:$0xff]
    %v412 = vld [vmem:[#allocation5 + $0xc0] sm:$0xff]
    %v413 = vld [vmem:[#allocation5 + $0xc8] sm:$0xff]
    %v414 = vld [vmem:[#allocation5 + $0xd0] sm:$0xff]
    %v415 = vld [vmem:[#allocation5 + $0xd8] sm:$0xff]
    %v416 = vld [vmem:[#allocation5 + $0xe0] sm:$0xff]
    %v417 = vld [vmem:[#allocation5 + $0xe8] sm:$0xff]
    %v418 = vld [vmem:[#allocation5 + $0xf0] sm:$0xff]
    %v419 = vld [vmem:[#allocation5 + $0xf8] sm:$0xff]
    %v420 = vld [vmem:[#allocation5 + $0x100] sm:$0xff]
    %v421 = vld [vmem:[#allocation5 + $0x108] sm:$0xff]
    %v422 = vld [vmem:[#allocation5 + $0x110] sm:$0xff]
    %v423 = vld [vmem:[#allocation5 + $0x118] sm:$0xff]
    %v424 = vld [vmem:[#allocation5 + $0x120] sm:$0xff]
    %v425 = vld [vmem:[#allocation5 + $0x128] sm:$0xff]
    %v426 = vld [vmem:[#allocation5 + $0x130] sm:$0xff]
    %v427 = vld [vmem:[#allocation5 + $0x138] sm:$0xff]
    %v428 = vld [vmem:[#allocation5 + $0x140] sm:$0xff]
    %v429 = vld [vmem:[#allocation5 + $0x148] sm:$0xff]
    %v430 = vld [vmem:[#allocation5 + $0x150] sm:$0xff]
    %v431 = vld [vmem:[#allocation5 + $0x158] sm:$0xff]
    %v432 = vld [vmem:[#allocation5 + $0x160] sm:$0xff]
    %v433 = vld [vmem:[#allocation5 + $0x168] sm:$0xff]
    %v434 = vld [vmem:[#allocation5 + $0x170] sm:$0xff]
    %v435 = vld [vmem:[#allocation5 + $0x178] sm:$0xff]
    %v436 = vld [vmem:[#allocation5 + $0x180] sm:$0xff]
    %v437 = vld [vmem:[#allocation5 + $0x188] sm:$0xff]
    %v438 = vld [vmem:[#allocation5 + $0x190] sm:$0xff]
    %v439 = vld [vmem:[#allocation5 + $0x198] sm:$0xff]
    %v440 = vld [vmem:[#allocation5 + $0x1a0] sm:$0xff]
    %v441 = vld [vmem:[#allocation5 + $0x1a8] sm:$0xff]
    %v442 = vld [vmem:[#allocation5 + $0x1b0] sm:$0xff]
    %v443 = vld [vmem:[#allocation5 + $0x1b8] sm:$0xff]
    %v444 = vld [vmem:[#allocation5 + $0x1c0] sm:$0xff]
    %v445 = vld [vmem:[#allocation5 + $0x1c8] sm:$0xff]
    %v446 = vld [vmem:[#allocation5 + $0x1d0] sm:$0xff]
    %v447 = vld [vmem:[#allocation5 + $0x1d8] sm:$0xff]
    %v448 = vld [vmem:[#allocation5 + $0x1e0] sm:$0xff]
    %v449 = vld [vmem:[#allocation5 + $0x1e8] sm:$0xff]
    %v450 = vld [vmem:[#allocation5 + $0x1f0] sm:$0xff]
    %v451 = vld [vmem:[#allocation5 + $0x1f8] sm:$0xff]
    %452 = vmatprep.subr.mxu0 %v449
    %453 = vmatpush1.msra.mxu0 %v448
    %454 = vmatprep.subr.mxu0 %v445
    %455 = vmatpush1.msra.mxu0 %v444
    %456 = vmatprep.subr.mxu0 %v441
    %457 = vmatpush1.msra.mxu0 %v440
    %458 = vmatprep.subr.mxu0 %v437
    %459 = vmatpush1.msra.mxu0 %v436
    %460 = vmatprep.subr.mxu0 %v433
    %461 = vmatpush1.msra.mxu0 %v432
    %462 = vmatprep.subr.mxu0 %v429
    %463 = vmatpush1.msra.mxu0 %v428
    %464 = vmatprep.subr.mxu0 %v425
    %465 = vmatpush1.msra.mxu0 %v424
    %466 = vmatprep.subr.mxu0 %v421
    %467 = vmatpush1.msra.mxu0 %v420
    %468 = vmatprep.subr.mxu0 %v417
    %469 = vmatpush1.msra.mxu0 %v416
    %470 = vmatprep.subr.mxu0 %v413
    %471 = vmatpush1.msra.mxu0 %v412
    %472 = vmatprep.subr.mxu0 %v409
    %473 = vmatpush1.msra.mxu0 %v408
    %474 = vmatprep.subr.mxu0 %v405
    %475 = vmatpush1.msra.mxu0 %v404
    %476 = vmatprep.subr.mxu0 %v401
    %477 = vmatpush1.msra.mxu0 %v400
    %478 = vmatprep.subr.mxu0 %v397
    %479 = vmatpush1.msra.mxu0 %v396
    %480 = vmatprep.subr.mxu0 %v393
    %481 = vmatpush1.msra.mxu0 %v392
    %482 = vmatprep.subr.mxu0 %v389
    %483 = vmatpush1.msra.mxu0 %v388
    %484 = vmatprep.subr.mxu0 0.0
    %485 = vmatpush2.msra.mxu0 0.0
    %486 = vmatprep.subr.mxu0 0.0
    %487 = vmatpush2.msra.mxu0 0.0
    %488 = vmatprep.subr.mxu0 0.0
    %489 = vmatpush2.msra.mxu0 0.0
    %490 = vmatprep.subr.mxu0 0.0
    %491 = vmatpush2.msra.mxu0 0.0
    %492 = vmatprep.subr.mxu0 0.0
    %493 = vmatpush2.msra.mxu0 0.0
    %494 = vmatprep.subr.mxu0 0.0
    %495 = vmatpush2.msra.mxu0 0.0
    %496 = vmatprep.subr.mxu0 0.0
    %497 = vmatpush2.msra.mxu0 0.0
    %498 = vmatprep.subr.mxu0 0.0
    %499 = vmatpush2.msra.mxu0 0.0
    %500 = vmatprep.subr.mxu0 0.0
    %501 = vmatpush2.msra.mxu0 0.0
    %502 = vmatprep.subr.mxu0 0.0
    %503 = vmatpush2.msra.mxu0 0.0
    %504 = vmatprep.subr.mxu0 0.0
    %505 = vmatpush2.msra.mxu0 0.0
    %506 = vmatprep.subr.mxu0 0.0
    %507 = vmatpush2.msra.mxu0 0.0
    %508 = vmatprep.subr.mxu0 0.0
    %509 = vmatpush2.msra.mxu0 0.0
    %510 = vmatprep.subr.mxu0 0.0
    %511 = vmatpush2.msra.mxu0 0.0
    %512 = vmatprep.subr.mxu0 0.0
    %513 = vmatpush2.msra.mxu0 0.0
    %514 = vmatprep.subr.mxu0 0.0
    %515 = vmatpush2.msra.mxu0 0.0
    %516 = vmatprep.mubr.f32.mxu0 0.0
    %517 = vmatmul.mubr.f32.gmra.mxu0 %v379
    %v518 = vpop.f32.mrf.mxu0
    %v519 = vadd.f32 0.0, %v518
    %v520 = vpop.f32.mrf.mxu0
    %v521 = vadd.f32 0.0, %v520
    %522 = vdwg.mxu0
    %523 = vmatprep.subr.mxu0 %v451
    %524 = vmatpush1.msra.mxu0 %v450
    %525 = vmatprep.subr.mxu0 %v447
    %526 = vmatpush1.msra.mxu0 %v446
    %527 = vmatprep.subr.mxu0 %v443
    %528 = vmatpush1.msra.mxu0 %v442
    %529 = vmatprep.subr.mxu0 %v439
    %530 = vmatpush1.msra.mxu0 %v438
    %531 = vmatprep.subr.mxu0 %v435
    %532 = vmatpush1.msra.mxu0 %v434
    %533 = vmatprep.subr.mxu0 %v431
    %534 = vmatpush1.msra.mxu0 %v430
    %535 = vmatprep.subr.mxu0 %v427
    %536 = vmatpush1.msra.mxu0 %v426
    %537 = vmatprep.subr.mxu0 %v423
    %538 = vmatpush1.msra.mxu0 %v422
    %539 = vmatprep.subr.mxu0 %v419
    %540 = vmatpush1.msra.mxu0 %v418
    %541 = vmatprep.subr.mxu0 %v415
    %542 = vmatpush1.msra.mxu0 %v414
    %543 = vmatprep.subr.mxu0 %v411
    %544 = vmatpush1.msra.mxu0 %v410
    %545 = vmatprep.subr.mxu0 %v407
    %546 = vmatpush1.msra.mxu0 %v406
    %547 = vmatprep.subr.mxu0 %v403
    %548 = vmatpush1.msra.mxu0 %v402
    %549 = vmatprep.subr.mxu0 %v399
    %550 = vmatpush1.msra.mxu0 %v398
    %551 = vmatprep.subr.mxu0 %v395
    %552 = vmatpush1.msra.mxu0 %v394
    %553 = vmatprep.subr.mxu0 %v391
    %554 = vmatpush1.msra.mxu0 %v390
    %555 = vmatprep.subr.mxu0 0.0
    %556 = vmatpush2.msra.mxu0 0.0
    %557 = vmatprep.subr.mxu0 0.0
    %558 = vmatpush2.msra.mxu0 0.0
    %559 = vmatprep.subr.mxu0 0.0
    %560 = vmatpush2.msra.mxu0 0.0
    %561 = vmatprep.subr.mxu0 0.0
    %562 = vmatpush2.msra.mxu0 0.0
    %563 = vmatprep.subr.mxu0 0.0
    %564 = vmatpush2.msra.mxu0 0.0
    %565 = vmatprep.subr.mxu0 0.0
    %566 = vmatpush2.msra.mxu0 0.0
    %567 = vmatprep.subr.mxu0 0.0
    %568 = vmatpush2.msra.mxu0 0.0
    %569 = vmatprep.subr.mxu0 0.0
    %570 = vmatpush2.msra.mxu0 0.0
    %571 = vmatprep.subr.mxu0 0.0
    %572 = vmatpush2.msra.mxu0 0.0
    %573 = vmatprep.subr.mxu0 0.0
    %574 = vmatpush2.msra.mxu0 0.0
    %575 = vmatprep.subr.mxu0 0.0
    %576 = vmatpush2.msra.mxu0 0.0
    %577 = vmatprep.subr.mxu0 0.0
    %578 = vmatpush2.msra.mxu0 0.0
    %579 = vmatprep.subr.mxu0 0.0
    %580 = vmatpush2.msra.mxu0 0.0
    %581 = vmatprep.subr.mxu0 0.0
    %582 = vmatpush2.msra.mxu0 0.0
    %583 = vmatprep.subr.mxu0 0.0
    %584 = vmatpush2.msra.mxu0 0.0
    %585 = vmatprep.subr.mxu0 0.0
    %586 = vmatpush2.msra.mxu0 0.0
    %587 = vmatprep.mubr.f32.mxu0 0.0
    %588 = vmatmul.mubr.f32.gmra.mxu0 %v379
    %v589 = vpop.f32.mrf.mxu0
    %v590 = vadd.f32 0.0, %v589
    %v591 = vpop.f32.mrf.mxu0
    %v592 = vadd.f32 0.0, %v591
    %593 = vdwg.mxu0
    %v594 = vadd.f32 %v384, %v519
    %v595 = vadd.f32 %v385, %v521
    %v596 = vadd.f32 %v386, %v590
    %v597 = vadd.f32 %v387, %v592
    %v598 = vmul.f32 %v594, 0.5
    %v599 = vtanh.pop %v598
    %v600 = vmul.f32 %v599, 0.5
    %v601 = vadd.f32 %v600, 0.5
    %v602 = vmul.f32 %v595, 0.5
    %v603 = vtanh.pop %v602
    %v604 = vmul.f32 %v603, 0.5
    %v605 = vadd.f32 %v604, 0.5
    %v606 = vtanh.pop %v596
    %v607 = vmul.f32 %v597, 0.5
    %v608 = vtanh.pop %v607
    %v609 = vmul.f32 %v608, 0.5
    %v610 = vadd.f32 %v609, 0.5
    %v611 = vmul.f32 %v605, %v380
    %v612 = vmul.f32 %v601, %v606
    %v613 = vadd.f32 %v611, %v612
    %v614 = vtanh.pop %v613
    %v615 = vmul.f32 %v610, %v614
    %s616 = smul.u32 1, 4
    %s617 = smul.addr %s616, 8
    %s618 = scalar_lea.vmem [#allocation4], %s617
    %v619 = vld [vmem:[%s618] sm:$0xff]
    %v620 = vld [vmem:[%s618 + $0x8] sm:$0xff]
    %v621 = vld [vmem:[%s618 + $0x10] sm:$0xff]
    %v622 = vld [vmem:[%s618 + $0x18] sm:$0xff]
    %623 = vmatprep.subr.mxu0 %v449
    %624 = vmatpush1.msra.mxu0 %v448
    %625 = vmatprep.subr.mxu0 %v445
    %626 = vmatpush1.msra.mxu0 %v444
    %627 = vmatprep.subr.mxu0 %v441
    %628 = vmatpush1.msra.mxu0 %v440
    %629 = vmatprep.subr.mxu0 %v437
    %630 = vmatpush1.msra.mxu0 %v436
    %631 = vmatprep.subr.mxu0 %v433
    %632 = vmatpush1.msra.mxu0 %v432
    %633 = vmatprep.subr.mxu0 %v429
    %634 = vmatpush1.msra.mxu0 %v428
    %635 = vmatprep.subr.mxu0 %v425
    %636 = vmatpush1.msra.mxu0 %v424
    %637 = vmatprep.subr.mxu0 %v421
    %638 = vmatpush1.msra.mxu0 %v420
    %639 = vmatprep.subr.mxu0 %v417
    %640 = vmatpush1.msra.mxu0 %v416
    %641 = vmatprep.subr.mxu0 %v413
    %642 = vmatpush1.msra.mxu0 %v412
    %643 = vmatprep.subr.mxu0 %v409
    %644 = vmatpush1.msra.mxu0 %v408
    %645 = vmatprep.subr.mxu0 %v405
    %646 = vmatpush1.msra.mxu0 %v404
    %647 = vmatprep.subr.mxu0 %v401
    %648 = vmatpush1.msra.mxu0 %v400
    %649 = vmatprep.subr.mxu0 %v397
    %650 = vmatpush1.msra.mxu0 %v396
    %651 = vmatprep.subr.mxu0 %v393
    %652 = vmatpush1.msra.mxu0 %v392
    %653 = vmatprep.subr.mxu0 %v389
    %654 = vmatpush1.msra.mxu0 %v388
    %655 = vmatprep.subr.mxu0 0.0
    %656 = vmatpush2.msra.mxu0 0.0
    %657 = vmatprep.subr.mxu0 0.0
    %658 = vmatpush2.msra.mxu0 0.0
    %659 = vmatprep.subr.mxu0 0.0
    %660 = vmatpush2.msra.mxu0 0.0
    %661 = vmatprep.subr.mxu0 0.0
    %662 = vmatpush2.msra.mxu0 0.0
    %663 = vmatprep.subr.mxu0 0.0
    %664 = vmatpush2.msra.mxu0 0.0
    %665 = vmatprep.subr.mxu0 0.0
    %666 = vmatpush2.msra.mxu0 0.0
    %667 = vmatprep.subr.mxu0 0.0
    %668 = vmatpush2.msra.mxu0 0.0
    %669 = vmatprep.subr.mxu0 0.0
    %670 = vmatpush2.msra.mxu0 0.0
    %671 = vmatprep.subr.mxu0 0.0
    %672 = vmatpush2.msra.mxu0 0.0
    %673 = vmatprep.subr.mxu0 0.0
    %674 = vmatpush2.msra.mxu0 0.0
    %675 = vmatprep.subr.mxu0 0.0
    %676 = vmatpush2.msra.mxu0 0.0
    %677 = vmatprep.subr.mxu0 0.0
    %678 = vmatpush2.msra.mxu0 0.0
    %679 = vmatprep.subr.mxu0 0.0
    %680 = vmatpush2.msra.mxu0 0.0
    %681 = vmatprep.subr.mxu0 0.0
    %682 = vmatpush2.msra.mxu0 0.0
    %683 = vmatprep.subr.mxu0 0.0
    %684 = vmatpush2.msra.mxu0 0.0
    %685 = vmatprep.subr.mxu0 0.0
    %686 = vmatpush2.msra.mxu0 0.0
    %687 = vmatprep.mubr.f32.mxu0 0.0
    %688 = vmatmul.mubr.f32.gmra.mxu0 %v615
    %v689 = vpop.f32.mrf.mxu0
    %v690 = vadd.f32 0.0, %v689
    %v691 = vpop.f32.mrf.mxu0
    %v692 = vadd.f32 0.0, %v691
    %693 = vdwg.mxu0
    %694 = vmatprep.subr.mxu0 %v451
    %695 = vmatpush1.msra.mxu0 %v450
    %696 = vmatprep.subr.mxu0 %v447
    %697 = vmatpush1.msra.mxu0 %v446
    %698 = vmatprep.subr.mxu0 %v443
    %699 = vmatpush1.msra.mxu0 %v442
    %700 = vmatprep.subr.mxu0 %v439
    %701 = vmatpush1.msra.mxu0 %v438
    %702 = vmatprep.subr.mxu0 %v435
    %703 = vmatpush1.msra.mxu0 %v434
    %704 = vmatprep.subr.mxu0 %v431
    %705 = vmatpush1.msra.mxu0 %v430
    %706 = vmatprep.subr.mxu0 %v427
    %707 = vmatpush1.msra.mxu0 %v426
    %708 = vmatprep.subr.mxu0 %v423
    %709 = vmatpush1.msra.mxu0 %v422
    %710 = vmatprep.subr.mxu0 %v419
    %711 = vmatpush1.msra.mxu0 %v418
    %712 = vmatprep.subr.mxu0 %v415
    %713 = vmatpush1.msra.mxu0 %v414
    %714 = vmatprep.subr.mxu0 %v411
    %715 = vmatpush1.msra.mxu0 %v410
    %716 = vmatprep.subr.mxu0 %v407
    %717 = vmatpush1.msra.mxu0 %v406
    %718 = vmatprep.subr.mxu0 %v403
    %719 = vmatpush1.msra.mxu0 %v402
    %720 = vmatprep.subr.mxu0 %v399
    %721 = vmatpush1.msra.mxu0 %v398
    %722 = vmatprep.subr.mxu0 %v395
    %723 = vmatpush1.msra.mxu0 %v394
    %724 = vmatprep.subr.mxu0 %v391
    %725 = vmatpush1.msra.mxu0 %v390
    %726 = vmatprep.subr.mxu0 0.0
    %727 = vmatpush2.msra.mxu0 0.0
    %728 = vmatprep.subr.mxu0 0.0
    %729 = vmatpush2.msra.mxu0 0.0
    %730 = vmatprep.subr.mxu0 0.0
    %731 = vmatpush2.msra.mxu0 0.0
    %732 = vmatprep.subr.mxu0 0.0
    %733 = vmatpush2.msra.mxu0 0.0
    %734 = vmatprep.subr.mxu0 0.0
    %735 = vmatpush2.msra.mxu0 0.0
    %736 = vmatprep.subr.mxu0 0.0
    %737 = vmatpush2.msra.mxu0 0.0
    %738 = vmatprep.subr.mxu0 0.0
    %739 = vmatpush2.msra.mxu0 0.0
    %740 = vmatprep.subr.mxu0 0.0
    %741 = vmatpush2.msra.mxu0 0.0
    %742 = vmatprep.subr.mxu0 0.0
    %743 = vmatpush2.msra.mxu0 0.0
    %744 = vmatprep.subr.mxu0 0.0
    %745 = vmatpush2.msra.mxu0 0.0
    %746 = vmatprep.subr.mxu0 0.0
    %747 = vmatpush2.msra.mxu0 0.0
    %748 = vmatprep.subr.mxu0 0.0
    %749 = vmatpush2.msra.mxu0 0.0
    %750 = vmatprep.subr.mxu0 0.0
    %751 = vmatpush2.msra.mxu0 0.0
    %752 = vmatprep.subr.mxu0 0.0
    %753 = vmatpush2.msra.mxu0 0.0
    %754 = vmatprep.subr.mxu0 0.0
    %755 = vmatpush2.msra.mxu0 0.0
    %756 = vmatprep.subr.mxu0 0.0
    %757 = vmatpush2.msra.mxu0 0.0
    %758 = vmatprep.mubr.f32.mxu0 0.0
    %759 = vmatmul.mubr.f32.gmra.mxu0 %v615
    %v760 = vpop.f32.mrf.mxu0
    %v761 = vadd.f32 0.0, %v760
    %v762 = vpop.f32.mrf.mxu0
    %v763 = vadd.f32 0.0, %v762
    %764 = vdwg.mxu0
    %v765 = vadd.f32 %v619, %v690
    %v766 = vadd.f32 %v620, %v692
    %v767 = vadd.f32 %v621, %v761
    %v768 = vadd.f32 %v622, %v763
    %v769 = vmul.f32 %v765, 0.5
    %v770 = vtanh.pop %v769
    %v771 = vmul.f32 %v770, 0.5
    %v772 = vadd.f32 %v771, 0.5
    %v773 = vmul.f32 %v766, 0.5
    %v774 = vtanh.pop %v773
    %v775 = vmul.f32 %v774, 0.5
    %v776 = vadd.f32 %v775, 0.5
    %v777 = vtanh.pop %v767
    %v778 = vmul.f32 %v768, 0.5
    %v779 = vtanh.pop %v778
    %v780 = vmul.f32 %v779, 0.5
    %v781 = vadd.f32 %v780, 0.5
    %v782 = vmul.f32 %v776, %v613
    %v783 = vmul.f32 %v772, %v777
    %v784 = vadd.f32 %v782, %v783
    %v785 = vtanh.pop %v784
    %v786 = vmul.f32 %v781, %v785
    %s787 = smul.u32 2, 4
    %s788 = smul.addr %s787, 8
    %s789 = scalar_lea.vmem [#allocation4], %s788
    %v790 = vld [vmem:[%s789] sm:$0xff]
    %v791 = vld [vmem:[%s789 + $0x8] sm:$0xff]
    %v792 = vld [vmem:[%s789 + $0x10] sm:$0xff]
    %v793 = vld [vmem:[%s789 + $0x18] sm:$0xff]
    %794 = vmatprep.subr.mxu0 %v449
    %795 = vmatpush1.msra.mxu0 %v448
    %796 = vmatprep.subr.mxu0 %v445
    %797 = vmatpush1.msra.mxu0 %v444
    %798 = vmatprep.subr.mxu0 %v441
    %799 = vmatpush1.msra.mxu0 %v440
    %800 = vmatprep.subr.mxu0 %v437
    %801 = vmatpush1.msra.mxu0 %v436
    %802 = vmatprep.subr.mxu0 %v433
    %803 = vmatpush1.msra.mxu0 %v432
    %804 = vmatprep.subr.mxu0 %v429
    %805 = vmatpush1.msra.mxu0 %v428
    %806 = vmatprep.subr.mxu0 %v425
    %807 = vmatpush1.msra.mxu0 %v424
    %808 = vmatprep.subr.mxu0 %v421
    %809 = vmatpush1.msra.mxu0 %v420
    %810 = vmatprep.subr.mxu0 %v417
    %811 = vmatpush1.msra.mxu0 %v416
    %812 = vmatprep.subr.mxu0 %v413
    %813 = vmatpush1.msra.mxu0 %v412
    %814 = vmatprep.subr.mxu0 %v409
    %815 = vmatpush1.msra.mxu0 %v408
    %816 = vmatprep.subr.mxu0 %v405
    %817 = vmatpush1.msra.mxu0 %v404
    %818 = vmatprep.subr.mxu0 %v401
    %819 = vmatpush1.msra.mxu0 %v400
    %820 = vmatprep.subr.mxu0 %v397
    %821 = vmatpush1.msra.mxu0 %v396
    %822 = vmatprep.subr.mxu0 %v393
    %823 = vmatpush1.msra.mxu0 %v392
    %824 = vmatprep.subr.mxu0 %v389
    %825 = vmatpush1.msra.mxu0 %v388
    %826 = vmatprep.subr.mxu0 0.0
    %827 = vmatpush2.msra.mxu0 0.0
    %828 = vmatprep.subr.mxu0 0.0
    %829 = vmatpush2.msra.mxu0 0.0
    %830 = vmatprep.subr.mxu0 0.0
    %831 = vmatpush2.msra.mxu0 0.0
    %832 = vmatprep.subr.mxu0 0.0
    %833 = vmatpush2.msra.mxu0 0.0
    %834 = vmatprep.subr.mxu0 0.0
    %835 = vmatpush2.msra.mxu0 0.0
    %836 = vmatprep.subr.mxu0 0.0
    %837 = vmatpush2.msra.mxu0 0.0
    %838 = vmatprep.subr.mxu0 0.0
    %839 = vmatpush2.msra.mxu0 0.0
    %840 = vmatprep.subr.mxu0 0.0
    %841 = vmatpush2.msra.mxu0 0.0
    %842 = vmatprep.subr.mxu0 0.0
    %843 = vmatpush2.msra.mxu0 0.0
    %844 = vmatprep.subr.mxu0 0.0
    %845 = vmatpush2.msra.mxu0 0.0
    %846 = vmatprep.subr.mxu0 0.0
    %847 = vmatpush2.msra.mxu0 0.0
    %848 = vmatprep.subr.mxu0 0.0
    %849 = vmatpush2.msra.mxu0 0.0
    %850 = vmatprep.subr.mxu0 0.0
    %851 = vmatpush2.msra.mxu0 0.0
    %852 = vmatprep.subr.mxu0 0.0
    %853 = vmatpush2.msra.mxu0 0.0
    %854 = vmatprep.subr.mxu0 0.0
    %855 = vmatpush2.msra.mxu0 0.0
    %856 = vmatprep.subr.mxu0 0.0
    %857 = vmatpush2.msra.mxu0 0.0
    %858 = vmatprep.mubr.f32.mxu0 0.0
    %859 = vmatmul.mubr.f32.gmra.mxu0 %v786
    %v860 = vpop.f32.mrf.mxu0
    %v861 = vadd.f32 0.0, %v860
    %v862 = vpop.f32.mrf.mxu0
    %v863 = vadd.f32 0.0, %v862
    %864 = vdwg.mxu0
    %865 = vmatprep.subr.mxu0 %v451
    %866 = vmatpush1.msra.mxu0 %v450
    %867 = vmatprep.subr.mxu0 %v447
    %868 = vmatpush1.msra.mxu0 %v446
    %869 = vmatprep.subr.mxu0 %v443
    %870 = vmatpush1.msra.mxu0 %v442
    %871 = vmatprep.subr.mxu0 %v439
    %872 = vmatpush1.msra.mxu0 %v438
    %873 = vmatprep.subr.mxu0 %v435
    %874 = vmatpush1.msra.mxu0 %v434
    %875 = vmatprep.subr.mxu0 %v431
    %876 = vmatpush1.msra.mxu0 %v430
    %877 = vmatprep.subr.mxu0 %v427
    %878 = vmatpush1.msra.mxu0 %v426
    %879 = vmatprep.subr.mxu0 %v423
    %880 = vmatpush1.msra.mxu0 %v422
    %881 = vmatprep.subr.mxu0 %v419
    %882 = vmatpush1.msra.mxu0 %v418
    %883 = vmatprep.subr.mxu0 %v415
    %884 = vmatpush1.msra.mxu0 %v414
    %885 = vmatprep.subr.mxu0 %v411
    %886 = vmatpush1.msra.mxu0 %v410
    %887 = vmatprep.subr.mxu0 %v407
    %888 = vmatpush1.msra.mxu0 %v406
    %889 = vmatprep.subr.mxu0 %v403
    %890 = vmatpush1.msra.mxu0 %v402
    %891 = vmatprep.subr.mxu0 %v399
    %892 = vmatpush1.msra.mxu0 %v398
    %893 = vmatprep.subr.mxu0 %v395
    %894 = vmatpush1.msra.mxu0 %v394
    %895 = vmatprep.subr.mxu0 %v391
    %896 = vmatpush1.msra.mxu0 %v390
    %897 = vmatprep.subr.mxu0 0.0
    %898 = vmatpush2.msra.mxu0 0.0
    %899 = vmatprep.subr.mxu0 0.0
    %900 = vmatpush2.msra.mxu0 0.0
    %901 = vmatprep.subr.mxu0 0.0
    %902 = vmatpush2.msra.mxu0 0.0
    %903 = vmatprep.subr.mxu0 0.0
    %904 = vmatpush2.msra.mxu0 0.0
    %905 = vmatprep.subr.mxu0 0.0
    %906 = vmatpush2.msra.mxu0 0.0
    %907 = vmatprep.subr.mxu0 0.0
    %908 = vmatpush2.msra.mxu0 0.0
    %909 = vmatprep.subr.mxu0 0.0
    %910 = vmatpush2.msra.mxu0 0.0
    %911 = vmatprep.subr.mxu0 0.0
    %912 = vmatpush2.msra.mxu0 0.0
    %913 = vmatprep.subr.mxu0 0.0
    %914 = vmatpush2.msra.mxu0 0.0
    %915 = vmatprep.subr.mxu0 0.0
    %916 = vmatpush2.msra.mxu0 0.0
    %917 = vmatprep.subr.mxu0 0.0
    %918 = vmatpush2.msra.mxu0 0.0
    %919 = vmatprep.subr.mxu0 0.0
    %920 = vmatpush2.msra.mxu0 0.0
    %921 = vmatprep.subr.mxu0 0.0
    %922 = vmatpush2.msra.mxu0 0.0
    %923 = vmatprep.subr.mxu0 0.0
    %924 = vmatpush2.msra.mxu0 0.0
    %925 = vmatprep.subr.mxu0 0.0
    %926 = vmatpush2.msra.mxu0 0.0
    %927 = vmatprep.subr.mxu0 0.0
    %928 = vmatpush2.msra.mxu0 0.0
    %929 = vmatprep.mubr.f32.mxu0 0.0
    %930 = vmatmul.mubr.f32.gmra.mxu0 %v786
    %v931 = vpop.f32.mrf.mxu0
    %v932 = vadd.f32 0.0, %v931
    %v933 = vpop.f32.mrf.mxu0
    %v934 = vadd.f32 0.0, %v933
    %935 = vdwg.mxu0
    %v936 = vadd.f32 %v790, %v861
    %v937 = vadd.f32 %v791, %v863
    %v938 = vadd.f32 %v792, %v932
    %v939 = vadd.f32 %v793, %v934
    %v940 = vmul.f32 %v936, 0.5
    %v941 = vtanh.pop %v940
    %v942 = vmul.f32 %v941, 0.5
    %v943 = vadd.f32 %v942, 0.5
    %v944 = vmul.f32 %v937, 0.5
    %v945 = vtanh.pop %v944
    %v946 = vmul.f32 %v945, 0.5
    %v947 = vadd.f32 %v946, 0.5
    %v948 = vtanh.pop %v938
    %v949 = vmul.f32 %v939, 0.5
    %v950 = vtanh.pop %v949
    %v951 = vmul.f32 %v950, 0.5
    %v952 = vadd.f32 %v951, 0.5
    %v953 = vmul.f32 %v947, %v784
    %v954 = vmul.f32 %v943, %v948
    %v955 = vadd.f32 %v953, %v954
    %v956 = vtanh.pop %v955
    %v957 = vmul.f32 %v952, %v956
    %s958 = smul.u32 3, 4
    %s959 = smul.addr %s958, 8
    %s960 = scalar_lea.vmem [#allocation4], %s959
    %v961 = vld [vmem:[%s960] sm:$0xff]
    %v962 = vld [vmem:[%s960 + $0x8] sm:$0xff]
    %v963 = vld [vmem:[%s960 + $0x10] sm:$0xff]
    %v964 = vld [vmem:[%s960 + $0x18] sm:$0xff]
    %965 = vmatprep.subr.mxu0 %v449
    %966 = vmatpush1.msra.mxu0 %v448
    %967 = vmatprep.subr.mxu0 %v445
    %968 = vmatpush1.msra.mxu0 %v444
    %969 = vmatprep.subr.mxu0 %v441
    %970 = vmatpush1.msra.mxu0 %v440
    %971 = vmatprep.subr.mxu0 %v437
    %972 = vmatpush1.msra.mxu0 %v436
    %973 = vmatprep.subr.mxu0 %v433
    %974 = vmatpush1.msra.mxu0 %v432
    %975 = vmatprep.subr.mxu0 %v429
    %976 = vmatpush1.msra.mxu0 %v428
    %977 = vmatprep.subr.mxu0 %v425
    %978 = vmatpush1.msra.mxu0 %v424
    %979 = vmatprep.subr.mxu0 %v421
    %980 = vmatpush1.msra.mxu0 %v420
    %981 = vmatprep.subr.mxu0 %v417
    %982 = vmatpush1.msra.mxu0 %v416
    %983 = vmatprep.subr.mxu0 %v413
    %984 = vmatpush1.msra.mxu0 %v412
    %985 = vmatprep.subr.mxu0 %v409
    %986 = vmatpush1.msra.mxu0 %v408
    %987 = vmatprep.subr.mxu0 %v405
    %988 = vmatpush1.msra.mxu0 %v404
    %989 = vmatprep.subr.mxu0 %v401
    %990 = vmatpush1.msra.mxu0 %v400
    %991 = vmatprep.subr.mxu0 %v397
    %992 = vmatpush1.msra.mxu0 %v396
    %993 = vmatprep.subr.mxu0 %v393
    %994 = vmatpush1.msra.mxu0 %v392
    %995 = vmatprep.subr.mxu0 %v389
    %996 = vmatpush1.msra.mxu0 %v388
    %997 = vmatprep.subr.mxu0 0.0
    %998 = vmatpush2.msra.mxu0 0.0
    %999 = vmatprep.subr.mxu0 0.0
    %1000 = vmatpush2.msra.mxu0 0.0
    %1001 = vmatprep.subr.mxu0 0.0
    %1002 = vmatpush2.msra.mxu0 0.0
    %1003 = vmatprep.subr.mxu0 0.0
    %1004 = vmatpush2.msra.mxu0 0.0
    %1005 = vmatprep.subr.mxu0 0.0
    %1006 = vmatpush2.msra.mxu0 0.0
    %1007 = vmatprep.subr.mxu0 0.0
    %1008 = vmatpush2.msra.mxu0 0.0
    %1009 = vmatprep.subr.mxu0 0.0
    %1010 = vmatpush2.msra.mxu0 0.0
    %1011 = vmatprep.subr.mxu0 0.0
    %1012 = vmatpush2.msra.mxu0 0.0
    %1013 = vmatprep.subr.mxu0 0.0
    %1014 = vmatpush2.msra.mxu0 0.0
    %1015 = vmatprep.subr.mxu0 0.0
    %1016 = vmatpush2.msra.mxu0 0.0
    %1017 = vmatprep.subr.mxu0 0.0
    %1018 = vmatpush2.msra.mxu0 0.0
    %1019 = vmatprep.subr.mxu0 0.0
    %1020 = vmatpush2.msra.mxu0 0.0
    %1021 = vmatprep.subr.mxu0 0.0
    %1022 = vmatpush2.msra.mxu0 0.0
    %1023 = vmatprep.subr.mxu0 0.0
    %1024 = vmatpush2.msra.mxu0 0.0
    %1025 = vmatprep.subr.mxu0 0.0
    %1026 = vmatpush2.msra.mxu0 0.0
    %1027 = vmatprep.subr.mxu0 0.0
    %1028 = vmatpush2.msra.mxu0 0.0
    %1029 = vmatprep.mubr.f32.mxu0 0.0
    %1030 = vmatmul.mubr.f32.gmra.mxu0 %v957
    %v1031 = vpop.f32.mrf.mxu0
    %v1032 = vadd.f32 0.0, %v1031
    %v1033 = vpop.f32.mrf.mxu0
    %v1034 = vadd.f32 0.0, %v1033
    %1035 = vdwg.mxu0
    %1036 = vmatprep.subr.mxu0 %v451
    %1037 = vmatpush1.msra.mxu0 %v450
    %1038 = vmatprep.subr.mxu0 %v447
    %1039 = vmatpush1.msra.mxu0 %v446
    %1040 = vmatprep.subr.mxu0 %v443
    %1041 = vmatpush1.msra.mxu0 %v442
    %1042 = vmatprep.subr.mxu0 %v439
    %1043 = vmatpush1.msra.mxu0 %v438
    %1044 = vmatprep.subr.mxu0 %v435
    %1045 = vmatpush1.msra.mxu0 %v434
    %1046 = vmatprep.subr.mxu0 %v431
    %1047 = vmatpush1.msra.mxu0 %v430
    %1048 = vmatprep.subr.mxu0 %v427
    %1049 = vmatpush1.msra.mxu0 %v426
    %1050 = vmatprep.subr.mxu0 %v423
    %1051 = vmatpush1.msra.mxu0 %v422
    %1052 = vmatprep.subr.mxu0 %v419
    %1053 = vmatpush1.msra.mxu0 %v418
    %1054 = vmatprep.subr.mxu0 %v415
    %1055 = vmatpush1.msra.mxu0 %v414
    %1056 = vmatprep.subr.mxu0 %v411
    %1057 = vmatpush1.msra.mxu0 %v410
    %1058 = vmatprep.subr.mxu0 %v407
    %1059 = vmatpush1.msra.mxu0 %v406
    %1060 = vmatprep.subr.mxu0 %v403
    %1061 = vmatpush1.msra.mxu0 %v402
    %1062 = vmatprep.subr.mxu0 %v399
    %1063 = vmatpush1.msra.mxu0 %v398
    %1064 = vmatprep.subr.mxu0 %v395
    %1065 = vmatpush1.msra.mxu0 %v394
    %1066 = vmatprep.subr.mxu0 %v391
    %1067 = vmatpush1.msra.mxu0 %v390
    %1068 = vmatprep.subr.mxu0 0.0
    %1069 = vmatpush2.msra.mxu0 0.0
    %1070 = vmatprep.subr.mxu0 0.0
    %1071 = vmatpush2.msra.mxu0 0.0
    %1072 = vmatprep.subr.mxu0 0.0
    %1073 = vmatpush2.msra.mxu0 0.0
    %1074 = vmatprep.subr.mxu0 0.0
    %1075 = vmatpush2.msra.mxu0 0.0
    %1076 = vmatprep.subr.mxu0 0.0
    %1077 = vmatpush2.msra.mxu0 0.0
    %1078 = vmatprep.subr.mxu0 0.0
    %1079 = vmatpush2.msra.mxu0 0.0
    %1080 = vmatprep.subr.mxu0 0.0
    %1081 = vmatpush2.msra.mxu0 0.0
    %1082 = vmatprep.subr.mxu0 0.0
    %1083 = vmatpush2.msra.mxu0 0.0
    %1084 = vmatprep.subr.mxu0 0.0
    %1085 = vmatpush2.msra.mxu0 0.0
    %1086 = vmatprep.subr.mxu0 0.0
    %1087 = vmatpush2.msra.mxu0 0.0
    %1088 = vmatprep.subr.mxu0 0.0
    %1089 = vmatpush2.msra.mxu0 0.0
    %1090 = vmatprep.subr.mxu0 0.0
    %1091 = vmatpush2.msra.mxu0 0.0
    %1092 = vmatprep.subr.mxu0 0.0
    %1093 = vmatpush2.msra.mxu0 0.0
    %1094 = vmatprep.subr.mxu0 0.0
    %1095 = vmatpush2.msra.mxu0 0.0
    %1096 = vmatprep.subr.mxu0 0.0
    %1097 = vmatpush2.msra.mxu0 0.0
    %1098 = vmatprep.subr.mxu0 0.0
    %1099 = vmatpush2.msra.mxu0 0.0
    %1100 = vmatprep.mubr.f32.mxu0 0.0
    %1101 = vmatmul.mubr.f32.gmra.mxu0 %v957
    %v1102 = vpop.f32.mrf.mxu0
    %v1103 = vadd.f32 0.0, %v1102
    %v1104 = vpop.f32.mrf.mxu0
    %v1105 = vadd.f32 0.0, %v1104
    %1106 = vdwg.mxu0
    %v1107 = vadd.f32 %v961, %v1032
    %v1108 = vadd.f32 %v962, %v1034
    %v1109 = vadd.f32 %v963, %v1103
    %v1110 = vadd.f32 %v964, %v1105
    %v1111 = vmul.f32 %v1107, 0.5
    %v1112 = vtanh.pop %v1111
    %v1113 = vmul.f32 %v1112, 0.5
    %v1114 = vadd.f32 %v1113, 0.5
    %v1115 = vmul.f32 %v1108, 0.5
    %v1116 = vtanh.pop %v1115
    %v1117 = vmul.f32 %v1116, 0.5
    %v1118 = vadd.f32 %v1117, 0.5
    %v1119 = vtanh.pop %v1109
    %v1120 = vmul.f32 %v1110, 0.5
    %v1121 = vtanh.pop %v1120
    %v1122 = vmul.f32 %v1121, 0.5
    %v1123 = vadd.f32 %v1122, 0.5
    %v1124 = vmul.f32 %v1118, %v955
    %v1125 = vmul.f32 %v1114, %v1119
    %v1126 = vadd.f32 %v1124, %v1125
    %v1127 = vtanh.pop %v1126
    %v1128 = vmul.f32 %v1123, %v1127
    %s1129 = smul.u32 4, 4
    %s1130 = smul.addr %s1129, 8
    %s1131 = scalar_lea.vmem [#allocation4], %s1130
    %v1132 = vld [vmem:[%s1131] sm:$0xff]
    %v1133 = vld [vmem:[%s1131 + $0x8] sm:$0xff]
    %v1134 = vld [vmem:[%s1131 + $0x10] sm:$0xff]
    %v1135 = vld [vmem:[%s1131 + $0x18] sm:$0xff]
    %1136 = vmatprep.subr.mxu0 %v449
    %1137 = vmatpush1.msra.mxu0 %v448
    %1138 = vmatprep.subr.mxu0 %v445
    %1139 = vmatpush1.msra.mxu0 %v444
    %1140 = vmatprep.subr.mxu0 %v441
    %1141 = vmatpush1.msra.mxu0 %v440
    %1142 = vmatprep.subr.mxu0 %v437
    %1143 = vmatpush1.msra.mxu0 %v436
    %1144 = vmatprep.subr.mxu0 %v433
    %1145 = vmatpush1.msra.mxu0 %v432
    %1146 = vmatprep.subr.mxu0 %v429
    %1147 = vmatpush1.msra.mxu0 %v428
    %1148 = vmatprep.subr.mxu0 %v425
    %1149 = vmatpush1.msra.mxu0 %v424
    %1150 = vmatprep.subr.mxu0 %v421
    %1151 = vmatpush1.msra.mxu0 %v420
    %1152 = vmatprep.subr.mxu0 %v417
    %1153 = vmatpush1.msra.mxu0 %v416
    %1154 = vmatprep.subr.mxu0 %v413
    %1155 = vmatpush1.msra.mxu0 %v412
    %1156 = vmatprep.subr.mxu0 %v409
    %1157 = vmatpush1.msra.mxu0 %v408
    %1158 = vmatprep.subr.mxu0 %v405
    %1159 = vmatpush1.msra.mxu0 %v404
    %1160 = vmatprep.subr.mxu0 %v401
    %1161 = vmatpush1.msra.mxu0 %v400
    %1162 = vmatprep.subr.mxu0 %v397
    %1163 = vmatpush1.msra.mxu0 %v396
    %1164 = vmatprep.subr.mxu0 %v393
    %1165 = vmatpush1.msra.mxu0 %v392
    %1166 = vmatprep.subr.mxu0 %v389
    %1167 = vmatpush1.msra.mxu0 %v388
    %1168 = vmatprep.subr.mxu0 0.0
    %1169 = vmatpush2.msra.mxu0 0.0
    %1170 = vmatprep.subr.mxu0 0.0
    %1171 = vmatpush2.msra.mxu0 0.0
    %1172 = vmatprep.subr.mxu0 0.0
    %1173 = vmatpush2.msra.mxu0 0.0
    %1174 = vmatprep.subr.mxu0 0.0
    %1175 = vmatpush2.msra.mxu0 0.0
    %1176 = vmatprep.subr.mxu0 0.0
    %1177 = vmatpush2.msra.mxu0 0.0
    %1178 = vmatprep.subr.mxu0 0.0
    %1179 = vmatpush2.msra.mxu0 0.0
    %1180 = vmatprep.subr.mxu0 0.0
    %1181 = vmatpush2.msra.mxu0 0.0
    %1182 = vmatprep.subr.mxu0 0.0
    %1183 = vmatpush2.msra.mxu0 0.0
    %1184 = vmatprep.subr.mxu0 0.0
    %1185 = vmatpush2.msra.mxu0 0.0
    %1186 = vmatprep.subr.mxu0 0.0
    %1187 = vmatpush2.msra.mxu0 0.0
    %1188 = vmatprep.subr.mxu0 0.0
    %1189 = vmatpush2.msra.mxu0 0.0
    %1190 = vmatprep.subr.mxu0 0.0
    %1191 = vmatpush2.msra.mxu0 0.0
    %1192 = vmatprep.subr.mxu0 0.0
    %1193 = vmatpush2.msra.mxu0 0.0
    %1194 = vmatprep.subr.mxu0 0.0
    %1195 = vmatpush2.msra.mxu0 0.0
    %1196 = vmatprep.subr.mxu0 0.0
    %1197 = vmatpush2.msra.mxu0 0.0
    %1198 = vmatprep.subr.mxu0 0.0
    %1199 = vmatpush2.msra.mxu0 0.0
    %1200 = vmatprep.mubr.f32.mxu0 0.0
    %1201 = vmatmul.mubr.f32.gmra.mxu0 %v1128
    %v1202 = vpop.f32.mrf.mxu0
    %v1203 = vadd.f32 0.0, %v1202
    %v1204 = vpop.f32.mrf.mxu0
    %v1205 = vadd.f32 0.0, %v1204
    %1206 = vdwg.mxu0
    %1207 = vmatprep.subr.mxu0 %v451
    %1208 = vmatpush1.msra.mxu0 %v450
    %1209 = vmatprep.subr.mxu0 %v447
    %1210 = vmatpush1.msra.mxu0 %v446
    %1211 = vmatprep.subr.mxu0 %v443
    %1212 = vmatpush1.msra.mxu0 %v442
    %1213 = vmatprep.subr.mxu0 %v439
    %1214 = vmatpush1.msra.mxu0 %v438
    %1215 = vmatprep.subr.mxu0 %v435
    %1216 = vmatpush1.msra.mxu0 %v434
    %1217 = vmatprep.subr.mxu0 %v431
    %1218 = vmatpush1.msra.mxu0 %v430
    %1219 = vmatprep.subr.mxu0 %v427
    %1220 = vmatpush1.msra.mxu0 %v426
    %1221 = vmatprep.subr.mxu0 %v423
    %1222 = vmatpush1.msra.mxu0 %v422
    %1223 = vmatprep.subr.mxu0 %v419
    %1224 = vmatpush1.msra.mxu0 %v418
    %1225 = vmatprep.subr.mxu0 %v415
    %1226 = vmatpush1.msra.mxu0 %v414
    %1227 = vmatprep.subr.mxu0 %v411
    %1228 = vmatpush1.msra.mxu0 %v410
    %1229 = vmatprep.subr.mxu0 %v407
    %1230 = vmatpush1.msra.mxu0 %v406
    %1231 = vmatprep.subr.mxu0 %v403
    %1232 = vmatpush1.msra.mxu0 %v402
    %1233 = vmatprep.subr.mxu0 %v399
    %1234 = vmatpush1.msra.mxu0 %v398
    %1235 = vmatprep.subr.mxu0 %v395
    %1236 = vmatpush1.msra.mxu0 %v394
    %1237 = vmatprep.subr.mxu0 %v391
    %1238 = vmatpush1.msra.mxu0 %v390
    %1239 = vmatprep.subr.mxu0 0.0
    %1240 = vmatpush2.msra.mxu0 0.0
    %1241 = vmatprep.subr.mxu0 0.0
    %1242 = vmatpush2.msra.mxu0 0.0
    %1243 = vmatprep.subr.mxu0 0.0
    %1244 = vmatpush2.msra.mxu0 0.0
    %1245 = vmatprep.subr.mxu0 0.0
    %1246 = vmatpush2.msra.mxu0 0.0
    %1247 = vmatprep.subr.mxu0 0.0
    %1248 = vmatpush2.msra.mxu0 0.0
    %1249 = vmatprep.subr.mxu0 0.0
    %1250 = vmatpush2.msra.mxu0 0.0
    %1251 = vmatprep.subr.mxu0 0.0
    %1252 = vmatpush2.msra.mxu0 0.0
    %1253 = vmatprep.subr.mxu0 0.0
    %1254 = vmatpush2.msra.mxu0 0.0
    %1255 = vmatprep.subr.mxu0 0.0
    %1256 = vmatpush2.msra.mxu0 0.0
    %1257 = vmatprep.subr.mxu0 0.0
    %1258 = vmatpush2.msra.mxu0 0.0
    %1259 = vmatprep.subr.mxu0 0.0
    %1260 = vmatpush2.msra.mxu0 0.0
    %1261 = vmatprep.subr.mxu0 0.0
    %1262 = vmatpush2.msra.mxu0 0.0
    %1263 = vmatprep.subr.mxu0 0.0
    %1264 = vmatpush2.msra.mxu0 0.0
    %1265 = vmatprep.subr.mxu0 0.0
    %1266 = vmatpush2.msra.mxu0 0.0
    %1267 = vmatprep.subr.mxu0 0.0
    %1268 = vmatpush2.msra.mxu0 0.0
    %1269 = vmatprep.subr.mxu0 0.0
    %1270 = vmatpush2.msra.mxu0 0.0
    %1271 = vmatprep.mubr.f32.mxu0 0.0
    %1272 = vmatmul.mubr.f32.gmra.mxu0 %v1128
    %v1273 = vpop.f32.mrf.mxu0
    %v1274 = vadd.f32 0.0, %v1273
    %v1275 = vpop.f32.mrf.mxu0
    %v1276 = vadd.f32 0.0, %v1275
    %1277 = vdwg.mxu0
    %v1278 = vadd.f32 %v1132, %v1203
    %v1279 = vadd.f32 %v1133, %v1205
    %v1280 = vadd.f32 %v1134, %v1274
    %v1281 = vadd.f32 %v1135, %v1276
    %v1282 = vmul.f32 %v1278, 0.5
    %v1283 = vtanh.pop %v1282
    %v1284 = vmul.f32 %v1283, 0.5
    %v1285 = vadd.f32 %v1284, 0.5
    %v1286 = vmul.f32 %v1279, 0.5
    %v1287 = vtanh.pop %v1286
    %v1288 = vmul.f32 %v1287, 0.5
    %v1289 = vadd.f32 %v1288, 0.5
    %v1290 = vtanh.pop %v1280
    %v1291 = vmul.f32 %v1281, 0.5
    %v1292 = vtanh.pop %v1291
    %v1293 = vmul.f32 %v1292, 0.5
    %v1294 = vadd.f32 %v1293, 0.5
    %v1295 = vmul.f32 %v1289, %v1126
    %v1296 = vmul.f32 %v1285, %v1290
    %v1297 = vadd.f32 %v1295, %v1296
    %v1298 = vtanh.pop %v1297
    %v1299 = vmul.f32 %v1294, %v1298
    %s1300 = smul.u32 5, 4
    %s1301 = smul.addr %s1300, 8
    %s1302 = scalar_lea.vmem [#allocation4], %s1301
    %v1303 = vld [vmem:[%s1302] sm:$0xff]
    %v1304 = vld [vmem:[%s1302 + $0x8] sm:$0xff]
    %v1305 = vld [vmem:[%s1302 + $0x10] sm:$0xff]
    %v1306 = vld [vmem:[%s1302 + $0x18] sm:$0xff]
    %1307 = vmatprep.subr.mxu0 %v449
    %1308 = vmatpush1.msra.mxu0 %v448
    %1309 = vmatprep.subr.mxu0 %v445
    %1310 = vmatpush1.msra.mxu0 %v444
    %1311 = vmatprep.subr.mxu0 %v441
    %1312 = vmatpush1.msra.mxu0 %v440
    %1313 = vmatprep.subr.mxu0 %v437
    %1314 = vmatpush1.msra.mxu0 %v436
    %1315 = vmatprep.subr.mxu0 %v433
    %1316 = vmatpush1.msra.mxu0 %v432
    %1317 = vmatprep.subr.mxu0 %v429
    %1318 = vmatpush1.msra.mxu0 %v428
    %1319 = vmatprep.subr.mxu0 %v425
    %1320 = vmatpush1.msra.mxu0 %v424
    %1321 = vmatprep.subr.mxu0 %v421
    %1322 = vmatpush1.msra.mxu0 %v420
    %1323 = vmatprep.subr.mxu0 %v417
    %1324 = vmatpush1.msra.mxu0 %v416
    %1325 = vmatprep.subr.mxu0 %v413
    %1326 = vmatpush1.msra.mxu0 %v412
    %1327 = vmatprep.subr.mxu0 %v409
    %1328 = vmatpush1.msra.mxu0 %v408
    %1329 = vmatprep.subr.mxu0 %v405
    %1330 = vmatpush1.msra.mxu0 %v404
    %1331 = vmatprep.subr.mxu0 %v401
    %1332 = vmatpush1.msra.mxu0 %v400
    %1333 = vmatprep.subr.mxu0 %v397
    %1334 = vmatpush1.msra.mxu0 %v396
    %1335 = vmatprep.subr.mxu0 %v393
    %1336 = vmatpush1.msra.mxu0 %v392
    %1337 = vmatprep.subr.mxu0 %v389
    %1338 = vmatpush1.msra.mxu0 %v388
    %1339 = vmatprep.subr.mxu0 0.0
    %1340 = vmatpush2.msra.mxu0 0.0
    %1341 = vmatprep.subr.mxu0 0.0
    %1342 = vmatpush2.msra.mxu0 0.0
    %1343 = vmatprep.subr.mxu0 0.0
    %1344 = vmatpush2.msra.mxu0 0.0
    %1345 = vmatprep.subr.mxu0 0.0
    %1346 = vmatpush2.msra.mxu0 0.0
    %1347 = vmatprep.subr.mxu0 0.0
    %1348 = vmatpush2.msra.mxu0 0.0
    %1349 = vmatprep.subr.mxu0 0.0
    %1350 = vmatpush2.msra.mxu0 0.0
    %1351 = vmatprep.subr.mxu0 0.0
    %1352 = vmatpush2.msra.mxu0 0.0
    %1353 = vmatprep.subr.mxu0 0.0
    %1354 = vmatpush2.msra.mxu0 0.0
    %1355 = vmatprep.subr.mxu0 0.0
    %1356 = vmatpush2.msra.mxu0 0.0
    %1357 = vmatprep.subr.mxu0 0.0
    %1358 = vmatpush2.msra.mxu0 0.0
    %1359 = vmatprep.subr.mxu0 0.0
    %1360 = vmatpush2.msra.mxu0 0.0
    %1361 = vmatprep.subr.mxu0 0.0
    %1362 = vmatpush2.msra.mxu0 0.0
    %1363 = vmatprep.subr.mxu0 0.0
    %1364 = vmatpush2.msra.mxu0 0.0
    %1365 = vmatprep.subr.mxu0 0.0
    %1366 = vmatpush2.msra.mxu0 0.0
    %1367 = vmatprep.subr.mxu0 0.0
    %1368 = vmatpush2.msra.mxu0 0.0
    %1369 = vmatprep.subr.mxu0 0.0
    %1370 = vmatpush2.msra.mxu0 0.0
    %1371 = vmatprep.mubr.f32.mxu0 0.0
    %1372 = vmatmul.mubr.f32.gmra.mxu0 %v1299
    %v1373 = vpop.f32.mrf.mxu0
    %v1374 = vadd.f32 0.0, %v1373
    %v1375 = vpop.f32.mrf.mxu0
    %v1376 = vadd.f32 0.0, %v1375
    %1377 = vdwg.mxu0
    %1378 = vmatprep.subr.mxu0 %v451
    %1379 = vmatpush1.msra.mxu0 %v450
    %1380 = vmatprep.subr.mxu0 %v447
    %1381 = vmatpush1.msra.mxu0 %v446
    %1382 = vmatprep.subr.mxu0 %v443
    %1383 = vmatpush1.msra.mxu0 %v442
    %1384 = vmatprep.subr.mxu0 %v439
    %1385 = vmatpush1.msra.mxu0 %v438
    %1386 = vmatprep.subr.mxu0 %v435
    %1387 = vmatpush1.msra.mxu0 %v434
    %1388 = vmatprep.subr.mxu0 %v431
    %1389 = vmatpush1.msra.mxu0 %v430
    %1390 = vmatprep.subr.mxu0 %v427
    %1391 = vmatpush1.msra.mxu0 %v426
    %1392 = vmatprep.subr.mxu0 %v423
    %1393 = vmatpush1.msra.mxu0 %v422
    %1394 = vmatprep.subr.mxu0 %v419
    %1395 = vmatpush1.msra.mxu0 %v418
    %1396 = vmatprep.subr.mxu0 %v415
    %1397 = vmatpush1.msra.mxu0 %v414
    %1398 = vmatprep.subr.mxu0 %v411
    %1399 = vmatpush1.msra.mxu0 %v410
    %1400 = vmatprep.subr.mxu0 %v407
    %1401 = vmatpush1.msra.mxu0 %v406
    %1402 = vmatprep.subr.mxu0 %v403
    %1403 = vmatpush1.msra.mxu0 %v402
    %1404 = vmatprep.subr.mxu0 %v399
    %1405 = vmatpush1.msra.mxu0 %v398
    %1406 = vmatprep.subr.mxu0 %v395
    %1407 = vmatpush1.msra.mxu0 %v394
    %1408 = vmatprep.subr.mxu0 %v391
    %1409 = vmatpush1.msra.mxu0 %v390
    %1410 = vmatprep.subr.mxu0 0.0
    %1411 = vmatpush2.msra.mxu0 0.0
    %1412 = vmatprep.subr.mxu0 0.0
    %1413 = vmatpush2.msra.mxu0 0.0
    %1414 = vmatprep.subr.mxu0 0.0
    %1415 = vmatpush2.msra.mxu0 0.0
    %1416 = vmatprep.subr.mxu0 0.0
    %1417 = vmatpush2.msra.mxu0 0.0
    %1418 = vmatprep.subr.mxu0 0.0
    %1419 = vmatpush2.msra.mxu0 0.0
    %1420 = vmatprep.subr.mxu0 0.0
    %1421 = vmatpush2.msra.mxu0 0.0
    %1422 = vmatprep.subr.mxu0 0.0
    %1423 = vmatpush2.msra.mxu0 0.0
    %1424 = vmatprep.subr.mxu0 0.0
    %1425 = vmatpush2.msra.mxu0 0.0
    %1426 = vmatprep.subr.mxu0 0.0
    %1427 = vmatpush2.msra.mxu0 0.0
    %1428 = vmatprep.subr.mxu0 0.0
    %1429 = vmatpush2.msra.mxu0 0.0
    %1430 = vmatprep.subr.mxu0 0.0
    %1431 = vmatpush2.msra.mxu0 0.0
    %1432 = vmatprep.subr.mxu0 0.0
    %1433 = vmatpush2.msra.mxu0 0.0
    %1434 = vmatprep.subr.mxu0 0.0
    %1435 = vmatpush2.msra.mxu0 0.0
    %1436 = vmatprep.subr.mxu0 0.0
    %1437 = vmatpush2.msra.mxu0 0.0
    %1438 = vmatprep.subr.mxu0 0.0
    %1439 = vmatpush2.msra.mxu0 0.0
    %1440 = vmatprep.subr.mxu0 0.0
    %1441 = vmatpush2.msra.mxu0 0.0
    %1442 = vmatprep.mubr.f32.mxu0 0.0
    %1443 = vmatmul.mubr.f32.gmra.mxu0 %v1299
    %v1444 = vpop.f32.mrf.mxu0
    %v1445 = vadd.f32 0.0, %v1444
    %v1446 = vpop.f32.mrf.mxu0
    %v1447 = vadd.f32 0.0, %v1446
    %1448 = vdwg.mxu0
    %v1449 = vadd.f32 %v1303, %v1374
    %v1450 = vadd.f32 %v1304, %v1376
    %v1451 = vadd.f32 %v1305, %v1445
    %v1452 = vadd.f32 %v1306, %v1447
    %v1453 = vmul.f32 %v1449, 0.5
    %v1454 = vtanh.pop %v1453
    %v1455 = vmul.f32 %v1454, 0.5
    %v1456 = vadd.f32 %v1455, 0.5
    %v1457 = vmul.f32 %v1450, 0.5
    %v1458 = vtanh.pop %v1457
    %v1459 = vmul.f32 %v1458, 0.5
    %v1460 = vadd.f32 %v1459, 0.5
    %v1461 = vtanh.pop %v1451
    %v1462 = vmul.f32 %v1452, 0.5
    %v1463 = vtanh.pop %v1462
    %v1464 = vmul.f32 %v1463, 0.5
    %v1465 = vadd.f32 %v1464, 0.5
    %v1466 = vmul.f32 %v1460, %v1297
    %v1467 = vmul.f32 %v1456, %v1461
    %v1468 = vadd.f32 %v1466, %v1467
    %v1469 = vtanh.pop %v1468
    %v1470 = vmul.f32 %v1465, %v1469
    %s1471 = smul.u32 6, 4
    %s1472 = smul.addr %s1471, 8
    %s1473 = scalar_lea.vmem [#allocation4], %s1472
    %v1474 = vld [vmem:[%s1473] sm:$0xff]
    %v1475 = vld [vmem:[%s1473 + $0x8] sm:$0xff]
    %v1476 = vld [vmem:[%s1473 + $0x10] sm:$0xff]
    %v1477 = vld [vmem:[%s1473 + $0x18] sm:$0xff]
    %1478 = vmatprep.subr.mxu0 %v449
    %1479 = vmatpush1.msra.mxu0 %v448
    %1480 = vmatprep.subr.mxu0 %v445
    %1481 = vmatpush1.msra.mxu0 %v444
    %1482 = vmatprep.subr.mxu0 %v441
    %1483 = vmatpush1.msra.mxu0 %v440
    %1484 = vmatprep.subr.mxu0 %v437
    %1485 = vmatpush1.msra.mxu0 %v436
    %1486 = vmatprep.subr.mxu0 %v433
    %1487 = vmatpush1.msra.mxu0 %v432
    %1488 = vmatprep.subr.mxu0 %v429
    %1489 = vmatpush1.msra.mxu0 %v428
    %1490 = vmatprep.subr.mxu0 %v425
    %1491 = vmatpush1.msra.mxu0 %v424
    %1492 = vmatprep.subr.mxu0 %v421
    %1493 = vmatpush1.msra.mxu0 %v420
    %1494 = vmatprep.subr.mxu0 %v417
    %1495 = vmatpush1.msra.mxu0 %v416
    %1496 = vmatprep.subr.mxu0 %v413
    %1497 = vmatpush1.msra.mxu0 %v412
    %1498 = vmatprep.subr.mxu0 %v409
    %1499 = vmatpush1.msra.mxu0 %v408
    %1500 = vmatprep.subr.mxu0 %v405
    %1501 = vmatpush1.msra.mxu0 %v404
    %1502 = vmatprep.subr.mxu0 %v401
    %1503 = vmatpush1.msra.mxu0 %v400
    %1504 = vmatprep.subr.mxu0 %v397
    %1505 = vmatpush1.msra.mxu0 %v396
    %1506 = vmatprep.subr.mxu0 %v393
    %1507 = vmatpush1.msra.mxu0 %v392
    %1508 = vmatprep.subr.mxu0 %v389
    %1509 = vmatpush1.msra.mxu0 %v388
    %1510 = vmatprep.subr.mxu0 0.0
    %1511 = vmatpush2.msra.mxu0 0.0
    %1512 = vmatprep.subr.mxu0 0.0
    %1513 = vmatpush2.msra.mxu0 0.0
    %1514 = vmatprep.subr.mxu0 0.0
    %1515 = vmatpush2.msra.mxu0 0.0
    %1516 = vmatprep.subr.mxu0 0.0
    %1517 = vmatpush2.msra.mxu0 0.0
    %1518 = vmatprep.subr.mxu0 0.0
    %1519 = vmatpush2.msra.mxu0 0.0
    %1520 = vmatprep.subr.mxu0 0.0
    %1521 = vmatpush2.msra.mxu0 0.0
    %1522 = vmatprep.subr.mxu0 0.0
    %1523 = vmatpush2.msra.mxu0 0.0
    %1524 = vmatprep.subr.mxu0 0.0
    %1525 = vmatpush2.msra.mxu0 0.0
    %1526 = vmatprep.subr.mxu0 0.0
    %1527 = vmatpush2.msra.mxu0 0.0
    %1528 = vmatprep.subr.mxu0 0.0
    %1529 = vmatpush2.msra.mxu0 0.0
    %1530 = vmatprep.subr.mxu0 0.0
    %1531 = vmatpush2.msra.mxu0 0.0
    %1532 = vmatprep.subr.mxu0 0.0
    %1533 = vmatpush2.msra.mxu0 0.0
    %1534 = vmatprep.subr.mxu0 0.0
    %1535 = vmatpush2.msra.mxu0 0.0
    %1536 = vmatprep.subr.mxu0 0.0
    %1537 = vmatpush2.msra.mxu0 0.0
    %1538 = vmatprep.subr.mxu0 0.0
    %1539 = vmatpush2.msra.mxu0 0.0
    %1540 = vmatprep.subr.mxu0 0.0
    %1541 = vmatpush2.msra.mxu0 0.0
    %1542 = vmatprep.mubr.f32.mxu0 0.0
    %1543 = vmatmul.mubr.f32.gmra.mxu0 %v1470
    %v1544 = vpop.f32.mrf.mxu0
    %v1545 = vadd.f32 0.0, %v1544
    %v1546 = vpop.f32.mrf.mxu0
    %v1547 = vadd.f32 0.0, %v1546
    %1548 = vdwg.mxu0
    %1549 = vmatprep.subr.mxu0 %v451
    %1550 = vmatpush1.msra.mxu0 %v450
    %1551 = vmatprep.subr.mxu0 %v447
    %1552 = vmatpush1.msra.mxu0 %v446
    %1553 = vmatprep.subr.mxu0 %v443
    %1554 = vmatpush1.msra.mxu0 %v442
    %1555 = vmatprep.subr.mxu0 %v439
    %1556 = vmatpush1.msra.mxu0 %v438
    %1557 = vmatprep.subr.mxu0 %v435
    %1558 = vmatpush1.msra.mxu0 %v434
    %1559 = vmatprep.subr.mxu0 %v431
    %1560 = vmatpush1.msra.mxu0 %v430
    %1561 = vmatprep.subr.mxu0 %v427
    %1562 = vmatpush1.msra.mxu0 %v426
    %1563 = vmatprep.subr.mxu0 %v423
    %1564 = vmatpush1.msra.mxu0 %v422
    %1565 = vmatprep.subr.mxu0 %v419
    %1566 = vmatpush1.msra.mxu0 %v418
    %1567 = vmatprep.subr.mxu0 %v415
    %1568 = vmatpush1.msra.mxu0 %v414
    %1569 = vmatprep.subr.mxu0 %v411
    %1570 = vmatpush1.msra.mxu0 %v410
    %1571 = vmatprep.subr.mxu0 %v407
    %1572 = vmatpush1.msra.mxu0 %v406
    %1573 = vmatprep.subr.mxu0 %v403
    %1574 = vmatpush1.msra.mxu0 %v402
    %1575 = vmatprep.subr.mxu0 %v399
    %1576 = vmatpush1.msra.mxu0 %v398
    %1577 = vmatprep.subr.mxu0 %v395
    %1578 = vmatpush1.msra.mxu0 %v394
    %1579 = vmatprep.subr.mxu0 %v391
    %1580 = vmatpush1.msra.mxu0 %v390
    %1581 = vmatprep.subr.mxu0 0.0
    %1582 = vmatpush2.msra.mxu0 0.0
    %1583 = vmatprep.subr.mxu0 0.0
    %1584 = vmatpush2.msra.mxu0 0.0
    %1585 = vmatprep.subr.mxu0 0.0
    %1586 = vmatpush2.msra.mxu0 0.0
    %1587 = vmatprep.subr.mxu0 0.0
    %1588 = vmatpush2.msra.mxu0 0.0
    %1589 = vmatprep.subr.mxu0 0.0
    %1590 = vmatpush2.msra.mxu0 0.0
    %1591 = vmatprep.subr.mxu0 0.0
    %1592 = vmatpush2.msra.mxu0 0.0
    %1593 = vmatprep.subr.mxu0 0.0
    %1594 = vmatpush2.msra.mxu0 0.0
    %1595 = vmatprep.subr.mxu0 0.0
    %1596 = vmatpush2.msra.mxu0 0.0
    %1597 = vmatprep.subr.mxu0 0.0
    %1598 = vmatpush2.msra.mxu0 0.0
    %1599 = vmatprep.subr.mxu0 0.0
    %1600 = vmatpush2.msra.mxu0 0.0
    %1601 = vmatprep.subr.mxu0 0.0
    %1602 = vmatpush2.msra.mxu0 0.0
    %1603 = vmatprep.subr.mxu0 0.0
    %1604 = vmatpush2.msra.mxu0 0.0
    %1605 = vmatprep.subr.mxu0 0.0
    %1606 = vmatpush2.msra.mxu0 0.0
    %1607 = vmatprep.subr.mxu0 0.0
    %1608 = vmatpush2.msra.mxu0 0.0
    %1609 = vmatprep.subr.mxu0 0.0
    %1610 = vmatpush2.msra.mxu0 0.0
    %1611 = vmatprep.subr.mxu0 0.0
    %1612 = vmatpush2.msra.mxu0 0.0
    %1613 = vmatprep.mubr.f32.mxu0 0.0
    %1614 = vmatmul.mubr.f32.gmra.mxu0 %v1470
    %v1615 = vpop.f32.mrf.mxu0
    %v1616 = vadd.f32 0.0, %v1615
    %v1617 = vpop.f32.mrf.mxu0
    %v1618 = vadd.f32 0.0, %v1617
    %1619 = vdwg.mxu0
    %v1620 = vadd.f32 %v1474, %v1545
    %v1621 = vadd.f32 %v1475, %v1547
    %v1622 = vadd.f32 %v1476, %v1616
    %v1623 = vadd.f32 %v1477, %v1618
    %v1624 = vmul.f32 %v1620, 0.5
    %v1625 = vtanh.pop %v1624
    %v1626 = vmul.f32 %v1625, 0.5
    %v1627 = vadd.f32 %v1626, 0.5
    %v1628 = vmul.f32 %v1621, 0.5
    %v1629 = vtanh.pop %v1628
    %v1630 = vmul.f32 %v1629, 0.5
    %v1631 = vadd.f32 %v1630, 0.5
    %v1632 = vtanh.pop %v1622
    %v1633 = vmul.f32 %v1623, 0.5
    %v1634 = vtanh.pop %v1633
    %v1635 = vmul.f32 %v1634, 0.5
    %v1636 = vadd.f32 %v1635, 0.5
    %v1637 = vmul.f32 %v1631, %v1468
    %v1638 = vmul.f32 %v1627, %v1632
    %v1639 = vadd.f32 %v1637, %v1638
    %v1640 = vtanh.pop %v1639
    %v1641 = vmul.f32 %v1636, %v1640
    %s1642 = smul.u32 7, 4
    %s1643 = smul.addr %s1642, 8
    %s1644 = scalar_lea.vmem [#allocation4], %s1643
    %v1645 = vld [vmem:[%s1644] sm:$0xff]
    %v1646 = vld [vmem:[%s1644 + $0x8] sm:$0xff]
    %v1647 = vld [vmem:[%s1644 + $0x10] sm:$0xff]
    %v1648 = vld [vmem:[%s1644 + $0x18] sm:$0xff]
    %1649 = vmatprep.subr.mxu0 %v449
    %1650 = vmatpush1.msra.mxu0 %v448
    %1651 = vmatprep.subr.mxu0 %v445
    %1652 = vmatpush1.msra.mxu0 %v444
    %1653 = vmatprep.subr.mxu0 %v441
    %1654 = vmatpush1.msra.mxu0 %v440
    %1655 = vmatprep.subr.mxu0 %v437
    %1656 = vmatpush1.msra.mxu0 %v436
    %1657 = vmatprep.subr.mxu0 %v433
    %1658 = vmatpush1.msra.mxu0 %v432
    %1659 = vmatprep.subr.mxu0 %v429
    %1660 = vmatpush1.msra.mxu0 %v428
    %1661 = vmatprep.subr.mxu0 %v425
    %1662 = vmatpush1.msra.mxu0 %v424
    %1663 = vmatprep.subr.mxu0 %v421
    %1664 = vmatpush1.msra.mxu0 %v420
    %1665 = vmatprep.subr.mxu0 %v417
    %1666 = vmatpush1.msra.mxu0 %v416
    %1667 = vmatprep.subr.mxu0 %v413
    %1668 = vmatpush1.msra.mxu0 %v412
    %1669 = vmatprep.subr.mxu0 %v409
    %1670 = vmatpush1.msra.mxu0 %v408
    %1671 = vmatprep.subr.mxu0 %v405
    %1672 = vmatpush1.msra.mxu0 %v404
    %1673 = vmatprep.subr.mxu0 %v401
    %1674 = vmatpush1.msra.mxu0 %v400
    %1675 = vmatprep.subr.mxu0 %v397
    %1676 = vmatpush1.msra.mxu0 %v396
    %1677 = vmatprep.subr.mxu0 %v393
    %1678 = vmatpush1.msra.mxu0 %v392
    %1679 = vmatprep.subr.mxu0 %v389
    %1680 = vmatpush1.msra.mxu0 %v388
    %1681 = vmatprep.subr.mxu0 0.0
    %1682 = vmatpush2.msra.mxu0 0.0
    %1683 = vmatprep.subr.mxu0 0.0
    %1684 = vmatpush2.msra.mxu0 0.0
    %1685 = vmatprep.subr.mxu0 0.0
    %1686 = vmatpush2.msra.mxu0 0.0
    %1687 = vmatprep.subr.mxu0 0.0
    %1688 = vmatpush2.msra.mxu0 0.0
    %1689 = vmatprep.subr.mxu0 0.0
    %1690 = vmatpush2.msra.mxu0 0.0
    %1691 = vmatprep.subr.mxu0 0.0
    %1692 = vmatpush2.msra.mxu0 0.0
    %1693 = vmatprep.subr.mxu0 0.0
    %1694 = vmatpush2.msra.mxu0 0.0
    %1695 = vmatprep.subr.mxu0 0.0
    %1696 = vmatpush2.msra.mxu0 0.0
    %1697 = vmatprep.subr.mxu0 0.0
    %1698 = vmatpush2.msra.mxu0 0.0
    %1699 = vmatprep.subr.mxu0 0.0
    %1700 = vmatpush2.msra.mxu0 0.0
    %1701 = vmatprep.subr.mxu0 0.0
    %1702 = vmatpush2.msra.mxu0 0.0
    %1703 = vmatprep.subr.mxu0 0.0
    %1704 = vmatpush2.msra.mxu0 0.0
    %1705 = vmatprep.subr.mxu0 0.0
    %1706 = vmatpush2.msra.mxu0 0.0
    %1707 = vmatprep.subr.mxu0 0.0
    %1708 = vmatpush2.msra.mxu0 0.0
    %1709 = vmatprep.subr.mxu0 0.0
    %1710 = vmatpush2.msra.mxu0 0.0
    %1711 = vmatprep.subr.mxu0 0.0
    %1712 = vmatpush2.msra.mxu0 0.0
    %1713 = vmatprep.mubr.f32.mxu0 0.0
    %1714 = vmatmul.mubr.f32.gmra.mxu0 %v1641
    %v1715 = vpop.f32.mrf.mxu0
    %v1716 = vadd.f32 0.0, %v1715
    %v1717 = vpop.f32.mrf.mxu0
    %v1718 = vadd.f32 0.0, %v1717
    %1719 = vdwg.mxu0
    %1720 = vmatprep.subr.mxu0 %v451
    %1721 = vmatpush1.msra.mxu0 %v450
    %1722 = vmatprep.subr.mxu0 %v447
    %1723 = vmatpush1.msra.mxu0 %v446
    %1724 = vmatprep.subr.mxu0 %v443
    %1725 = vmatpush1.msra.mxu0 %v442
    %1726 = vmatprep.subr.mxu0 %v439
    %1727 = vmatpush1.msra.mxu0 %v438
    %1728 = vmatprep.subr.mxu0 %v435
    %1729 = vmatpush1.msra.mxu0 %v434
    %1730 = vmatprep.subr.mxu0 %v431
    %1731 = vmatpush1.msra.mxu0 %v430
    %1732 = vmatprep.subr.mxu0 %v427
    %1733 = vmatpush1.msra.mxu0 %v426
    %1734 = vmatprep.subr.mxu0 %v423
    %1735 = vmatpush1.msra.mxu0 %v422
    %1736 = vmatprep.subr.mxu0 %v419
    %1737 = vmatpush1.msra.mxu0 %v418
    %1738 = vmatprep.subr.mxu0 %v415
    %1739 = vmatpush1.msra.mxu0 %v414
    %1740 = vmatprep.subr.mxu0 %v411
    %1741 = vmatpush1.msra.mxu0 %v410
    %1742 = vmatprep.subr.mxu0 %v407
    %1743 = vmatpush1.msra.mxu0 %v406
    %1744 = vmatprep.subr.mxu0 %v403
    %1745 = vmatpush1.msra.mxu0 %v402
    %1746 = vmatprep.subr.mxu0 %v399
    %1747 = vmatpush1.msra.mxu0 %v398
    %1748 = vmatprep.subr.mxu0 %v395
    %1749 = vmatpush1.msra.mxu0 %v394
    %1750 = vmatprep.subr.mxu0 %v391
    %1751 = vmatpush1.msra.mxu0 %v390
    %1752 = vmatprep.subr.mxu0 0.0
    %1753 = vmatpush2.msra.mxu0 0.0
    %1754 = vmatprep.subr.mxu0 0.0
    %1755 = vmatpush2.msra.mxu0 0.0
    %1756 = vmatprep.subr.mxu0 0.0
    %1757 = vmatpush2.msra.mxu0 0.0
    %1758 = vmatprep.subr.mxu0 0.0
    %1759 = vmatpush2.msra.mxu0 0.0
    %1760 = vmatprep.subr.mxu0 0.0
    %1761 = vmatpush2.msra.mxu0 0.0
    %1762 = vmatprep.subr.mxu0 0.0
    %1763 = vmatpush2.msra.mxu0 0.0
    %1764 = vmatprep.subr.mxu0 0.0
    %1765 = vmatpush2.msra.mxu0 0.0
    %1766 = vmatprep.subr.mxu0 0.0
    %1767 = vmatpush2.msra.mxu0 0.0
    %1768 = vmatprep.subr.mxu0 0.0
    %1769 = vmatpush2.msra.mxu0 0.0
    %1770 = vmatprep.subr.mxu0 0.0
    %1771 = vmatpush2.msra.mxu0 0.0
    %1772 = vmatprep.subr.mxu0 0.0
    %1773 = vmatpush2.msra.mxu0 0.0
    %1774 = vmatprep.subr.mxu0 0.0
    %1775 = vmatpush2.msra.mxu0 0.0
    %1776 = vmatprep.subr.mxu0 0.0
    %1777 = vmatpush2.msra.mxu0 0.0
    %1778 = vmatprep.subr.mxu0 0.0
    %1779 = vmatpush2.msra.mxu0 0.0
    %1780 = vmatprep.subr.mxu0 0.0
    %1781 = vmatpush2.msra.mxu0 0.0
    %1782 = vmatprep.subr.mxu0 0.0
    %1783 = vmatpush2.msra.mxu0 0.0
    %1784 = vmatprep.mubr.f32.mxu0 0.0
    %1785 = vmatmul.mubr.f32.gmra.mxu0 %v1641
    %v1786 = vpop.f32.mrf.mxu0
    %v1787 = vadd.f32 0.0, %v1786
    %v1788 = vpop.f32.mrf.mxu0
    %v1789 = vadd.f32 0.0, %v1788
    %1790 = vdwg.mxu0
    %v1791 = vadd.f32 %v1645, %v1716
    %v1792 = vadd.f32 %v1646, %v1718
    %v1793 = vadd.f32 %v1647, %v1787
    %v1794 = vadd.f32 %v1648, %v1789
    %v1795 = vmul.f32 %v1791, 0.5
    %v1796 = vtanh.pop %v1795
    %v1797 = vmul.f32 %v1796, 0.5
    %v1798 = vadd.f32 %v1797, 0.5
    %v1799 = vmul.f32 %v1792, 0.5
    %v1800 = vtanh.pop %v1799
    %v1801 = vmul.f32 %v1800, 0.5
    %v1802 = vadd.f32 %v1801, 0.5
    %v1803 = vtanh.pop %v1793
    %v1804 = vmul.f32 %v1794, 0.5
    %v1805 = vtanh.pop %v1804
    %v1806 = vmul.f32 %v1805, 0.5
    %v1807 = vadd.f32 %v1806, 0.5
    %v1808 = vmul.f32 %v1802, %v1639
    %v1809 = vmul.f32 %v1798, %v1803
    %v1810 = vadd.f32 %v1808, %v1809
    %v1811 = vtanh.pop %v1810
    %v1812 = vmul.f32 %v1807, %v1811
    %1813 = vst [vmem:[#allocation2] sm:$0xff] %v1812
    %1814 = vst [vmem:[#allocation3] sm:$0xff] %v1810
    // Predicated region
    $region38: #{tpu_custom_call.1} parent=1 // pred_check
      %p1815 = pneg %p52
    $region39: #{tpu_custom_call.1} parent=1 // pred_check_branch
      %1817 = sbr.rel (%p1815) target = $region41
    $region40: #{tpu_custom_call.1} parent=1 // pred_region
      %v1818 = vld [vmem:[#allocation8] sm:$0xff]
      %v1819 = vld [vmem:[#allocation8 + $0x8] sm:$0xff]
      %v1820 = vld [vmem:[#allocation8 + $0x10] sm:$0xff]
      %v1821 = vld [vmem:[#allocation8 + $0x18] sm:$0xff]
      %v1822 = vld [vmem:[#allocation8 + $0x20] sm:$0xff]
      %v1823 = vld [vmem:[#allocation8 + $0x28] sm:$0xff]
      %v1824 = vld [vmem:[#allocation8 + $0x30] sm:$0xff]
      %v1825 = vld [vmem:[#allocation8 + $0x38] sm:$0xff]
      %v1826 = vld [vmem:[#allocation8 + $0x40] sm:$0xff]
      %v1827 = vld [vmem:[#allocation8 + $0x48] sm:$0xff]
      %v1828 = vld [vmem:[#allocation8 + $0x50] sm:$0xff]
      %v1829 = vld [vmem:[#allocation8 + $0x58] sm:$0xff]
      %v1830 = vld [vmem:[#allocation8 + $0x60] sm:$0xff]
      %v1831 = vld [vmem:[#allocation8 + $0x68] sm:$0xff]
      %v1832 = vld [vmem:[#allocation8 + $0x70] sm:$0xff]
      %v1833 = vld [vmem:[#allocation8 + $0x78] sm:$0xff]
      %v1834 = vld [vmem:[%s5] sm:$0x1]
      %v1836 = vlaneseq
      %v1837 = vshrl.u32 %v1836, 7
      %v1838 = vsub.s32 0, %v1837
      %v1839 = vrot.slane %v1834, %v1838
      %1841 = vmatprep.subr.mxu0 0.0
      %1842 = vmatpush1.msra.mxu0 %v1833
      %1843 = vmatprep.subr.mxu0 0.0
      %1844 = vmatpush1.msra.mxu0 %v1832
      %1845 = vmatprep.subr.mxu0 0.0
      %1846 = vmatpush1.msra.mxu0 %v1831
      %1847 = vmatprep.subr.mxu0 0.0
      %1848 = vmatpush1.msra.mxu0 %v1830
      %1849 = vmatprep.subr.mxu0 0.0
      %1850 = vmatpush1.msra.mxu0 %v1829
      %1851 = vmatprep.subr.mxu0 0.0
      %1852 = vmatpush1.msra.mxu0 %v1828
      %1853 = vmatprep.subr.mxu0 0.0
      %1854 = vmatpush1.msra.mxu0 %v1827
      %1855 = vmatprep.subr.mxu0 0.0
      %1856 = vmatpush1.msra.mxu0 %v1826
      %1857 = vmatprep.subr.mxu0 0.0
      %1858 = vmatpush1.msra.mxu0 %v1825
      %1859 = vmatprep.subr.mxu0 0.0
      %1860 = vmatpush1.msra.mxu0 %v1824
      %1861 = vmatprep.subr.mxu0 0.0
      %1862 = vmatpush1.msra.mxu0 %v1823
      %1863 = vmatprep.subr.mxu0 0.0
      %1864 = vmatpush1.msra.mxu0 %v1822
      %1865 = vmatprep.subr.mxu0 0.0
      %1866 = vmatpush1.msra.mxu0 %v1821
      %1867 = vmatprep.subr.mxu0 0.0
      %1868 = vmatpush1.msra.mxu0 %v1820
      %1869 = vmatprep.subr.mxu0 0.0
      %1870 = vmatpush1.msra.mxu0 %v1819
      %1871 = vmatprep.subr.mxu0 0.0
      %1872 = vmatpush1.msra.mxu0 %v1818
      %1873 = vmatprep.subr.mxu0 0.0
      %1874 = vmatpush2.msra.mxu0 0.0
      %1875 = vmatprep.subr.mxu0 0.0
      %1876 = vmatpush2.msra.mxu0 0.0
      %1877 = vmatprep.subr.mxu0 0.0
      %1878 = vmatpush2.msra.mxu0 0.0
      %1879 = vmatprep.subr.mxu0 0.0
      %1880 = vmatpush2.msra.mxu0 0.0
      %1881 = vmatprep.subr.mxu0 0.0
      %1882 = vmatpush2.msra.mxu0 0.0
      %1883 = vmatprep.subr.mxu0 0.0
      %1884 = vmatpush2.msra.mxu0 0.0
      %1885 = vmatprep.subr.mxu0 0.0
      %1886 = vmatpush2.msra.mxu0 0.0
      %1887 = vmatprep.subr.mxu0 0.0
      %1888 = vmatpush2.msra.mxu0 0.0
      %1889 = vmatprep.subr.mxu0 0.0
      %1890 = vmatpush2.msra.mxu0 0.0
      %1891 = vmatprep.subr.mxu0 0.0
      %1892 = vmatpush2.msra.mxu0 0.0
      %1893 = vmatprep.subr.mxu0 0.0
      %1894 = vmatpush2.msra.mxu0 0.0
      %1895 = vmatprep.subr.mxu0 0.0
      %1896 = vmatpush2.msra.mxu0 0.0
      %1897 = vmatprep.subr.mxu0 0.0
      %1898 = vmatpush2.msra.mxu0 0.0
      %1899 = vmatprep.subr.mxu0 0.0
      %1900 = vmatpush2.msra.mxu0 0.0
      %1901 = vmatprep.subr.mxu0 0.0
      %1902 = vmatpush2.msra.mxu0 0.0
      %1903 = vmatprep.subr.mxu0 0.0
      %1904 = vmatpush2.msra.mxu0 0.0
      %1905 = vmatprep.mubr.f32.mxu0 0.0
      %1906 = vmatmul.mubr.f32.gmra.mxu0 %v1812
      %v1907 = vpop.f32.mrf.mxu0
      %v1908 = vadd.f32 %v1839, %v1907
      %v1909 = vpop.f32.mrf.mxu0
      %1910 = vdwg.mxu0
      %1911 = vst [vmem:[#allocation10] sm:$0xff] %v1908
    $region41: #{tpu_custom_call.1} parent=1 // pred_fallthru
      _
    // Predicated region
    $region42: #{tpu_custom_call.1} parent=1 // pred_check
      _
    $region43: #{tpu_custom_call.1} parent=1 // pred_check_branch
      %1913 = sbr.rel (0) target = $region45
    $region44: #{tpu_custom_call.1} parent=1 // pred_region
      %s1915 = ssub.s32 128, 128
      %1916 = vsyncadd [#allocation7], %s1915
      %s1918 = sshll.u32 [#allocation10], 4
      %s1919 = int_to_ptr.vmem [resolvable:$true] %s1918
      %1921 = dma.vmem_to_hbm [thread:$0]  %s1919, 128, %s6, [#allocation7]
    $region45: #{tpu_custom_call.1} parent=1 // pred_fallthru
      _
    // Predicated region
    $region46: #{tpu_custom_call.1} parent=1 // pred_check
      _
    $region47: #{tpu_custom_call.1} parent=1 // pred_check_branch
      %1923 = sbr.rel (0) target = $region49
    $region48: #{tpu_custom_call.1} parent=1 // pred_region
      %1924 = dma.done [#allocation7], 128
    $region49: #{tpu_custom_call.1} parent=1 // pred_fallthru
      _
    %1925 = vsyncpa [#allocation6], 1
    %1926 = vsyncpa [#allocation9], 1
    %1927 = vsyncpa [#allocation7], 1

</llo_original>
